<compile_context>
chip_gen: v6e
topology: v6e:2x2x1
jax: 0.10.0
libtpu: 0.0.40
codegen_flags: <defaults>
</compile_context>

<pallas_src>
import math

import jax
import jax.numpy as jnp
from jax.experimental import pallas as pl
from jax.experimental.pallas import tpu as pltpu


def _conv3x3_relu_kernel(x_ref, w_ref, b_ref, o_ref, xpad_ref):
    # x_ref:    (1, C_in, H, W)   VMEM  (one image)
    # w_ref:    (C_out*C_in*9,)   SMEM  (flattened OIHW weights)
    # b_ref:    (C_out,)          SMEM
    # o_ref:    (1, C_out, H, W)  VMEM
    # xpad_ref: (C_in, H+2, W+2)  VMEM scratch (zero halo for pad=1)
    _, C_in, H, W = x_ref.shape
    C_out = o_ref.shape[1]

    # Build the zero-padded input in VMEM.  Re-zero every grid step so the
    # halo is valid on every TensorCore under megacore partitioning.
    xpad_ref[...] = jnp.zeros_like(xpad_ref)
    xpad_ref[:, 1:H + 1, 1:W + 1] = x_ref[0].astype(jnp.float32)

    # f32 accumulators, one (H, W) plane per output channel.
    accs = [jnp.zeros((H, W), jnp.float32) for _ in range(C_out)]

    # 3x3 conv as 9 shifted VPU multiply-adds; weights are SMEM scalars that
    # broadcast for free on the VPU.  Each shifted (H, W) slice is loaded once
    # and reused for every output channel.
    for kh in range(3):
        for kw in range(3):
            for ci in range(C_in):
                xs = xpad_ref[ci, kh:kh + H, kw:kw + W]
                for co in range(C_out):
                    w = w_ref[((co * C_in + ci) * 3 + kh) * 3 + kw]
                    accs[co] = accs[co] + w * xs

    # Bias + ReLU, store one lane-dense (H, W) plane per output channel.
    for co in range(C_out):
        o_ref[0, co] = jnp.maximum(accs[co] + b_ref[co], 0.0).astype(o_ref.dtype)


def basic_block_pallas(x, weight, bias, *, vmem_limit_bytes=32 * 1024 * 1024):
    """BasicBlock forward: ReLU(Conv2d(x; weight, bias, k=3, s=1, p=1)).

    x:      (N, C_in, H, W) float32, NCHW
    weight: (C_out, C_in, 3, 3)      (PyTorch OIHW layout)
    bias:   (C_out,)
    """
    N, C_in, H, W = x.shape
    C_out = weight.shape[0]
    assert weight.shape == (C_out, C_in, 3, 3)
    assert bias.shape == (C_out,)

    w_flat = weight.reshape(-1).astype(jnp.float32)   # -> SMEM scalars
    b = bias.astype(jnp.float32)                      # -> SMEM scalars

    return pl.pallas_call(
        _conv3x3_relu_kernel,
        out_shape=jax.ShapeDtypeStruct((N, C_out, H, W), x.dtype),
        grid_spec=pltpu.PrefetchScalarGridSpec(
            num_scalar_prefetch=0,
            grid=(N,),
            in_specs=[
                pl.BlockSpec((1, C_in, H, W), lambda n: (n, 0, 0, 0)),
                pl.BlockSpec(memory_space=pltpu.MemorySpace.SMEM),
                pl.BlockSpec(memory_space=pltpu.MemorySpace.SMEM),
            ],
            out_specs=pl.BlockSpec((1, C_out, H, W), lambda n: (n, 0, 0, 0)),
            scratch_shapes=[pltpu.VMEM((C_in, H + 2, W + 2), jnp.float32)],
        ),
        compiler_params=pltpu.CompilerParams(
            dimension_semantics=("parallel",),
            vmem_limit_bytes=vmem_limit_bytes,
        ),
    )(x, w_flat, b)


if __name__ == "__main__":
    key = jax.random.PRNGKey(0)
    k1, k2, k3 = jax.random.split(key, 3)

    # Small deterministic shapes consistent with the module.
    N, C_in, C_out, H, W = 2, 4, 8, 16, 16
    x = jax.random.normal(k1, (N, C_in, H, W), jnp.float32)

    # PyTorch Conv2d default init: U(-sqrt(k), sqrt(k)), k = 1/(C_in*3*3).
    bound = 1.0 / math.sqrt(C_in * 3 * 3)
    weight = jax.random.uniform(k2, (C_out, C_in, 3, 3), jnp.float32, -bound, bound)
    bias = jax.random.uniform(k3, (C_out,), jnp.float32, -bound, bound)

    out = basic_block_pallas(x, weight, bias)
    out = jax.block_until_ready(out)

    # Reference: 3x3 conv (pad=1, stride=1) + bias + ReLU.
    ref = jax.lax.conv_general_dilated(
        x, weight, window_strides=(1, 1), padding=((1, 1), (1, 1)),
        dimension_numbers=("NCHW", "OIHW", "NCHW"))
    ref = jnp.maximum(ref + bias.reshape(1, C_out, 1, 1), 0.0)

    assert out.shape == ref.shape and out.dtype == x.dtype
    max_err = float(jnp.max(jnp.abs(out - ref)))
    assert jnp.allclose(out, ref, atol=1e-4, rtol=1e-4), max_err

    print("KERNEL_OK")
</pallas_src>

<mosaic_0001>
module attributes {stable_mosaic.version = 11 : i64} {
  func.func @_conv3x3_relu_kernel(%arg0: i32, %arg1: memref<1x4x16x16xf32, #tpu.memory_space<vmem>>, %arg2: memref<288xf32, #tpu.memory_space<smem>>, %arg3: memref<8xf32, #tpu.memory_space<smem>>, %arg4: memref<1x8x16x16xf32, #tpu.memory_space<vmem>>, %arg5: memref<4x18x18xf32, #tpu.memory_space<vmem>>) attributes {dimension_semantics = [#tpu.dimension_semantics<parallel>], iteration_bounds = array<i64: 2>, scalar_prefetch = 0 : i64, scratch_operands = 1 : i64, tpu.core_type = #tpu.core_type<tc>, window_params = [{transform_indices = @transform_0, window_bounds = array<i64: 1, 4, 16, 16>}, {transform_indices = @transform_1, window_bounds = array<i64: 288>}, {transform_indices = @transform_2, window_bounds = array<i64: 8>}, {transform_indices = @transform_3, window_bounds = array<i64: 1, 8, 16, 16>}]} {
    %cst = arith.constant 0.000000e+00 : f32
    %0 = vector.broadcast %cst : f32 to vector<4x18x18xf32>
    %c0 = arith.constant 0 : index
    %c0_0 = arith.constant 0 : index
    %c0_1 = arith.constant 0 : index
    %1 = vector.load %arg5[%c0, %c0_0, %c0_1] : memref<4x18x18xf32, #tpu.memory_space<vmem>>, vector<4x18x18xf32>
    tpu.vector_store %arg5[%c0, %c0_0, %c0_1], %0 {strides = array<i32>} : memref<4x18x18xf32, #tpu.memory_space<vmem>>, vector<4x18x18xf32>,
    %c0_2 = arith.constant 0 : index
    %c0_3 = arith.constant 0 : index
    %c0_4 = arith.constant 0 : index
    %c0_5 = arith.constant 0 : index
    %2 = vector.load %arg1[%c0_2, %c0_3, %c0_4, %c0_5] : memref<1x4x16x16xf32, #tpu.memory_space<vmem>>, vector<1x4x16x16xf32>
    %3 = vector.shape_cast %2 : vector<1x4x16x16xf32> to vector<4x16x16xf32>
    %c0_6 = arith.constant 0 : index
    %c1 = arith.constant 1 : index
    %c1_7 = arith.constant 1 : index
    %4 = vector.load %arg5[%c0_6, %c1, %c1_7] : memref<4x18x18xf32, #tpu.memory_space<vmem>>, vector<4x16x16xf32>
    tpu.vector_store %arg5[%c0_6, %c1, %c1_7], %3 {strides = array<i32>} : memref<4x18x18xf32, #tpu.memory_space<vmem>>, vector<4x16x16xf32>,
    %cst_8 = arith.constant 0.000000e+00 : f32
    %5 = vector.broadcast %cst_8 : f32 to vector<16x16xf32>
    %cst_9 = arith.constant 0.000000e+00 : f32
    %6 = vector.broadcast %cst_9 : f32 to vector<16x16xf32>
    %cst_10 = arith.constant 0.000000e+00 : f32
    %7 = vector.broadcast %cst_10 : f32 to vector<16x16xf32>
    %cst_11 = arith.constant 0.000000e+00 : f32
    %8 = vector.broadcast %cst_11 : f32 to vector<16x16xf32>
    %cst_12 = arith.constant 0.000000e+00 : f32
    %9 = vector.broadcast %cst_12 : f32 to vector<16x16xf32>
    %cst_13 = arith.constant 0.000000e+00 : f32
    %10 = vector.broadcast %cst_13 : f32 to vector<16x16xf32>
    %cst_14 = arith.constant 0.000000e+00 : f32
    %11 = vector.broadcast %cst_14 : f32 to vector<16x16xf32>
    %cst_15 = arith.constant 0.000000e+00 : f32
    %12 = vector.broadcast %cst_15 : f32 to vector<16x16xf32>
    %c0_16 = arith.constant 0 : index
    %c0_17 = arith.constant 0 : index
    %c0_18 = arith.constant 0 : index
    %13 = vector.load %arg5[%c0_16, %c0_17, %c0_18] : memref<4x18x18xf32, #tpu.memory_space<vmem>>, vector<1x16x16xf32>
    %14 = vector.shape_cast %13 : vector<1x16x16xf32> to vector<16x16xf32>
    %c0_19 = arith.constant 0 : index
    %15 = memref.load %arg2[%c0_19] : memref<288xf32, #tpu.memory_space<smem>>
    %16 = vector.broadcast %15 : f32 to vector<16x16xf32>
    %17 = arith.mulf %16, %14 : vector<16x16xf32>
    %18 = arith.addf %5, %17 : vector<16x16xf32>
    %c36 = arith.constant 36 : index
    %19 = memref.load %arg2[%c36] : memref<288xf32, #tpu.memory_space<smem>>
    %20 = vector.broadcast %19 : f32 to vector<16x16xf32>
    %21 = arith.mulf %20, %14 : vector<16x16xf32>
    %22 = arith.addf %6, %21 : vector<16x16xf32>
    %c72 = arith.constant 72 : index
    %23 = memref.load %arg2[%c72] : memref<288xf32, #tpu.memory_space<smem>>
    %24 = vector.broadcast %23 : f32 to vector<16x16xf32>
    %25 = arith.mulf %24, %14 : vector<16x16xf32>
    %26 = arith.addf %7, %25 : vector<16x16xf32>
    %c108 = arith.constant 108 : index
    %27 = memref.load %arg2[%c108] : memref<288xf32, #tpu.memory_space<smem>>
    %28 = vector.broadcast %27 : f32 to vector<16x16xf32>
    %29 = arith.mulf %28, %14 : vector<16x16xf32>
    %30 = arith.addf %8, %29 : vector<16x16xf32>
    %c144 = arith.constant 144 : index
    %31 = memref.load %arg2[%c144] : memref<288xf32, #tpu.memory_space<smem>>
    %32 = vector.broadcast %31 : f32 to vector<16x16xf32>
    %33 = arith.mulf %32, %14 : vector<16x16xf32>
    %34 = arith.addf %9, %33 : vector<16x16xf32>
    %c180 = arith.constant 180 : index
    %35 = memref.load %arg2[%c180] : memref<288xf32, #tpu.memory_space<smem>>
    %36 = vector.broadcast %35 : f32 to vector<16x16xf32>
    %37 = arith.mulf %36, %14 : vector<16x16xf32>
    %38 = arith.addf %10, %37 : vector<16x16xf32>
    %c216 = arith.constant 216 : index
    %39 = memref.load %arg2[%c216] : memref<288xf32, #tpu.memory_space<smem>>
    %40 = vector.broadcast %39 : f32 to vector<16x16xf32>
    %41 = arith.mulf %40, %14 : vector<16x16xf32>
    %42 = arith.addf %11, %41 : vector<16x16xf32>
    %c252 = arith.constant 252 : index
    %43 = memref.load %arg2[%c252] : memref<288xf32, #tpu.memory_space<smem>>
    %44 = vector.broadcast %43 : f32 to vector<16x16xf32>
    %45 = arith.mulf %44, %14 : vector<16x16xf32>
    %46 = arith.addf %12, %45 : vector<16x16xf32>
    %c1_20 = arith.constant 1 : index
    %c0_21 = arith.constant 0 : index
    %c0_22 = arith.constant 0 : index
    %47 = vector.load %arg5[%c1_20, %c0_21, %c0_22] : memref<4x18x18xf32, #tpu.memory_space<vmem>>, vector<1x16x16xf32>
    %48 = vector.shape_cast %47 : vector<1x16x16xf32> to vector<16x16xf32>
    %c9 = arith.constant 9 : index
    %49 = memref.load %arg2[%c9] : memref<288xf32, #tpu.memory_space<smem>>
    %50 = vector.broadcast %49 : f32 to vector<16x16xf32>
    %51 = arith.mulf %50, %48 : vector<16x16xf32>
    %52 = arith.addf %18, %51 : vector<16x16xf32>
    %c45 = arith.constant 45 : index
    %53 = memref.load %arg2[%c45] : memref<288xf32, #tpu.memory_space<smem>>
    %54 = vector.broadcast %53 : f32 to vector<16x16xf32>
    %55 = arith.mulf %54, %48 : vector<16x16xf32>
    %56 = arith.addf %22, %55 : vector<16x16xf32>
    %c81 = arith.constant 81 : index
    %57 = memref.load %arg2[%c81] : memref<288xf32, #tpu.memory_space<smem>>
    %58 = vector.broadcast %57 : f32 to vector<16x16xf32>
    %59 = arith.mulf %58, %48 : vector<16x16xf32>
    %60 = arith.addf %26, %59 : vector<16x16xf32>
    %c117 = arith.constant 117 : index
    %61 = memref.load %arg2[%c117] : memref<288xf32, #tpu.memory_space<smem>>
    %62 = vector.broadcast %61 : f32 to vector<16x16xf32>
    %63 = arith.mulf %62, %48 : vector<16x16xf32>
    %64 = arith.addf %30, %63 : vector<16x16xf32>
    %c153 = arith.constant 153 : index
    %65 = memref.load %arg2[%c153] : memref<288xf32, #tpu.memory_space<smem>>
    %66 = vector.broadcast %65 : f32 to vector<16x16xf32>
    %67 = arith.mulf %66, %48 : vector<16x16xf32>
    %68 = arith.addf %34, %67 : vector<16x16xf32>
    %c189 = arith.constant 189 : index
    %69 = memref.load %arg2[%c189] : memref<288xf32, #tpu.memory_space<smem>>
    %70 = vector.broadcast %69 : f32 to vector<16x16xf32>
    %71 = arith.mulf %70, %48 : vector<16x16xf32>
    %72 = arith.addf %38, %71 : vector<16x16xf32>
    %c225 = arith.constant 225 : index
    %73 = memref.load %arg2[%c225] : memref<288xf32, #tpu.memory_space<smem>>
    %74 = vector.broadcast %73 : f32 to vector<16x16xf32>
    %75 = arith.mulf %74, %48 : vector<16x16xf32>
    %76 = arith.addf %42, %75 : vector<16x16xf32>
    %c261 = arith.constant 261 : index
    %77 = memref.load %arg2[%c261] : memref<288xf32, #tpu.memory_space<smem>>
    %78 = vector.broadcast %77 : f32 to vector<16x16xf32>
    %79 = arith.mulf %78, %48 : vector<16x16xf32>
    %80 = arith.addf %46, %79 : vector<16x16xf32>
    %c2 = arith.constant 2 : index
    %c0_23 = arith.constant 0 : index
    %c0_24 = arith.constant 0 : index
    %81 = vector.load %arg5[%c2, %c0_23, %c0_24] : memref<4x18x18xf32, #tpu.memory_space<vmem>>, vector<1x16x16xf32>
    %82 = vector.shape_cast %81 : vector<1x16x16xf32> to vector<16x16xf32>
    %c18 = arith.constant 18 : index
    %83 = memref.load %arg2[%c18] : memref<288xf32, #tpu.memory_space<smem>>
    %84 = vector.broadcast %83 : f32 to vector<16x16xf32>
    %85 = arith.mulf %84, %82 : vector<16x16xf32>
    %86 = arith.addf %52, %85 : vector<16x16xf32>
    %c54 = arith.constant 54 : index
    %87 = memref.load %arg2[%c54] : memref<288xf32, #tpu.memory_space<smem>>
    %88 = vector.broadcast %87 : f32 to vector<16x16xf32>
    %89 = arith.mulf %88, %82 : vector<16x16xf32>
    %90 = arith.addf %56, %89 : vector<16x16xf32>
    %c90 = arith.constant 90 : index
    %91 = memref.load %arg2[%c90] : memref<288xf32, #tpu.memory_space<smem>>
    %92 = vector.broadcast %91 : f32 to vector<16x16xf32>
    %93 = arith.mulf %92, %82 : vector<16x16xf32>
    %94 = arith.addf %60, %93 : vector<16x16xf32>
    %c126 = arith.constant 126 : index
    %95 = memref.load %arg2[%c126] : memref<288xf32, #tpu.memory_space<smem>>
    %96 = vector.broadcast %95 : f32 to vector<16x16xf32>
    %97 = arith.mulf %96, %82 : vector<16x16xf32>
    %98 = arith.addf %64, %97 : vector<16x16xf32>
    %c162 = arith.constant 162 : index
    %99 = memref.load %arg2[%c162] : memref<288xf32, #tpu.memory_space<smem>>
    %100 = vector.broadcast %99 : f32 to vector<16x16xf32>
    %101 = arith.mulf %100, %82 : vector<16x16xf32>
    %102 = arith.addf %68, %101 : vector<16x16xf32>
    %c198 = arith.constant 198 : index
    %103 = memref.load %arg2[%c198] : memref<288xf32, #tpu.memory_space<smem>>
    %104 = vector.broadcast %103 : f32 to vector<16x16xf32>
    %105 = arith.mulf %104, %82 : vector<16x16xf32>
    %106 = arith.addf %72, %105 : vector<16x16xf32>
    %c234 = arith.constant 234 : index
    %107 = memref.load %arg2[%c234] : memref<288xf32, #tpu.memory_space<smem>>
    %108 = vector.broadcast %107 : f32 to vector<16x16xf32>
    %109 = arith.mulf %108, %82 : vector<16x16xf32>
    %110 = arith.addf %76, %109 : vector<16x16xf32>
    %c270 = arith.constant 270 : index
    %111 = memref.load %arg2[%c270] : memref<288xf32, #tpu.memory_space<smem>>
    %112 = vector.broadcast %111 : f32 to vector<16x16xf32>
    %113 = arith.mulf %112, %82 : vector<16x16xf32>
    %114 = arith.addf %80, %113 : vector<16x16xf32>
    %c3 = arith.constant 3 : index
    %c0_25 = arith.constant 0 : index
    %c0_26 = arith.constant 0 : index
    %115 = vector.load %arg5[%c3, %c0_25, %c0_26] : memref<4x18x18xf32, #tpu.memory_space<vmem>>, vector<1x16x16xf32>
    %116 = vector.shape_cast %115 : vector<1x16x16xf32> to vector<16x16xf32>
    %c27 = arith.constant 27 : index
    %117 = memref.load %arg2[%c27] : memref<288xf32, #tpu.memory_space<smem>>
    %118 = vector.broadcast %117 : f32 to vector<16x16xf32>
    %119 = arith.mulf %118, %116 : vector<16x16xf32>
    %120 = arith.addf %86, %119 : vector<16x16xf32>
    %c63 = arith.constant 63 : index
    %121 = memref.load %arg2[%c63] : memref<288xf32, #tpu.memory_space<smem>>
    %122 = vector.broadcast %121 : f32 to vector<16x16xf32>
    %123 = arith.mulf %122, %116 : vector<16x16xf32>
    %124 = arith.addf %90, %123 : vector<16x16xf32>
    %c99 = arith.constant 99 : index
    %125 = memref.load %arg2[%c99] : memref<288xf32, #tpu.memory_space<smem>>
    %126 = vector.broadcast %125 : f32 to vector<16x16xf32>
    %127 = arith.mulf %126, %116 : vector<16x16xf32>
    %128 = arith.addf %94, %127 : vector<16x16xf32>
    %c135 = arith.constant 135 : index
    %129 = memref.load %arg2[%c135] : memref<288xf32, #tpu.memory_space<smem>>
    %130 = vector.broadcast %129 : f32 to vector<16x16xf32>
    %131 = arith.mulf %130, %116 : vector<16x16xf32>
    %132 = arith.addf %98, %131 : vector<16x16xf32>
    %c171 = arith.constant 171 : index
    %133 = memref.load %arg2[%c171] : memref<288xf32, #tpu.memory_space<smem>>
    %134 = vector.broadcast %133 : f32 to vector<16x16xf32>
    %135 = arith.mulf %134, %116 : vector<16x16xf32>
    %136 = arith.addf %102, %135 : vector<16x16xf32>
    %c207 = arith.constant 207 : index
    %137 = memref.load %arg2[%c207] : memref<288xf32, #tpu.memory_space<smem>>
    %138 = vector.broadcast %137 : f32 to vector<16x16xf32>
    %139 = arith.mulf %138, %116 : vector<16x16xf32>
    %140 = arith.addf %106, %139 : vector<16x16xf32>
    %c243 = arith.constant 243 : index
    %141 = memref.load %arg2[%c243] : memref<288xf32, #tpu.memory_space<smem>>
    %142 = vector.broadcast %141 : f32 to vector<16x16xf32>
    %143 = arith.mulf %142, %116 : vector<16x16xf32>
    %144 = arith.addf %110, %143 : vector<16x16xf32>
    %c279 = arith.constant 279 : index
    %145 = memref.load %arg2[%c279] : memref<288xf32, #tpu.memory_space<smem>>
    %146 = vector.broadcast %145 : f32 to vector<16x16xf32>
    %147 = arith.mulf %146, %116 : vector<16x16xf32>
    %148 = arith.addf %114, %147 : vector<16x16xf32>
    %c0_27 = arith.constant 0 : index
    %c0_28 = arith.constant 0 : index
    %c1_29 = arith.constant 1 : index
    %149 = vector.load %arg5[%c0_27, %c0_28, %c1_29] : memref<4x18x18xf32, #tpu.memory_space<vmem>>, vector<1x16x16xf32>
    %150 = vector.shape_cast %149 : vector<1x16x16xf32> to vector<16x16xf32>
    %c1_30 = arith.constant 1 : index
    %151 = memref.load %arg2[%c1_30] : memref<288xf32, #tpu.memory_space<smem>>
    %152 = vector.broadcast %151 : f32 to vector<16x16xf32>
    %153 = arith.mulf %152, %150 : vector<16x16xf32>
    %154 = arith.addf %120, %153 : vector<16x16xf32>
    %c37 = arith.constant 37 : index
    %155 = memref.load %arg2[%c37] : memref<288xf32, #tpu.memory_space<smem>>
    %156 = vector.broadcast %155 : f32 to vector<16x16xf32>
    %157 = arith.mulf %156, %150 : vector<16x16xf32>
    %158 = arith.addf %124, %157 : vector<16x16xf32>
    %c73 = arith.constant 73 : index
    %159 = memref.load %arg2[%c73] : memref<288xf32, #tpu.memory_space<smem>>
    %160 = vector.broadcast %159 : f32 to vector<16x16xf32>
    %161 = arith.mulf %160, %150 : vector<16x16xf32>
    %162 = arith.addf %128, %161 : vector<16x16xf32>
    %c109 = arith.constant 109 : index
    %163 = memref.load %arg2[%c109] : memref<288xf32, #tpu.memory_space<smem>>
    %164 = vector.broadcast %163 : f32 to vector<16x16xf32>
    %165 = arith.mulf %164, %150 : vector<16x16xf32>
    %166 = arith.addf %132, %165 : vector<16x16xf32>
    %c145 = arith.constant 145 : index
    %167 = memref.load %arg2[%c145] : memref<288xf32, #tpu.memory_space<smem>>
    %168 = vector.broadcast %167 : f32 to vector<16x16xf32>
    %169 = arith.mulf %168, %150 : vector<16x16xf32>
    %170 = arith.addf %136, %169 : vector<16x16xf32>
    %c181 = arith.constant 181 : index
    %171 = memref.load %arg2[%c181] : memref<288xf32, #tpu.memory_space<smem>>
    %172 = vector.broadcast %171 : f32 to vector<16x16xf32>
    %173 = arith.mulf %172, %150 : vector<16x16xf32>
    %174 = arith.addf %140, %173 : vector<16x16xf32>
    %c217 = arith.constant 217 : index
    %175 = memref.load %arg2[%c217] : memref<288xf32, #tpu.memory_space<smem>>
    %176 = vector.broadcast %175 : f32 to vector<16x16xf32>
    %177 = arith.mulf %176, %150 : vector<16x16xf32>
    %178 = arith.addf %144, %177 : vector<16x16xf32>
    %c253 = arith.constant 253 : index
    %179 = memref.load %arg2[%c253] : memref<288xf32, #tpu.memory_space<smem>>
    %180 = vector.broadcast %179 : f32 to vector<16x16xf32>
    %181 = arith.mulf %180, %150 : vector<16x16xf32>
    %182 = arith.addf %148, %181 : vector<16x16xf32>
    %c1_31 = arith.constant 1 : index
    %c0_32 = arith.constant 0 : index
    %c1_33 = arith.constant 1 : index
    %183 = vector.load %arg5[%c1_31, %c0_32, %c1_33] : memref<4x18x18xf32, #tpu.memory_space<vmem>>, vector<1x16x16xf32>
    %184 = vector.shape_cast %183 : vector<1x16x16xf32> to vector<16x16xf32>
    %c10 = arith.constant 10 : index
    %185 = memref.load %arg2[%c10] : memref<288xf32, #tpu.memory_space<smem>>
    %186 = vector.broadcast %185 : f32 to vector<16x16xf32>
    %187 = arith.mulf %186, %184 : vector<16x16xf32>
    %188 = arith.addf %154, %187 : vector<16x16xf32>
    %c46 = arith.constant 46 : index
    %189 = memref.load %arg2[%c46] : memref<288xf32, #tpu.memory_space<smem>>
    %190 = vector.broadcast %189 : f32 to vector<16x16xf32>
    %191 = arith.mulf %190, %184 : vector<16x16xf32>
    %192 = arith.addf %158, %191 : vector<16x16xf32>
    %c82 = arith.constant 82 : index
    %193 = memref.load %arg2[%c82] : memref<288xf32, #tpu.memory_space<smem>>
    %194 = vector.broadcast %193 : f32 to vector<16x16xf32>
    %195 = arith.mulf %194, %184 : vector<16x16xf32>
    %196 = arith.addf %162, %195 : vector<16x16xf32>
    %c118 = arith.constant 118 : index
    %197 = memref.load %arg2[%c118] : memref<288xf32, #tpu.memory_space<smem>>
    %198 = vector.broadcast %197 : f32 to vector<16x16xf32>
    %199 = arith.mulf %198, %184 : vector<16x16xf32>
    %200 = arith.addf %166, %199 : vector<16x16xf32>
    %c154 = arith.constant 154 : index
    %201 = memref.load %arg2[%c154] : memref<288xf32, #tpu.memory_space<smem>>
    %202 = vector.broadcast %201 : f32 to vector<16x16xf32>
    %203 = arith.mulf %202, %184 : vector<16x16xf32>
    %204 = arith.addf %170, %203 : vector<16x16xf32>
    %c190 = arith.constant 190 : index
    %205 = memref.load %arg2[%c190] : memref<288xf32, #tpu.memory_space<smem>>
    %206 = vector.broadcast %205 : f32 to vector<16x16xf32>
    %207 = arith.mulf %206, %184 : vector<16x16xf32>
    %208 = arith.addf %174, %207 : vector<16x16xf32>
    %c226 = arith.constant 226 : index
    %209 = memref.load %arg2[%c226] : memref<288xf32, #tpu.memory_space<smem>>
    %210 = vector.broadcast %209 : f32 to vector<16x16xf32>
    %211 = arith.mulf %210, %184 : vector<16x16xf32>
    %212 = arith.addf %178, %211 : vector<16x16xf32>
    %c262 = arith.constant 262 : index
    %213 = memref.load %arg2[%c262] : memref<288xf32, #tpu.memory_space<smem>>
    %214 = vector.broadcast %213 : f32 to vector<16x16xf32>
    %215 = arith.mulf %214, %184 : vector<16x16xf32>
    %216 = arith.addf %182, %215 : vector<16x16xf32>
    %c2_34 = arith.constant 2 : index
    %c0_35 = arith.constant 0 : index
    %c1_36 = arith.constant 1 : index
    %217 = vector.load %arg5[%c2_34, %c0_35, %c1_36] : memref<4x18x18xf32, #tpu.memory_space<vmem>>, vector<1x16x16xf32>
    %218 = vector.shape_cast %217 : vector<1x16x16xf32> to vector<16x16xf32>
    %c19 = arith.constant 19 : index
    %219 = memref.load %arg2[%c19] : memref<288xf32, #tpu.memory_space<smem>>
    %220 = vector.broadcast %219 : f32 to vector<16x16xf32>
    %221 = arith.mulf %220, %218 : vector<16x16xf32>
    %222 = arith.addf %188, %221 : vector<16x16xf32>
    %c55 = arith.constant 55 : index
    %223 = memref.load %arg2[%c55] : memref<288xf32, #tpu.memory_space<smem>>
    %224 = vector.broadcast %223 : f32 to vector<16x16xf32>
    %225 = arith.mulf %224, %218 : vector<16x16xf32>
    %226 = arith.addf %192, %225 : vector<16x16xf32>
    %c91 = arith.constant 91 : index
    %227 = memref.load %arg2[%c91] : memref<288xf32, #tpu.memory_space<smem>>
    %228 = vector.broadcast %227 : f32 to vector<16x16xf32>
    %229 = arith.mulf %228, %218 : vector<16x16xf32>
    %230 = arith.addf %196, %229 : vector<16x16xf32>
    %c127 = arith.constant 127 : index
    %231 = memref.load %arg2[%c127] : memref<288xf32, #tpu.memory_space<smem>>
    %232 = vector.broadcast %231 : f32 to vector<16x16xf32>
    %233 = arith.mulf %232, %218 : vector<16x16xf32>
    %234 = arith.addf %200, %233 : vector<16x16xf32>
    %c163 = arith.constant 163 : index
    %235 = memref.load %arg2[%c163] : memref<288xf32, #tpu.memory_space<smem>>
    %236 = vector.broadcast %235 : f32 to vector<16x16xf32>
    %237 = arith.mulf %236, %218 : vector<16x16xf32>
    %238 = arith.addf %204, %237 : vector<16x16xf32>
    %c199 = arith.constant 199 : index
    %239 = memref.load %arg2[%c199] : memref<288xf32, #tpu.memory_space<smem>>
    %240 = vector.broadcast %239 : f32 to vector<16x16xf32>
    %241 = arith.mulf %240, %218 : vector<16x16xf32>
    %242 = arith.addf %208, %241 : vector<16x16xf32>
    %c235 = arith.constant 235 : index
    %243 = memref.load %arg2[%c235] : memref<288xf32, #tpu.memory_space<smem>>
    %244 = vector.broadcast %243 : f32 to vector<16x16xf32>
    %245 = arith.mulf %244, %218 : vector<16x16xf32>
    %246 = arith.addf %212, %245 : vector<16x16xf32>
    %c271 = arith.constant 271 : index
    %247 = memref.load %arg2[%c271] : memref<288xf32, #tpu.memory_space<smem>>
    %248 = vector.broadcast %247 : f32 to vector<16x16xf32>
    %249 = arith.mulf %248, %218 : vector<16x16xf32>
    %250 = arith.addf %216, %249 : vector<16x16xf32>
    %c3_37 = arith.constant 3 : index
    %c0_38 = arith.constant 0 : index
    %c1_39 = arith.constant 1 : index
    %251 = vector.load %arg5[%c3_37, %c0_38, %c1_39] : memref<4x18x18xf32, #tpu.memory_space<vmem>>, vector<1x16x16xf32>
    %252 = vector.shape_cast %251 : vector<1x16x16xf32> to vector<16x16xf32>
    %c28 = arith.constant 28 : index
    %253 = memref.load %arg2[%c28] : memref<288xf32, #tpu.memory_space<smem>>
    %254 = vector.broadcast %253 : f32 to vector<16x16xf32>
    %255 = arith.mulf %254, %252 : vector<16x16xf32>
    %256 = arith.addf %222, %255 : vector<16x16xf32>
    %c64 = arith.constant 64 : index
    %257 = memref.load %arg2[%c64] : memref<288xf32, #tpu.memory_space<smem>>
    %258 = vector.broadcast %257 : f32 to vector<16x16xf32>
    %259 = arith.mulf %258, %252 : vector<16x16xf32>
    %260 = arith.addf %226, %259 : vector<16x16xf32>
    %c100 = arith.constant 100 : index
    %261 = memref.load %arg2[%c100] : memref<288xf32, #tpu.memory_space<smem>>
    %262 = vector.broadcast %261 : f32 to vector<16x16xf32>
    %263 = arith.mulf %262, %252 : vector<16x16xf32>
    %264 = arith.addf %230, %263 : vector<16x16xf32>
    %c136 = arith.constant 136 : index
    %265 = memref.load %arg2[%c136] : memref<288xf32, #tpu.memory_space<smem>>
    %266 = vector.broadcast %265 : f32 to vector<16x16xf32>
    %267 = arith.mulf %266, %252 : vector<16x16xf32>
    %268 = arith.addf %234, %267 : vector<16x16xf32>
    %c172 = arith.constant 172 : index
    %269 = memref.load %arg2[%c172] : memref<288xf32, #tpu.memory_space<smem>>
    %270 = vector.broadcast %269 : f32 to vector<16x16xf32>
    %271 = arith.mulf %270, %252 : vector<16x16xf32>
    %272 = arith.addf %238, %271 : vector<16x16xf32>
    %c208 = arith.constant 208 : index
    %273 = memref.load %arg2[%c208] : memref<288xf32, #tpu.memory_space<smem>>
    %274 = vector.broadcast %273 : f32 to vector<16x16xf32>
    %275 = arith.mulf %274, %252 : vector<16x16xf32>
    %276 = arith.addf %242, %275 : vector<16x16xf32>
    %c244 = arith.constant 244 : index
    %277 = memref.load %arg2[%c244] : memref<288xf32, #tpu.memory_space<smem>>
    %278 = vector.broadcast %277 : f32 to vector<16x16xf32>
    %279 = arith.mulf %278, %252 : vector<16x16xf32>
    %280 = arith.addf %246, %279 : vector<16x16xf32>
    %c280 = arith.constant 280 : index
    %281 = memref.load %arg2[%c280] : memref<288xf32, #tpu.memory_space<smem>>
    %282 = vector.broadcast %281 : f32 to vector<16x16xf32>
    %283 = arith.mulf %282, %252 : vector<16x16xf32>
    %284 = arith.addf %250, %283 : vector<16x16xf32>
    %c0_40 = arith.constant 0 : index
    %c0_41 = arith.constant 0 : index
    %c2_42 = arith.constant 2 : index
    %285 = vector.load %arg5[%c0_40, %c0_41, %c2_42] : memref<4x18x18xf32, #tpu.memory_space<vmem>>, vector<1x16x16xf32>
    %286 = vector.shape_cast %285 : vector<1x16x16xf32> to vector<16x16xf32>
    %c2_43 = arith.constant 2 : index
    %287 = memref.load %arg2[%c2_43] : memref<288xf32, #tpu.memory_space<smem>>
    %288 = vector.broadcast %287 : f32 to vector<16x16xf32>
    %289 = arith.mulf %288, %286 : vector<16x16xf32>
    %290 = arith.addf %256, %289 : vector<16x16xf32>
    %c38 = arith.constant 38 : index
    %291 = memref.load %arg2[%c38] : memref<288xf32, #tpu.memory_space<smem>>
    %292 = vector.broadcast %291 : f32 to vector<16x16xf32>
    %293 = arith.mulf %292, %286 : vector<16x16xf32>
    %294 = arith.addf %260, %293 : vector<16x16xf32>
    %c74 = arith.constant 74 : index
    %295 = memref.load %arg2[%c74] : memref<288xf32, #tpu.memory_space<smem>>
    %296 = vector.broadcast %295 : f32 to vector<16x16xf32>
    %297 = arith.mulf %296, %286 : vector<16x16xf32>
    %298 = arith.addf %264, %297 : vector<16x16xf32>
    %c110 = arith.constant 110 : index
    %299 = memref.load %arg2[%c110] : memref<288xf32, #tpu.memory_space<smem>>
    %300 = vector.broadcast %299 : f32 to vector<16x16xf32>
    %301 = arith.mulf %300, %286 : vector<16x16xf32>
    %302 = arith.addf %268, %301 : vector<16x16xf32>
    %c146 = arith.constant 146 : index
    %303 = memref.load %arg2[%c146] : memref<288xf32, #tpu.memory_space<smem>>
    %304 = vector.broadcast %303 : f32 to vector<16x16xf32>
    %305 = arith.mulf %304, %286 : vector<16x16xf32>
    %306 = arith.addf %272, %305 : vector<16x16xf32>
    %c182 = arith.constant 182 : index
    %307 = memref.load %arg2[%c182] : memref<288xf32, #tpu.memory_space<smem>>
    %308 = vector.broadcast %307 : f32 to vector<16x16xf32>
    %309 = arith.mulf %308, %286 : vector<16x16xf32>
    %310 = arith.addf %276, %309 : vector<16x16xf32>
    %c218 = arith.constant 218 : index
    %311 = memref.load %arg2[%c218] : memref<288xf32, #tpu.memory_space<smem>>
    %312 = vector.broadcast %311 : f32 to vector<16x16xf32>
    %313 = arith.mulf %312, %286 : vector<16x16xf32>
    %314 = arith.addf %280, %313 : vector<16x16xf32>
    %c254 = arith.constant 254 : index
    %315 = memref.load %arg2[%c254] : memref<288xf32, #tpu.memory_space<smem>>
    %316 = vector.broadcast %315 : f32 to vector<16x16xf32>
    %317 = arith.mulf %316, %286 : vector<16x16xf32>
    %318 = arith.addf %284, %317 : vector<16x16xf32>
    %c1_44 = arith.constant 1 : index
    %c0_45 = arith.constant 0 : index
    %c2_46 = arith.constant 2 : index
    %319 = vector.load %arg5[%c1_44, %c0_45, %c2_46] : memref<4x18x18xf32, #tpu.memory_space<vmem>>, vector<1x16x16xf32>
    %320 = vector.shape_cast %319 : vector<1x16x16xf32> to vector<16x16xf32>
    %c11 = arith.constant 11 : index
    %321 = memref.load %arg2[%c11] : memref<288xf32, #tpu.memory_space<smem>>
    %322 = vector.broadcast %321 : f32 to vector<16x16xf32>
    %323 = arith.mulf %322, %320 : vector<16x16xf32>
    %324 = arith.addf %290, %323 : vector<16x16xf32>
    %c47 = arith.constant 47 : index
    %325 = memref.load %arg2[%c47] : memref<288xf32, #tpu.memory_space<smem>>
    %326 = vector.broadcast %325 : f32 to vector<16x16xf32>
    %327 = arith.mulf %326, %320 : vector<16x16xf32>
    %328 = arith.addf %294, %327 : vector<16x16xf32>
    %c83 = arith.constant 83 : index
    %329 = memref.load %arg2[%c83] : memref<288xf32, #tpu.memory_space<smem>>
    %330 = vector.broadcast %329 : f32 to vector<16x16xf32>
    %331 = arith.mulf %330, %320 : vector<16x16xf32>
    %332 = arith.addf %298, %331 : vector<16x16xf32>
    %c119 = arith.constant 119 : index
    %333 = memref.load %arg2[%c119] : memref<288xf32, #tpu.memory_space<smem>>
    %334 = vector.broadcast %333 : f32 to vector<16x16xf32>
    %335 = arith.mulf %334, %320 : vector<16x16xf32>
    %336 = arith.addf %302, %335 : vector<16x16xf32>
    %c155 = arith.constant 155 : index
    %337 = memref.load %arg2[%c155] : memref<288xf32, #tpu.memory_space<smem>>
    %338 = vector.broadcast %337 : f32 to vector<16x16xf32>
    %339 = arith.mulf %338, %320 : vector<16x16xf32>
    %340 = arith.addf %306, %339 : vector<16x16xf32>
    %c191 = arith.constant 191 : index
    %341 = memref.load %arg2[%c191] : memref<288xf32, #tpu.memory_space<smem>>
    %342 = vector.broadcast %341 : f32 to vector<16x16xf32>
    %343 = arith.mulf %342, %320 : vector<16x16xf32>
    %344 = arith.addf %310, %343 : vector<16x16xf32>
    %c227 = arith.constant 227 : index
    %345 = memref.load %arg2[%c227] : memref<288xf32, #tpu.memory_space<smem>>
    %346 = vector.broadcast %345 : f32 to vector<16x16xf32>
    %347 = arith.mulf %346, %320 : vector<16x16xf32>
    %348 = arith.addf %314, %347 : vector<16x16xf32>
    %c263 = arith.constant 263 : index
    %349 = memref.load %arg2[%c263] : memref<288xf32, #tpu.memory_space<smem>>
    %350 = vector.broadcast %349 : f32 to vector<16x16xf32>
    %351 = arith.mulf %350, %320 : vector<16x16xf32>
    %352 = arith.addf %318, %351 : vector<16x16xf32>
    %c2_47 = arith.constant 2 : index
    %c0_48 = arith.constant 0 : index
    %c2_49 = arith.constant 2 : index
    %353 = vector.load %arg5[%c2_47, %c0_48, %c2_49] : memref<4x18x18xf32, #tpu.memory_space<vmem>>, vector<1x16x16xf32>
    %354 = vector.shape_cast %353 : vector<1x16x16xf32> to vector<16x16xf32>
    %c20 = arith.constant 20 : index
    %355 = memref.load %arg2[%c20] : memref<288xf32, #tpu.memory_space<smem>>
    %356 = vector.broadcast %355 : f32 to vector<16x16xf32>
    %357 = arith.mulf %356, %354 : vector<16x16xf32>
    %358 = arith.addf %324, %357 : vector<16x16xf32>
    %c56 = arith.constant 56 : index
    %359 = memref.load %arg2[%c56] : memref<288xf32, #tpu.memory_space<smem>>
    %360 = vector.broadcast %359 : f32 to vector<16x16xf32>
    %361 = arith.mulf %360, %354 : vector<16x16xf32>
    %362 = arith.addf %328, %361 : vector<16x16xf32>
    %c92 = arith.constant 92 : index
    %363 = memref.load %arg2[%c92] : memref<288xf32, #tpu.memory_space<smem>>
    %364 = vector.broadcast %363 : f32 to vector<16x16xf32>
    %365 = arith.mulf %364, %354 : vector<16x16xf32>
    %366 = arith.addf %332, %365 : vector<16x16xf32>
    %c128 = arith.constant 128 : index
    %367 = memref.load %arg2[%c128] : memref<288xf32, #tpu.memory_space<smem>>
    %368 = vector.broadcast %367 : f32 to vector<16x16xf32>
    %369 = arith.mulf %368, %354 : vector<16x16xf32>
    %370 = arith.addf %336, %369 : vector<16x16xf32>
    %c164 = arith.constant 164 : index
    %371 = memref.load %arg2[%c164] : memref<288xf32, #tpu.memory_space<smem>>
    %372 = vector.broadcast %371 : f32 to vector<16x16xf32>
    %373 = arith.mulf %372, %354 : vector<16x16xf32>
    %374 = arith.addf %340, %373 : vector<16x16xf32>
    %c200 = arith.constant 200 : index
    %375 = memref.load %arg2[%c200] : memref<288xf32, #tpu.memory_space<smem>>
    %376 = vector.broadcast %375 : f32 to vector<16x16xf32>
    %377 = arith.mulf %376, %354 : vector<16x16xf32>
    %378 = arith.addf %344, %377 : vector<16x16xf32>
    %c236 = arith.constant 236 : index
    %379 = memref.load %arg2[%c236] : memref<288xf32, #tpu.memory_space<smem>>
    %380 = vector.broadcast %379 : f32 to vector<16x16xf32>
    %381 = arith.mulf %380, %354 : vector<16x16xf32>
    %382 = arith.addf %348, %381 : vector<16x16xf32>
    %c272 = arith.constant 272 : index
    %383 = memref.load %arg2[%c272] : memref<288xf32, #tpu.memory_space<smem>>
    %384 = vector.broadcast %383 : f32 to vector<16x16xf32>
    %385 = arith.mulf %384, %354 : vector<16x16xf32>
    %386 = arith.addf %352, %385 : vector<16x16xf32>
    %c3_50 = arith.constant 3 : index
    %c0_51 = arith.constant 0 : index
    %c2_52 = arith.constant 2 : index
    %387 = vector.load %arg5[%c3_50, %c0_51, %c2_52] : memref<4x18x18xf32, #tpu.memory_space<vmem>>, vector<1x16x16xf32>
    %388 = vector.shape_cast %387 : vector<1x16x16xf32> to vector<16x16xf32>
    %c29 = arith.constant 29 : index
    %389 = memref.load %arg2[%c29] : memref<288xf32, #tpu.memory_space<smem>>
    %390 = vector.broadcast %389 : f32 to vector<16x16xf32>
    %391 = arith.mulf %390, %388 : vector<16x16xf32>
    %392 = arith.addf %358, %391 : vector<16x16xf32>
    %c65 = arith.constant 65 : index
    %393 = memref.load %arg2[%c65] : memref<288xf32, #tpu.memory_space<smem>>
    %394 = vector.broadcast %393 : f32 to vector<16x16xf32>
    %395 = arith.mulf %394, %388 : vector<16x16xf32>
    %396 = arith.addf %362, %395 : vector<16x16xf32>
    %c101 = arith.constant 101 : index
    %397 = memref.load %arg2[%c101] : memref<288xf32, #tpu.memory_space<smem>>
    %398 = vector.broadcast %397 : f32 to vector<16x16xf32>
    %399 = arith.mulf %398, %388 : vector<16x16xf32>
    %400 = arith.addf %366, %399 : vector<16x16xf32>
    %c137 = arith.constant 137 : index
    %401 = memref.load %arg2[%c137] : memref<288xf32, #tpu.memory_space<smem>>
    %402 = vector.broadcast %401 : f32 to vector<16x16xf32>
    %403 = arith.mulf %402, %388 : vector<16x16xf32>
    %404 = arith.addf %370, %403 : vector<16x16xf32>
    %c173 = arith.constant 173 : index
    %405 = memref.load %arg2[%c173] : memref<288xf32, #tpu.memory_space<smem>>
    %406 = vector.broadcast %405 : f32 to vector<16x16xf32>
    %407 = arith.mulf %406, %388 : vector<16x16xf32>
    %408 = arith.addf %374, %407 : vector<16x16xf32>
    %c209 = arith.constant 209 : index
    %409 = memref.load %arg2[%c209] : memref<288xf32, #tpu.memory_space<smem>>
    %410 = vector.broadcast %409 : f32 to vector<16x16xf32>
    %411 = arith.mulf %410, %388 : vector<16x16xf32>
    %412 = arith.addf %378, %411 : vector<16x16xf32>
    %c245 = arith.constant 245 : index
    %413 = memref.load %arg2[%c245] : memref<288xf32, #tpu.memory_space<smem>>
    %414 = vector.broadcast %413 : f32 to vector<16x16xf32>
    %415 = arith.mulf %414, %388 : vector<16x16xf32>
    %416 = arith.addf %382, %415 : vector<16x16xf32>
    %c281 = arith.constant 281 : index
    %417 = memref.load %arg2[%c281] : memref<288xf32, #tpu.memory_space<smem>>
    %418 = vector.broadcast %417 : f32 to vector<16x16xf32>
    %419 = arith.mulf %418, %388 : vector<16x16xf32>
    %420 = arith.addf %386, %419 : vector<16x16xf32>
    %c0_53 = arith.constant 0 : index
    %c1_54 = arith.constant 1 : index
    %c0_55 = arith.constant 0 : index
    %421 = vector.load %arg5[%c0_53, %c1_54, %c0_55] : memref<4x18x18xf32, #tpu.memory_space<vmem>>, vector<1x16x16xf32>
    %422 = vector.shape_cast %421 : vector<1x16x16xf32> to vector<16x16xf32>
    %c3_56 = arith.constant 3 : index
    %423 = memref.load %arg2[%c3_56] : memref<288xf32, #tpu.memory_space<smem>>
    %424 = vector.broadcast %423 : f32 to vector<16x16xf32>
    %425 = arith.mulf %424, %422 : vector<16x16xf32>
    %426 = arith.addf %392, %425 : vector<16x16xf32>
    %c39 = arith.constant 39 : index
    %427 = memref.load %arg2[%c39] : memref<288xf32, #tpu.memory_space<smem>>
    %428 = vector.broadcast %427 : f32 to vector<16x16xf32>
    %429 = arith.mulf %428, %422 : vector<16x16xf32>
    %430 = arith.addf %396, %429 : vector<16x16xf32>
    %c75 = arith.constant 75 : index
    %431 = memref.load %arg2[%c75] : memref<288xf32, #tpu.memory_space<smem>>
    %432 = vector.broadcast %431 : f32 to vector<16x16xf32>
    %433 = arith.mulf %432, %422 : vector<16x16xf32>
    %434 = arith.addf %400, %433 : vector<16x16xf32>
    %c111 = arith.constant 111 : index
    %435 = memref.load %arg2[%c111] : memref<288xf32, #tpu.memory_space<smem>>
    %436 = vector.broadcast %435 : f32 to vector<16x16xf32>
    %437 = arith.mulf %436, %422 : vector<16x16xf32>
    %438 = arith.addf %404, %437 : vector<16x16xf32>
    %c147 = arith.constant 147 : index
    %439 = memref.load %arg2[%c147] : memref<288xf32, #tpu.memory_space<smem>>
    %440 = vector.broadcast %439 : f32 to vector<16x16xf32>
    %441 = arith.mulf %440, %422 : vector<16x16xf32>
    %442 = arith.addf %408, %441 : vector<16x16xf32>
    %c183 = arith.constant 183 : index
    %443 = memref.load %arg2[%c183] : memref<288xf32, #tpu.memory_space<smem>>
    %444 = vector.broadcast %443 : f32 to vector<16x16xf32>
    %445 = arith.mulf %444, %422 : vector<16x16xf32>
    %446 = arith.addf %412, %445 : vector<16x16xf32>
    %c219 = arith.constant 219 : index
    %447 = memref.load %arg2[%c219] : memref<288xf32, #tpu.memory_space<smem>>
    %448 = vector.broadcast %447 : f32 to vector<16x16xf32>
    %449 = arith.mulf %448, %422 : vector<16x16xf32>
    %450 = arith.addf %416, %449 : vector<16x16xf32>
    %c255 = arith.constant 255 : index
    %451 = memref.load %arg2[%c255] : memref<288xf32, #tpu.memory_space<smem>>
    %452 = vector.broadcast %451 : f32 to vector<16x16xf32>
    %453 = arith.mulf %452, %422 : vector<16x16xf32>
    %454 = arith.addf %420, %453 : vector<16x16xf32>
    %c1_57 = arith.constant 1 : index
    %c1_58 = arith.constant 1 : index
    %c0_59 = arith.constant 0 : index
    %455 = vector.load %arg5[%c1_57, %c1_58, %c0_59] : memref<4x18x18xf32, #tpu.memory_space<vmem>>, vector<1x16x16xf32>
    %456 = vector.shape_cast %455 : vector<1x16x16xf32> to vector<16x16xf32>
    %c12 = arith.constant 12 : index
    %457 = memref.load %arg2[%c12] : memref<288xf32, #tpu.memory_space<smem>>
    %458 = vector.broadcast %457 : f32 to vector<16x16xf32>
    %459 = arith.mulf %458, %456 : vector<16x16xf32>
    %460 = arith.addf %426, %459 : vector<16x16xf32>
    %c48 = arith.constant 48 : index
    %461 = memref.load %arg2[%c48] : memref<288xf32, #tpu.memory_space<smem>>
    %462 = vector.broadcast %461 : f32 to vector<16x16xf32>
    %463 = arith.mulf %462, %456 : vector<16x16xf32>
    %464 = arith.addf %430, %463 : vector<16x16xf32>
    %c84 = arith.constant 84 : index
    %465 = memref.load %arg2[%c84] : memref<288xf32, #tpu.memory_space<smem>>
    %466 = vector.broadcast %465 : f32 to vector<16x16xf32>
    %467 = arith.mulf %466, %456 : vector<16x16xf32>
    %468 = arith.addf %434, %467 : vector<16x16xf32>
    %c120 = arith.constant 120 : index
    %469 = memref.load %arg2[%c120] : memref<288xf32, #tpu.memory_space<smem>>
    %470 = vector.broadcast %469 : f32 to vector<16x16xf32>
    %471 = arith.mulf %470, %456 : vector<16x16xf32>
    %472 = arith.addf %438, %471 : vector<16x16xf32>
    %c156 = arith.constant 156 : index
    %473 = memref.load %arg2[%c156] : memref<288xf32, #tpu.memory_space<smem>>
    %474 = vector.broadcast %473 : f32 to vector<16x16xf32>
    %475 = arith.mulf %474, %456 : vector<16x16xf32>
    %476 = arith.addf %442, %475 : vector<16x16xf32>
    %c192 = arith.constant 192 : index
    %477 = memref.load %arg2[%c192] : memref<288xf32, #tpu.memory_space<smem>>
    %478 = vector.broadcast %477 : f32 to vector<16x16xf32>
    %479 = arith.mulf %478, %456 : vector<16x16xf32>
    %480 = arith.addf %446, %479 : vector<16x16xf32>
    %c228 = arith.constant 228 : index
    %481 = memref.load %arg2[%c228] : memref<288xf32, #tpu.memory_space<smem>>
    %482 = vector.broadcast %481 : f32 to vector<16x16xf32>
    %483 = arith.mulf %482, %456 : vector<16x16xf32>
    %484 = arith.addf %450, %483 : vector<16x16xf32>
    %c264 = arith.constant 264 : index
    %485 = memref.load %arg2[%c264] : memref<288xf32, #tpu.memory_space<smem>>
    %486 = vector.broadcast %485 : f32 to vector<16x16xf32>
    %487 = arith.mulf %486, %456 : vector<16x16xf32>
    %488 = arith.addf %454, %487 : vector<16x16xf32>
    %c2_60 = arith.constant 2 : index
    %c1_61 = arith.constant 1 : index
    %c0_62 = arith.constant 0 : index
    %489 = vector.load %arg5[%c2_60, %c1_61, %c0_62] : memref<4x18x18xf32, #tpu.memory_space<vmem>>, vector<1x16x16xf32>
    %490 = vector.shape_cast %489 : vector<1x16x16xf32> to vector<16x16xf32>
    %c21 = arith.constant 21 : index
    %491 = memref.load %arg2[%c21] : memref<288xf32, #tpu.memory_space<smem>>
    %492 = vector.broadcast %491 : f32 to vector<16x16xf32>
    %493 = arith.mulf %492, %490 : vector<16x16xf32>
    %494 = arith.addf %460, %493 : vector<16x16xf32>
    %c57 = arith.constant 57 : index
    %495 = memref.load %arg2[%c57] : memref<288xf32, #tpu.memory_space<smem>>
    %496 = vector.broadcast %495 : f32 to vector<16x16xf32>
    %497 = arith.mulf %496, %490 : vector<16x16xf32>
    %498 = arith.addf %464, %497 : vector<16x16xf32>
    %c93 = arith.constant 93 : index
    %499 = memref.load %arg2[%c93] : memref<288xf32, #tpu.memory_space<smem>>
    %500 = vector.broadcast %499 : f32 to vector<16x16xf32>
    %501 = arith.mulf %500, %490 : vector<16x16xf32>
    %502 = arith.addf %468, %501 : vector<16x16xf32>
    %c129 = arith.constant 129 : index
    %503 = memref.load %arg2[%c129] : memref<288xf32, #tpu.memory_space<smem>>
    %504 = vector.broadcast %503 : f32 to vector<16x16xf32>
    %505 = arith.mulf %504, %490 : vector<16x16xf32>
    %506 = arith.addf %472, %505 : vector<16x16xf32>
    %c165 = arith.constant 165 : index
    %507 = memref.load %arg2[%c165] : memref<288xf32, #tpu.memory_space<smem>>
    %508 = vector.broadcast %507 : f32 to vector<16x16xf32>
    %509 = arith.mulf %508, %490 : vector<16x16xf32>
    %510 = arith.addf %476, %509 : vector<16x16xf32>
    %c201 = arith.constant 201 : index
    %511 = memref.load %arg2[%c201] : memref<288xf32, #tpu.memory_space<smem>>
    %512 = vector.broadcast %511 : f32 to vector<16x16xf32>
    %513 = arith.mulf %512, %490 : vector<16x16xf32>
    %514 = arith.addf %480, %513 : vector<16x16xf32>
    %c237 = arith.constant 237 : index
    %515 = memref.load %arg2[%c237] : memref<288xf32, #tpu.memory_space<smem>>
    %516 = vector.broadcast %515 : f32 to vector<16x16xf32>
    %517 = arith.mulf %516, %490 : vector<16x16xf32>
    %518 = arith.addf %484, %517 : vector<16x16xf32>
    %c273 = arith.constant 273 : index
    %519 = memref.load %arg2[%c273] : memref<288xf32, #tpu.memory_space<smem>>
    %520 = vector.broadcast %519 : f32 to vector<16x16xf32>
    %521 = arith.mulf %520, %490 : vector<16x16xf32>
    %522 = arith.addf %488, %521 : vector<16x16xf32>
    %c3_63 = arith.constant 3 : index
    %c1_64 = arith.constant 1 : index
    %c0_65 = arith.constant 0 : index
    %523 = vector.load %arg5[%c3_63, %c1_64, %c0_65] : memref<4x18x18xf32, #tpu.memory_space<vmem>>, vector<1x16x16xf32>
    %524 = vector.shape_cast %523 : vector<1x16x16xf32> to vector<16x16xf32>
    %c30 = arith.constant 30 : index
    %525 = memref.load %arg2[%c30] : memref<288xf32, #tpu.memory_space<smem>>
    %526 = vector.broadcast %525 : f32 to vector<16x16xf32>
    %527 = arith.mulf %526, %524 : vector<16x16xf32>
    %528 = arith.addf %494, %527 : vector<16x16xf32>
    %c66 = arith.constant 66 : index
    %529 = memref.load %arg2[%c66] : memref<288xf32, #tpu.memory_space<smem>>
    %530 = vector.broadcast %529 : f32 to vector<16x16xf32>
    %531 = arith.mulf %530, %524 : vector<16x16xf32>
    %532 = arith.addf %498, %531 : vector<16x16xf32>
    %c102 = arith.constant 102 : index
    %533 = memref.load %arg2[%c102] : memref<288xf32, #tpu.memory_space<smem>>
    %534 = vector.broadcast %533 : f32 to vector<16x16xf32>
    %535 = arith.mulf %534, %524 : vector<16x16xf32>
    %536 = arith.addf %502, %535 : vector<16x16xf32>
    %c138 = arith.constant 138 : index
    %537 = memref.load %arg2[%c138] : memref<288xf32, #tpu.memory_space<smem>>
    %538 = vector.broadcast %537 : f32 to vector<16x16xf32>
    %539 = arith.mulf %538, %524 : vector<16x16xf32>
    %540 = arith.addf %506, %539 : vector<16x16xf32>
    %c174 = arith.constant 174 : index
    %541 = memref.load %arg2[%c174] : memref<288xf32, #tpu.memory_space<smem>>
    %542 = vector.broadcast %541 : f32 to vector<16x16xf32>
    %543 = arith.mulf %542, %524 : vector<16x16xf32>
    %544 = arith.addf %510, %543 : vector<16x16xf32>
    %c210 = arith.constant 210 : index
    %545 = memref.load %arg2[%c210] : memref<288xf32, #tpu.memory_space<smem>>
    %546 = vector.broadcast %545 : f32 to vector<16x16xf32>
    %547 = arith.mulf %546, %524 : vector<16x16xf32>
    %548 = arith.addf %514, %547 : vector<16x16xf32>
    %c246 = arith.constant 246 : index
    %549 = memref.load %arg2[%c246] : memref<288xf32, #tpu.memory_space<smem>>
    %550 = vector.broadcast %549 : f32 to vector<16x16xf32>
    %551 = arith.mulf %550, %524 : vector<16x16xf32>
    %552 = arith.addf %518, %551 : vector<16x16xf32>
    %c282 = arith.constant 282 : index
    %553 = memref.load %arg2[%c282] : memref<288xf32, #tpu.memory_space<smem>>
    %554 = vector.broadcast %553 : f32 to vector<16x16xf32>
    %555 = arith.mulf %554, %524 : vector<16x16xf32>
    %556 = arith.addf %522, %555 : vector<16x16xf32>
    %c0_66 = arith.constant 0 : index
    %c1_67 = arith.constant 1 : index
    %c1_68 = arith.constant 1 : index
    %557 = vector.load %arg5[%c0_66, %c1_67, %c1_68] : memref<4x18x18xf32, #tpu.memory_space<vmem>>, vector<1x16x16xf32>
    %558 = vector.shape_cast %557 : vector<1x16x16xf32> to vector<16x16xf32>
    %c4 = arith.constant 4 : index
    %559 = memref.load %arg2[%c4] : memref<288xf32, #tpu.memory_space<smem>>
    %560 = vector.broadcast %559 : f32 to vector<16x16xf32>
    %561 = arith.mulf %560, %558 : vector<16x16xf32>
    %562 = arith.addf %528, %561 : vector<16x16xf32>
    %c40 = arith.constant 40 : index
    %563 = memref.load %arg2[%c40] : memref<288xf32, #tpu.memory_space<smem>>
    %564 = vector.broadcast %563 : f32 to vector<16x16xf32>
    %565 = arith.mulf %564, %558 : vector<16x16xf32>
    %566 = arith.addf %532, %565 : vector<16x16xf32>
    %c76 = arith.constant 76 : index
    %567 = memref.load %arg2[%c76] : memref<288xf32, #tpu.memory_space<smem>>
    %568 = vector.broadcast %567 : f32 to vector<16x16xf32>
    %569 = arith.mulf %568, %558 : vector<16x16xf32>
    %570 = arith.addf %536, %569 : vector<16x16xf32>
    %c112 = arith.constant 112 : index
    %571 = memref.load %arg2[%c112] : memref<288xf32, #tpu.memory_space<smem>>
    %572 = vector.broadcast %571 : f32 to vector<16x16xf32>
    %573 = arith.mulf %572, %558 : vector<16x16xf32>
    %574 = arith.addf %540, %573 : vector<16x16xf32>
    %c148 = arith.constant 148 : index
    %575 = memref.load %arg2[%c148] : memref<288xf32, #tpu.memory_space<smem>>
    %576 = vector.broadcast %575 : f32 to vector<16x16xf32>
    %577 = arith.mulf %576, %558 : vector<16x16xf32>
    %578 = arith.addf %544, %577 : vector<16x16xf32>
    %c184 = arith.constant 184 : index
    %579 = memref.load %arg2[%c184] : memref<288xf32, #tpu.memory_space<smem>>
    %580 = vector.broadcast %579 : f32 to vector<16x16xf32>
    %581 = arith.mulf %580, %558 : vector<16x16xf32>
    %582 = arith.addf %548, %581 : vector<16x16xf32>
    %c220 = arith.constant 220 : index
    %583 = memref.load %arg2[%c220] : memref<288xf32, #tpu.memory_space<smem>>
    %584 = vector.broadcast %583 : f32 to vector<16x16xf32>
    %585 = arith.mulf %584, %558 : vector<16x16xf32>
    %586 = arith.addf %552, %585 : vector<16x16xf32>
    %c256 = arith.constant 256 : index
    %587 = memref.load %arg2[%c256] : memref<288xf32, #tpu.memory_space<smem>>
    %588 = vector.broadcast %587 : f32 to vector<16x16xf32>
    %589 = arith.mulf %588, %558 : vector<16x16xf32>
    %590 = arith.addf %556, %589 : vector<16x16xf32>
    %c1_69 = arith.constant 1 : index
    %c1_70 = arith.constant 1 : index
    %c1_71 = arith.constant 1 : index
    %591 = vector.load %arg5[%c1_69, %c1_70, %c1_71] : memref<4x18x18xf32, #tpu.memory_space<vmem>>, vector<1x16x16xf32>
    %592 = vector.shape_cast %591 : vector<1x16x16xf32> to vector<16x16xf32>
    %c13 = arith.constant 13 : index
    %593 = memref.load %arg2[%c13] : memref<288xf32, #tpu.memory_space<smem>>
    %594 = vector.broadcast %593 : f32 to vector<16x16xf32>
    %595 = arith.mulf %594, %592 : vector<16x16xf32>
    %596 = arith.addf %562, %595 : vector<16x16xf32>
    %c49 = arith.constant 49 : index
    %597 = memref.load %arg2[%c49] : memref<288xf32, #tpu.memory_space<smem>>
    %598 = vector.broadcast %597 : f32 to vector<16x16xf32>
    %599 = arith.mulf %598, %592 : vector<16x16xf32>
    %600 = arith.addf %566, %599 : vector<16x16xf32>
    %c85 = arith.constant 85 : index
    %601 = memref.load %arg2[%c85] : memref<288xf32, #tpu.memory_space<smem>>
    %602 = vector.broadcast %601 : f32 to vector<16x16xf32>
    %603 = arith.mulf %602, %592 : vector<16x16xf32>
    %604 = arith.addf %570, %603 : vector<16x16xf32>
    %c121 = arith.constant 121 : index
    %605 = memref.load %arg2[%c121] : memref<288xf32, #tpu.memory_space<smem>>
    %606 = vector.broadcast %605 : f32 to vector<16x16xf32>
    %607 = arith.mulf %606, %592 : vector<16x16xf32>
    %608 = arith.addf %574, %607 : vector<16x16xf32>
    %c157 = arith.constant 157 : index
    %609 = memref.load %arg2[%c157] : memref<288xf32, #tpu.memory_space<smem>>
    %610 = vector.broadcast %609 : f32 to vector<16x16xf32>
    %611 = arith.mulf %610, %592 : vector<16x16xf32>
    %612 = arith.addf %578, %611 : vector<16x16xf32>
    %c193 = arith.constant 193 : index
    %613 = memref.load %arg2[%c193] : memref<288xf32, #tpu.memory_space<smem>>
    %614 = vector.broadcast %613 : f32 to vector<16x16xf32>
    %615 = arith.mulf %614, %592 : vector<16x16xf32>
    %616 = arith.addf %582, %615 : vector<16x16xf32>
    %c229 = arith.constant 229 : index
    %617 = memref.load %arg2[%c229] : memref<288xf32, #tpu.memory_space<smem>>
    %618 = vector.broadcast %617 : f32 to vector<16x16xf32>
    %619 = arith.mulf %618, %592 : vector<16x16xf32>
    %620 = arith.addf %586, %619 : vector<16x16xf32>
    %c265 = arith.constant 265 : index
    %621 = memref.load %arg2[%c265] : memref<288xf32, #tpu.memory_space<smem>>
    %622 = vector.broadcast %621 : f32 to vector<16x16xf32>
    %623 = arith.mulf %622, %592 : vector<16x16xf32>
    %624 = arith.addf %590, %623 : vector<16x16xf32>
    %c2_72 = arith.constant 2 : index
    %c1_73 = arith.constant 1 : index
    %c1_74 = arith.constant 1 : index
    %625 = vector.load %arg5[%c2_72, %c1_73, %c1_74] : memref<4x18x18xf32, #tpu.memory_space<vmem>>, vector<1x16x16xf32>
    %626 = vector.shape_cast %625 : vector<1x16x16xf32> to vector<16x16xf32>
    %c22 = arith.constant 22 : index
    %627 = memref.load %arg2[%c22] : memref<288xf32, #tpu.memory_space<smem>>
    %628 = vector.broadcast %627 : f32 to vector<16x16xf32>
    %629 = arith.mulf %628, %626 : vector<16x16xf32>
    %630 = arith.addf %596, %629 : vector<16x16xf32>
    %c58 = arith.constant 58 : index
    %631 = memref.load %arg2[%c58] : memref<288xf32, #tpu.memory_space<smem>>
    %632 = vector.broadcast %631 : f32 to vector<16x16xf32>
    %633 = arith.mulf %632, %626 : vector<16x16xf32>
    %634 = arith.addf %600, %633 : vector<16x16xf32>
    %c94 = arith.constant 94 : index
    %635 = memref.load %arg2[%c94] : memref<288xf32, #tpu.memory_space<smem>>
    %636 = vector.broadcast %635 : f32 to vector<16x16xf32>
    %637 = arith.mulf %636, %626 : vector<16x16xf32>
    %638 = arith.addf %604, %637 : vector<16x16xf32>
    %c130 = arith.constant 130 : index
    %639 = memref.load %arg2[%c130] : memref<288xf32, #tpu.memory_space<smem>>
    %640 = vector.broadcast %639 : f32 to vector<16x16xf32>
    %641 = arith.mulf %640, %626 : vector<16x16xf32>
    %642 = arith.addf %608, %641 : vector<16x16xf32>
    %c166 = arith.constant 166 : index
    %643 = memref.load %arg2[%c166] : memref<288xf32, #tpu.memory_space<smem>>
    %644 = vector.broadcast %643 : f32 to vector<16x16xf32>
    %645 = arith.mulf %644, %626 : vector<16x16xf32>
    %646 = arith.addf %612, %645 : vector<16x16xf32>
    %c202 = arith.constant 202 : index
    %647 = memref.load %arg2[%c202] : memref<288xf32, #tpu.memory_space<smem>>
    %648 = vector.broadcast %647 : f32 to vector<16x16xf32>
    %649 = arith.mulf %648, %626 : vector<16x16xf32>
    %650 = arith.addf %616, %649 : vector<16x16xf32>
    %c238 = arith.constant 238 : index
    %651 = memref.load %arg2[%c238] : memref<288xf32, #tpu.memory_space<smem>>
    %652 = vector.broadcast %651 : f32 to vector<16x16xf32>
    %653 = arith.mulf %652, %626 : vector<16x16xf32>
    %654 = arith.addf %620, %653 : vector<16x16xf32>
    %c274 = arith.constant 274 : index
    %655 = memref.load %arg2[%c274] : memref<288xf32, #tpu.memory_space<smem>>
    %656 = vector.broadcast %655 : f32 to vector<16x16xf32>
    %657 = arith.mulf %656, %626 : vector<16x16xf32>
    %658 = arith.addf %624, %657 : vector<16x16xf32>
    %c3_75 = arith.constant 3 : index
    %c1_76 = arith.constant 1 : index
    %c1_77 = arith.constant 1 : index
    %659 = vector.load %arg5[%c3_75, %c1_76, %c1_77] : memref<4x18x18xf32, #tpu.memory_space<vmem>>, vector<1x16x16xf32>
    %660 = vector.shape_cast %659 : vector<1x16x16xf32> to vector<16x16xf32>
    %c31 = arith.constant 31 : index
    %661 = memref.load %arg2[%c31] : memref<288xf32, #tpu.memory_space<smem>>
    %662 = vector.broadcast %661 : f32 to vector<16x16xf32>
    %663 = arith.mulf %662, %660 : vector<16x16xf32>
    %664 = arith.addf %630, %663 : vector<16x16xf32>
    %c67 = arith.constant 67 : index
    %665 = memref.load %arg2[%c67] : memref<288xf32, #tpu.memory_space<smem>>
    %666 = vector.broadcast %665 : f32 to vector<16x16xf32>
    %667 = arith.mulf %666, %660 : vector<16x16xf32>
    %668 = arith.addf %634, %667 : vector<16x16xf32>
    %c103 = arith.constant 103 : index
    %669 = memref.load %arg2[%c103] : memref<288xf32, #tpu.memory_space<smem>>
    %670 = vector.broadcast %669 : f32 to vector<16x16xf32>
    %671 = arith.mulf %670, %660 : vector<16x16xf32>
    %672 = arith.addf %638, %671 : vector<16x16xf32>
    %c139 = arith.constant 139 : index
    %673 = memref.load %arg2[%c139] : memref<288xf32, #tpu.memory_space<smem>>
    %674 = vector.broadcast %673 : f32 to vector<16x16xf32>
    %675 = arith.mulf %674, %660 : vector<16x16xf32>
    %676 = arith.addf %642, %675 : vector<16x16xf32>
    %c175 = arith.constant 175 : index
    %677 = memref.load %arg2[%c175] : memref<288xf32, #tpu.memory_space<smem>>
    %678 = vector.broadcast %677 : f32 to vector<16x16xf32>
    %679 = arith.mulf %678, %660 : vector<16x16xf32>
    %680 = arith.addf %646, %679 : vector<16x16xf32>
    %c211 = arith.constant 211 : index
    %681 = memref.load %arg2[%c211] : memref<288xf32, #tpu.memory_space<smem>>
    %682 = vector.broadcast %681 : f32 to vector<16x16xf32>
    %683 = arith.mulf %682, %660 : vector<16x16xf32>
    %684 = arith.addf %650, %683 : vector<16x16xf32>
    %c247 = arith.constant 247 : index
    %685 = memref.load %arg2[%c247] : memref<288xf32, #tpu.memory_space<smem>>
    %686 = vector.broadcast %685 : f32 to vector<16x16xf32>
    %687 = arith.mulf %686, %660 : vector<16x16xf32>
    %688 = arith.addf %654, %687 : vector<16x16xf32>
    %c283 = arith.constant 283 : index
    %689 = memref.load %arg2[%c283] : memref<288xf32, #tpu.memory_space<smem>>
    %690 = vector.broadcast %689 : f32 to vector<16x16xf32>
    %691 = arith.mulf %690, %660 : vector<16x16xf32>
    %692 = arith.addf %658, %691 : vector<16x16xf32>
    %c0_78 = arith.constant 0 : index
    %c1_79 = arith.constant 1 : index
    %c2_80 = arith.constant 2 : index
    %693 = vector.load %arg5[%c0_78, %c1_79, %c2_80] : memref<4x18x18xf32, #tpu.memory_space<vmem>>, vector<1x16x16xf32>
    %694 = vector.shape_cast %693 : vector<1x16x16xf32> to vector<16x16xf32>
    %c5 = arith.constant 5 : index
    %695 = memref.load %arg2[%c5] : memref<288xf32, #tpu.memory_space<smem>>
    %696 = vector.broadcast %695 : f32 to vector<16x16xf32>
    %697 = arith.mulf %696, %694 : vector<16x16xf32>
    %698 = arith.addf %664, %697 : vector<16x16xf32>
    %c41 = arith.constant 41 : index
    %699 = memref.load %arg2[%c41] : memref<288xf32, #tpu.memory_space<smem>>
    %700 = vector.broadcast %699 : f32 to vector<16x16xf32>
    %701 = arith.mulf %700, %694 : vector<16x16xf32>
    %702 = arith.addf %668, %701 : vector<16x16xf32>
    %c77 = arith.constant 77 : index
    %703 = memref.load %arg2[%c77] : memref<288xf32, #tpu.memory_space<smem>>
    %704 = vector.broadcast %703 : f32 to vector<16x16xf32>
    %705 = arith.mulf %704, %694 : vector<16x16xf32>
    %706 = arith.addf %672, %705 : vector<16x16xf32>
    %c113 = arith.constant 113 : index
    %707 = memref.load %arg2[%c113] : memref<288xf32, #tpu.memory_space<smem>>
    %708 = vector.broadcast %707 : f32 to vector<16x16xf32>
    %709 = arith.mulf %708, %694 : vector<16x16xf32>
    %710 = arith.addf %676, %709 : vector<16x16xf32>
    %c149 = arith.constant 149 : index
    %711 = memref.load %arg2[%c149] : memref<288xf32, #tpu.memory_space<smem>>
    %712 = vector.broadcast %711 : f32 to vector<16x16xf32>
    %713 = arith.mulf %712, %694 : vector<16x16xf32>
    %714 = arith.addf %680, %713 : vector<16x16xf32>
    %c185 = arith.constant 185 : index
    %715 = memref.load %arg2[%c185] : memref<288xf32, #tpu.memory_space<smem>>
    %716 = vector.broadcast %715 : f32 to vector<16x16xf32>
    %717 = arith.mulf %716, %694 : vector<16x16xf32>
    %718 = arith.addf %684, %717 : vector<16x16xf32>
    %c221 = arith.constant 221 : index
    %719 = memref.load %arg2[%c221] : memref<288xf32, #tpu.memory_space<smem>>
    %720 = vector.broadcast %719 : f32 to vector<16x16xf32>
    %721 = arith.mulf %720, %694 : vector<16x16xf32>
    %722 = arith.addf %688, %721 : vector<16x16xf32>
    %c257 = arith.constant 257 : index
    %723 = memref.load %arg2[%c257] : memref<288xf32, #tpu.memory_space<smem>>
    %724 = vector.broadcast %723 : f32 to vector<16x16xf32>
    %725 = arith.mulf %724, %694 : vector<16x16xf32>
    %726 = arith.addf %692, %725 : vector<16x16xf32>
    %c1_81 = arith.constant 1 : index
    %c1_82 = arith.constant 1 : index
    %c2_83 = arith.constant 2 : index
    %727 = vector.load %arg5[%c1_81, %c1_82, %c2_83] : memref<4x18x18xf32, #tpu.memory_space<vmem>>, vector<1x16x16xf32>
    %728 = vector.shape_cast %727 : vector<1x16x16xf32> to vector<16x16xf32>
    %c14 = arith.constant 14 : index
    %729 = memref.load %arg2[%c14] : memref<288xf32, #tpu.memory_space<smem>>
    %730 = vector.broadcast %729 : f32 to vector<16x16xf32>
    %731 = arith.mulf %730, %728 : vector<16x16xf32>
    %732 = arith.addf %698, %731 : vector<16x16xf32>
    %c50 = arith.constant 50 : index
    %733 = memref.load %arg2[%c50] : memref<288xf32, #tpu.memory_space<smem>>
    %734 = vector.broadcast %733 : f32 to vector<16x16xf32>
    %735 = arith.mulf %734, %728 : vector<16x16xf32>
    %736 = arith.addf %702, %735 : vector<16x16xf32>
    %c86 = arith.constant 86 : index
    %737 = memref.load %arg2[%c86] : memref<288xf32, #tpu.memory_space<smem>>
    %738 = vector.broadcast %737 : f32 to vector<16x16xf32>
    %739 = arith.mulf %738, %728 : vector<16x16xf32>
    %740 = arith.addf %706, %739 : vector<16x16xf32>
    %c122 = arith.constant 122 : index
    %741 = memref.load %arg2[%c122] : memref<288xf32, #tpu.memory_space<smem>>
    %742 = vector.broadcast %741 : f32 to vector<16x16xf32>
    %743 = arith.mulf %742, %728 : vector<16x16xf32>
    %744 = arith.addf %710, %743 : vector<16x16xf32>
    %c158 = arith.constant 158 : index
    %745 = memref.load %arg2[%c158] : memref<288xf32, #tpu.memory_space<smem>>
    %746 = vector.broadcast %745 : f32 to vector<16x16xf32>
    %747 = arith.mulf %746, %728 : vector<16x16xf32>
    %748 = arith.addf %714, %747 : vector<16x16xf32>
    %c194 = arith.constant 194 : index
    %749 = memref.load %arg2[%c194] : memref<288xf32, #tpu.memory_space<smem>>
    %750 = vector.broadcast %749 : f32 to vector<16x16xf32>
    %751 = arith.mulf %750, %728 : vector<16x16xf32>
    %752 = arith.addf %718, %751 : vector<16x16xf32>
    %c230 = arith.constant 230 : index
    %753 = memref.load %arg2[%c230] : memref<288xf32, #tpu.memory_space<smem>>
    %754 = vector.broadcast %753 : f32 to vector<16x16xf32>
    %755 = arith.mulf %754, %728 : vector<16x16xf32>
    %756 = arith.addf %722, %755 : vector<16x16xf32>
    %c266 = arith.constant 266 : index
    %757 = memref.load %arg2[%c266] : memref<288xf32, #tpu.memory_space<smem>>
    %758 = vector.broadcast %757 : f32 to vector<16x16xf32>
    %759 = arith.mulf %758, %728 : vector<16x16xf32>
    %760 = arith.addf %726, %759 : vector<16x16xf32>
    %c2_84 = arith.constant 2 : index
    %c1_85 = arith.constant 1 : index
    %c2_86 = arith.constant 2 : index
    %761 = vector.load %arg5[%c2_84, %c1_85, %c2_86] : memref<4x18x18xf32, #tpu.memory_space<vmem>>, vector<1x16x16xf32>
    %762 = vector.shape_cast %761 : vector<1x16x16xf32> to vector<16x16xf32>
    %c23 = arith.constant 23 : index
    %763 = memref.load %arg2[%c23] : memref<288xf32, #tpu.memory_space<smem>>
    %764 = vector.broadcast %763 : f32 to vector<16x16xf32>
    %765 = arith.mulf %764, %762 : vector<16x16xf32>
    %766 = arith.addf %732, %765 : vector<16x16xf32>
    %c59 = arith.constant 59 : index
    %767 = memref.load %arg2[%c59] : memref<288xf32, #tpu.memory_space<smem>>
    %768 = vector.broadcast %767 : f32 to vector<16x16xf32>
    %769 = arith.mulf %768, %762 : vector<16x16xf32>
    %770 = arith.addf %736, %769 : vector<16x16xf32>
    %c95 = arith.constant 95 : index
    %771 = memref.load %arg2[%c95] : memref<288xf32, #tpu.memory_space<smem>>
    %772 = vector.broadcast %771 : f32 to vector<16x16xf32>
    %773 = arith.mulf %772, %762 : vector<16x16xf32>
    %774 = arith.addf %740, %773 : vector<16x16xf32>
    %c131 = arith.constant 131 : index
    %775 = memref.load %arg2[%c131] : memref<288xf32, #tpu.memory_space<smem>>
    %776 = vector.broadcast %775 : f32 to vector<16x16xf32>
    %777 = arith.mulf %776, %762 : vector<16x16xf32>
    %778 = arith.addf %744, %777 : vector<16x16xf32>
    %c167 = arith.constant 167 : index
    %779 = memref.load %arg2[%c167] : memref<288xf32, #tpu.memory_space<smem>>
    %780 = vector.broadcast %779 : f32 to vector<16x16xf32>
    %781 = arith.mulf %780, %762 : vector<16x16xf32>
    %782 = arith.addf %748, %781 : vector<16x16xf32>
    %c203 = arith.constant 203 : index
    %783 = memref.load %arg2[%c203] : memref<288xf32, #tpu.memory_space<smem>>
    %784 = vector.broadcast %783 : f32 to vector<16x16xf32>
    %785 = arith.mulf %784, %762 : vector<16x16xf32>
    %786 = arith.addf %752, %785 : vector<16x16xf32>
    %c239 = arith.constant 239 : index
    %787 = memref.load %arg2[%c239] : memref<288xf32, #tpu.memory_space<smem>>
    %788 = vector.broadcast %787 : f32 to vector<16x16xf32>
    %789 = arith.mulf %788, %762 : vector<16x16xf32>
    %790 = arith.addf %756, %789 : vector<16x16xf32>
    %c275 = arith.constant 275 : index
    %791 = memref.load %arg2[%c275] : memref<288xf32, #tpu.memory_space<smem>>
    %792 = vector.broadcast %791 : f32 to vector<16x16xf32>
    %793 = arith.mulf %792, %762 : vector<16x16xf32>
    %794 = arith.addf %760, %793 : vector<16x16xf32>
    %c3_87 = arith.constant 3 : index
    %c1_88 = arith.constant 1 : index
    %c2_89 = arith.constant 2 : index
    %795 = vector.load %arg5[%c3_87, %c1_88, %c2_89] : memref<4x18x18xf32, #tpu.memory_space<vmem>>, vector<1x16x16xf32>
    %796 = vector.shape_cast %795 : vector<1x16x16xf32> to vector<16x16xf32>
    %c32 = arith.constant 32 : index
    %797 = memref.load %arg2[%c32] : memref<288xf32, #tpu.memory_space<smem>>
    %798 = vector.broadcast %797 : f32 to vector<16x16xf32>
    %799 = arith.mulf %798, %796 : vector<16x16xf32>
    %800 = arith.addf %766, %799 : vector<16x16xf32>
    %c68 = arith.constant 68 : index
    %801 = memref.load %arg2[%c68] : memref<288xf32, #tpu.memory_space<smem>>
    %802 = vector.broadcast %801 : f32 to vector<16x16xf32>
    %803 = arith.mulf %802, %796 : vector<16x16xf32>
    %804 = arith.addf %770, %803 : vector<16x16xf32>
    %c104 = arith.constant 104 : index
    %805 = memref.load %arg2[%c104] : memref<288xf32, #tpu.memory_space<smem>>
    %806 = vector.broadcast %805 : f32 to vector<16x16xf32>
    %807 = arith.mulf %806, %796 : vector<16x16xf32>
    %808 = arith.addf %774, %807 : vector<16x16xf32>
    %c140 = arith.constant 140 : index
    %809 = memref.load %arg2[%c140] : memref<288xf32, #tpu.memory_space<smem>>
    %810 = vector.broadcast %809 : f32 to vector<16x16xf32>
    %811 = arith.mulf %810, %796 : vector<16x16xf32>
    %812 = arith.addf %778, %811 : vector<16x16xf32>
    %c176 = arith.constant 176 : index
    %813 = memref.load %arg2[%c176] : memref<288xf32, #tpu.memory_space<smem>>
    %814 = vector.broadcast %813 : f32 to vector<16x16xf32>
    %815 = arith.mulf %814, %796 : vector<16x16xf32>
    %816 = arith.addf %782, %815 : vector<16x16xf32>
    %c212 = arith.constant 212 : index
    %817 = memref.load %arg2[%c212] : memref<288xf32, #tpu.memory_space<smem>>
    %818 = vector.broadcast %817 : f32 to vector<16x16xf32>
    %819 = arith.mulf %818, %796 : vector<16x16xf32>
    %820 = arith.addf %786, %819 : vector<16x16xf32>
    %c248 = arith.constant 248 : index
    %821 = memref.load %arg2[%c248] : memref<288xf32, #tpu.memory_space<smem>>
    %822 = vector.broadcast %821 : f32 to vector<16x16xf32>
    %823 = arith.mulf %822, %796 : vector<16x16xf32>
    %824 = arith.addf %790, %823 : vector<16x16xf32>
    %c284 = arith.constant 284 : index
    %825 = memref.load %arg2[%c284] : memref<288xf32, #tpu.memory_space<smem>>
    %826 = vector.broadcast %825 : f32 to vector<16x16xf32>
    %827 = arith.mulf %826, %796 : vector<16x16xf32>
    %828 = arith.addf %794, %827 : vector<16x16xf32>
    %c0_90 = arith.constant 0 : index
    %c2_91 = arith.constant 2 : index
    %c0_92 = arith.constant 0 : index
    %829 = vector.load %arg5[%c0_90, %c2_91, %c0_92] : memref<4x18x18xf32, #tpu.memory_space<vmem>>, vector<1x16x16xf32>
    %830 = vector.shape_cast %829 : vector<1x16x16xf32> to vector<16x16xf32>
    %c6 = arith.constant 6 : index
    %831 = memref.load %arg2[%c6] : memref<288xf32, #tpu.memory_space<smem>>
    %832 = vector.broadcast %831 : f32 to vector<16x16xf32>
    %833 = arith.mulf %832, %830 : vector<16x16xf32>
    %834 = arith.addf %800, %833 : vector<16x16xf32>
    %c42 = arith.constant 42 : index
    %835 = memref.load %arg2[%c42] : memref<288xf32, #tpu.memory_space<smem>>
    %836 = vector.broadcast %835 : f32 to vector<16x16xf32>
    %837 = arith.mulf %836, %830 : vector<16x16xf32>
    %838 = arith.addf %804, %837 : vector<16x16xf32>
    %c78 = arith.constant 78 : index
    %839 = memref.load %arg2[%c78] : memref<288xf32, #tpu.memory_space<smem>>
    %840 = vector.broadcast %839 : f32 to vector<16x16xf32>
    %841 = arith.mulf %840, %830 : vector<16x16xf32>
    %842 = arith.addf %808, %841 : vector<16x16xf32>
    %c114 = arith.constant 114 : index
    %843 = memref.load %arg2[%c114] : memref<288xf32, #tpu.memory_space<smem>>
    %844 = vector.broadcast %843 : f32 to vector<16x16xf32>
    %845 = arith.mulf %844, %830 : vector<16x16xf32>
    %846 = arith.addf %812, %845 : vector<16x16xf32>
    %c150 = arith.constant 150 : index
    %847 = memref.load %arg2[%c150] : memref<288xf32, #tpu.memory_space<smem>>
    %848 = vector.broadcast %847 : f32 to vector<16x16xf32>
    %849 = arith.mulf %848, %830 : vector<16x16xf32>
    %850 = arith.addf %816, %849 : vector<16x16xf32>
    %c186 = arith.constant 186 : index
    %851 = memref.load %arg2[%c186] : memref<288xf32, #tpu.memory_space<smem>>
    %852 = vector.broadcast %851 : f32 to vector<16x16xf32>
    %853 = arith.mulf %852, %830 : vector<16x16xf32>
    %854 = arith.addf %820, %853 : vector<16x16xf32>
    %c222 = arith.constant 222 : index
    %855 = memref.load %arg2[%c222] : memref<288xf32, #tpu.memory_space<smem>>
    %856 = vector.broadcast %855 : f32 to vector<16x16xf32>
    %857 = arith.mulf %856, %830 : vector<16x16xf32>
    %858 = arith.addf %824, %857 : vector<16x16xf32>
    %c258 = arith.constant 258 : index
    %859 = memref.load %arg2[%c258] : memref<288xf32, #tpu.memory_space<smem>>
    %860 = vector.broadcast %859 : f32 to vector<16x16xf32>
    %861 = arith.mulf %860, %830 : vector<16x16xf32>
    %862 = arith.addf %828, %861 : vector<16x16xf32>
    %c1_93 = arith.constant 1 : index
    %c2_94 = arith.constant 2 : index
    %c0_95 = arith.constant 0 : index
    %863 = vector.load %arg5[%c1_93, %c2_94, %c0_95] : memref<4x18x18xf32, #tpu.memory_space<vmem>>, vector<1x16x16xf32>
    %864 = vector.shape_cast %863 : vector<1x16x16xf32> to vector<16x16xf32>
    %c15 = arith.constant 15 : index
    %865 = memref.load %arg2[%c15] : memref<288xf32, #tpu.memory_space<smem>>
    %866 = vector.broadcast %865 : f32 to vector<16x16xf32>
    %867 = arith.mulf %866, %864 : vector<16x16xf32>
    %868 = arith.addf %834, %867 : vector<16x16xf32>
    %c51 = arith.constant 51 : index
    %869 = memref.load %arg2[%c51] : memref<288xf32, #tpu.memory_space<smem>>
    %870 = vector.broadcast %869 : f32 to vector<16x16xf32>
    %871 = arith.mulf %870, %864 : vector<16x16xf32>
    %872 = arith.addf %838, %871 : vector<16x16xf32>
    %c87 = arith.constant 87 : index
    %873 = memref.load %arg2[%c87] : memref<288xf32, #tpu.memory_space<smem>>
    %874 = vector.broadcast %873 : f32 to vector<16x16xf32>
    %875 = arith.mulf %874, %864 : vector<16x16xf32>
    %876 = arith.addf %842, %875 : vector<16x16xf32>
    %c123 = arith.constant 123 : index
    %877 = memref.load %arg2[%c123] : memref<288xf32, #tpu.memory_space<smem>>
    %878 = vector.broadcast %877 : f32 to vector<16x16xf32>
    %879 = arith.mulf %878, %864 : vector<16x16xf32>
    %880 = arith.addf %846, %879 : vector<16x16xf32>
    %c159 = arith.constant 159 : index
    %881 = memref.load %arg2[%c159] : memref<288xf32, #tpu.memory_space<smem>>
    %882 = vector.broadcast %881 : f32 to vector<16x16xf32>
    %883 = arith.mulf %882, %864 : vector<16x16xf32>
    %884 = arith.addf %850, %883 : vector<16x16xf32>
    %c195 = arith.constant 195 : index
    %885 = memref.load %arg2[%c195] : memref<288xf32, #tpu.memory_space<smem>>
    %886 = vector.broadcast %885 : f32 to vector<16x16xf32>
    %887 = arith.mulf %886, %864 : vector<16x16xf32>
    %888 = arith.addf %854, %887 : vector<16x16xf32>
    %c231 = arith.constant 231 : index
    %889 = memref.load %arg2[%c231] : memref<288xf32, #tpu.memory_space<smem>>
    %890 = vector.broadcast %889 : f32 to vector<16x16xf32>
    %891 = arith.mulf %890, %864 : vector<16x16xf32>
    %892 = arith.addf %858, %891 : vector<16x16xf32>
    %c267 = arith.constant 267 : index
    %893 = memref.load %arg2[%c267] : memref<288xf32, #tpu.memory_space<smem>>
    %894 = vector.broadcast %893 : f32 to vector<16x16xf32>
    %895 = arith.mulf %894, %864 : vector<16x16xf32>
    %896 = arith.addf %862, %895 : vector<16x16xf32>
    %c2_96 = arith.constant 2 : index
    %c2_97 = arith.constant 2 : index
    %c0_98 = arith.constant 0 : index
    %897 = vector.load %arg5[%c2_96, %c2_97, %c0_98] : memref<4x18x18xf32, #tpu.memory_space<vmem>>, vector<1x16x16xf32>
    %898 = vector.shape_cast %897 : vector<1x16x16xf32> to vector<16x16xf32>
    %c24 = arith.constant 24 : index
    %899 = memref.load %arg2[%c24] : memref<288xf32, #tpu.memory_space<smem>>
    %900 = vector.broadcast %899 : f32 to vector<16x16xf32>
    %901 = arith.mulf %900, %898 : vector<16x16xf32>
    %902 = arith.addf %868, %901 : vector<16x16xf32>
    %c60 = arith.constant 60 : index
    %903 = memref.load %arg2[%c60] : memref<288xf32, #tpu.memory_space<smem>>
    %904 = vector.broadcast %903 : f32 to vector<16x16xf32>
    %905 = arith.mulf %904, %898 : vector<16x16xf32>
    %906 = arith.addf %872, %905 : vector<16x16xf32>
    %c96 = arith.constant 96 : index
    %907 = memref.load %arg2[%c96] : memref<288xf32, #tpu.memory_space<smem>>
    %908 = vector.broadcast %907 : f32 to vector<16x16xf32>
    %909 = arith.mulf %908, %898 : vector<16x16xf32>
    %910 = arith.addf %876, %909 : vector<16x16xf32>
    %c132 = arith.constant 132 : index
    %911 = memref.load %arg2[%c132] : memref<288xf32, #tpu.memory_space<smem>>
    %912 = vector.broadcast %911 : f32 to vector<16x16xf32>
    %913 = arith.mulf %912, %898 : vector<16x16xf32>
    %914 = arith.addf %880, %913 : vector<16x16xf32>
    %c168 = arith.constant 168 : index
    %915 = memref.load %arg2[%c168] : memref<288xf32, #tpu.memory_space<smem>>
    %916 = vector.broadcast %915 : f32 to vector<16x16xf32>
    %917 = arith.mulf %916, %898 : vector<16x16xf32>
    %918 = arith.addf %884, %917 : vector<16x16xf32>
    %c204 = arith.constant 204 : index
    %919 = memref.load %arg2[%c204] : memref<288xf32, #tpu.memory_space<smem>>
    %920 = vector.broadcast %919 : f32 to vector<16x16xf32>
    %921 = arith.mulf %920, %898 : vector<16x16xf32>
    %922 = arith.addf %888, %921 : vector<16x16xf32>
    %c240 = arith.constant 240 : index
    %923 = memref.load %arg2[%c240] : memref<288xf32, #tpu.memory_space<smem>>
    %924 = vector.broadcast %923 : f32 to vector<16x16xf32>
    %925 = arith.mulf %924, %898 : vector<16x16xf32>
    %926 = arith.addf %892, %925 : vector<16x16xf32>
    %c276 = arith.constant 276 : index
    %927 = memref.load %arg2[%c276] : memref<288xf32, #tpu.memory_space<smem>>
    %928 = vector.broadcast %927 : f32 to vector<16x16xf32>
    %929 = arith.mulf %928, %898 : vector<16x16xf32>
    %930 = arith.addf %896, %929 : vector<16x16xf32>
    %c3_99 = arith.constant 3 : index
    %c2_100 = arith.constant 2 : index
    %c0_101 = arith.constant 0 : index
    %931 = vector.load %arg5[%c3_99, %c2_100, %c0_101] : memref<4x18x18xf32, #tpu.memory_space<vmem>>, vector<1x16x16xf32>
    %932 = vector.shape_cast %931 : vector<1x16x16xf32> to vector<16x16xf32>
    %c33 = arith.constant 33 : index
    %933 = memref.load %arg2[%c33] : memref<288xf32, #tpu.memory_space<smem>>
    %934 = vector.broadcast %933 : f32 to vector<16x16xf32>
    %935 = arith.mulf %934, %932 : vector<16x16xf32>
    %936 = arith.addf %902, %935 : vector<16x16xf32>
    %c69 = arith.constant 69 : index
    %937 = memref.load %arg2[%c69] : memref<288xf32, #tpu.memory_space<smem>>
    %938 = vector.broadcast %937 : f32 to vector<16x16xf32>
    %939 = arith.mulf %938, %932 : vector<16x16xf32>
    %940 = arith.addf %906, %939 : vector<16x16xf32>
    %c105 = arith.constant 105 : index
    %941 = memref.load %arg2[%c105] : memref<288xf32, #tpu.memory_space<smem>>
    %942 = vector.broadcast %941 : f32 to vector<16x16xf32>
    %943 = arith.mulf %942, %932 : vector<16x16xf32>
    %944 = arith.addf %910, %943 : vector<16x16xf32>
    %c141 = arith.constant 141 : index
    %945 = memref.load %arg2[%c141] : memref<288xf32, #tpu.memory_space<smem>>
    %946 = vector.broadcast %945 : f32 to vector<16x16xf32>
    %947 = arith.mulf %946, %932 : vector<16x16xf32>
    %948 = arith.addf %914, %947 : vector<16x16xf32>
    %c177 = arith.constant 177 : index
    %949 = memref.load %arg2[%c177] : memref<288xf32, #tpu.memory_space<smem>>
    %950 = vector.broadcast %949 : f32 to vector<16x16xf32>
    %951 = arith.mulf %950, %932 : vector<16x16xf32>
    %952 = arith.addf %918, %951 : vector<16x16xf32>
    %c213 = arith.constant 213 : index
    %953 = memref.load %arg2[%c213] : memref<288xf32, #tpu.memory_space<smem>>
    %954 = vector.broadcast %953 : f32 to vector<16x16xf32>
    %955 = arith.mulf %954, %932 : vector<16x16xf32>
    %956 = arith.addf %922, %955 : vector<16x16xf32>
    %c249 = arith.constant 249 : index
    %957 = memref.load %arg2[%c249] : memref<288xf32, #tpu.memory_space<smem>>
    %958 = vector.broadcast %957 : f32 to vector<16x16xf32>
    %959 = arith.mulf %958, %932 : vector<16x16xf32>
    %960 = arith.addf %926, %959 : vector<16x16xf32>
    %c285 = arith.constant 285 : index
    %961 = memref.load %arg2[%c285] : memref<288xf32, #tpu.memory_space<smem>>
    %962 = vector.broadcast %961 : f32 to vector<16x16xf32>
    %963 = arith.mulf %962, %932 : vector<16x16xf32>
    %964 = arith.addf %930, %963 : vector<16x16xf32>
    %c0_102 = arith.constant 0 : index
    %c2_103 = arith.constant 2 : index
    %c1_104 = arith.constant 1 : index
    %965 = vector.load %arg5[%c0_102, %c2_103, %c1_104] : memref<4x18x18xf32, #tpu.memory_space<vmem>>, vector<1x16x16xf32>
    %966 = vector.shape_cast %965 : vector<1x16x16xf32> to vector<16x16xf32>
    %c7 = arith.constant 7 : index
    %967 = memref.load %arg2[%c7] : memref<288xf32, #tpu.memory_space<smem>>
    %968 = vector.broadcast %967 : f32 to vector<16x16xf32>
    %969 = arith.mulf %968, %966 : vector<16x16xf32>
    %970 = arith.addf %936, %969 : vector<16x16xf32>
    %c43 = arith.constant 43 : index
    %971 = memref.load %arg2[%c43] : memref<288xf32, #tpu.memory_space<smem>>
    %972 = vector.broadcast %971 : f32 to vector<16x16xf32>
    %973 = arith.mulf %972, %966 : vector<16x16xf32>
    %974 = arith.addf %940, %973 : vector<16x16xf32>
    %c79 = arith.constant 79 : index
    %975 = memref.load %arg2[%c79] : memref<288xf32, #tpu.memory_space<smem>>
    %976 = vector.broadcast %975 : f32 to vector<16x16xf32>
    %977 = arith.mulf %976, %966 : vector<16x16xf32>
    %978 = arith.addf %944, %977 : vector<16x16xf32>
    %c115 = arith.constant 115 : index
    %979 = memref.load %arg2[%c115] : memref<288xf32, #tpu.memory_space<smem>>
    %980 = vector.broadcast %979 : f32 to vector<16x16xf32>
    %981 = arith.mulf %980, %966 : vector<16x16xf32>
    %982 = arith.addf %948, %981 : vector<16x16xf32>
    %c151 = arith.constant 151 : index
    %983 = memref.load %arg2[%c151] : memref<288xf32, #tpu.memory_space<smem>>
    %984 = vector.broadcast %983 : f32 to vector<16x16xf32>
    %985 = arith.mulf %984, %966 : vector<16x16xf32>
    %986 = arith.addf %952, %985 : vector<16x16xf32>
    %c187 = arith.constant 187 : index
    %987 = memref.load %arg2[%c187] : memref<288xf32, #tpu.memory_space<smem>>
    %988 = vector.broadcast %987 : f32 to vector<16x16xf32>
    %989 = arith.mulf %988, %966 : vector<16x16xf32>
    %990 = arith.addf %956, %989 : vector<16x16xf32>
    %c223 = arith.constant 223 : index
    %991 = memref.load %arg2[%c223] : memref<288xf32, #tpu.memory_space<smem>>
    %992 = vector.broadcast %991 : f32 to vector<16x16xf32>
    %993 = arith.mulf %992, %966 : vector<16x16xf32>
    %994 = arith.addf %960, %993 : vector<16x16xf32>
    %c259 = arith.constant 259 : index
    %995 = memref.load %arg2[%c259] : memref<288xf32, #tpu.memory_space<smem>>
    %996 = vector.broadcast %995 : f32 to vector<16x16xf32>
    %997 = arith.mulf %996, %966 : vector<16x16xf32>
    %998 = arith.addf %964, %997 : vector<16x16xf32>
    %c1_105 = arith.constant 1 : index
    %c2_106 = arith.constant 2 : index
    %c1_107 = arith.constant 1 : index
    %999 = vector.load %arg5[%c1_105, %c2_106, %c1_107] : memref<4x18x18xf32, #tpu.memory_space<vmem>>, vector<1x16x16xf32>
    %1000 = vector.shape_cast %999 : vector<1x16x16xf32> to vector<16x16xf32>
    %c16 = arith.constant 16 : index
    %1001 = memref.load %arg2[%c16] : memref<288xf32, #tpu.memory_space<smem>>
    %1002 = vector.broadcast %1001 : f32 to vector<16x16xf32>
    %1003 = arith.mulf %1002, %1000 : vector<16x16xf32>
    %1004 = arith.addf %970, %1003 : vector<16x16xf32>
    %c52 = arith.constant 52 : index
    %1005 = memref.load %arg2[%c52] : memref<288xf32, #tpu.memory_space<smem>>
    %1006 = vector.broadcast %1005 : f32 to vector<16x16xf32>
    %1007 = arith.mulf %1006, %1000 : vector<16x16xf32>
    %1008 = arith.addf %974, %1007 : vector<16x16xf32>
    %c88 = arith.constant 88 : index
    %1009 = memref.load %arg2[%c88] : memref<288xf32, #tpu.memory_space<smem>>
    %1010 = vector.broadcast %1009 : f32 to vector<16x16xf32>
    %1011 = arith.mulf %1010, %1000 : vector<16x16xf32>
    %1012 = arith.addf %978, %1011 : vector<16x16xf32>
    %c124 = arith.constant 124 : index
    %1013 = memref.load %arg2[%c124] : memref<288xf32, #tpu.memory_space<smem>>
    %1014 = vector.broadcast %1013 : f32 to vector<16x16xf32>
    %1015 = arith.mulf %1014, %1000 : vector<16x16xf32>
    %1016 = arith.addf %982, %1015 : vector<16x16xf32>
    %c160 = arith.constant 160 : index
    %1017 = memref.load %arg2[%c160] : memref<288xf32, #tpu.memory_space<smem>>
    %1018 = vector.broadcast %1017 : f32 to vector<16x16xf32>
    %1019 = arith.mulf %1018, %1000 : vector<16x16xf32>
    %1020 = arith.addf %986, %1019 : vector<16x16xf32>
    %c196 = arith.constant 196 : index
    %1021 = memref.load %arg2[%c196] : memref<288xf32, #tpu.memory_space<smem>>
    %1022 = vector.broadcast %1021 : f32 to vector<16x16xf32>
    %1023 = arith.mulf %1022, %1000 : vector<16x16xf32>
    %1024 = arith.addf %990, %1023 : vector<16x16xf32>
    %c232 = arith.constant 232 : index
    %1025 = memref.load %arg2[%c232] : memref<288xf32, #tpu.memory_space<smem>>
    %1026 = vector.broadcast %1025 : f32 to vector<16x16xf32>
    %1027 = arith.mulf %1026, %1000 : vector<16x16xf32>
    %1028 = arith.addf %994, %1027 : vector<16x16xf32>
    %c268 = arith.constant 268 : index
    %1029 = memref.load %arg2[%c268] : memref<288xf32, #tpu.memory_space<smem>>
    %1030 = vector.broadcast %1029 : f32 to vector<16x16xf32>
    %1031 = arith.mulf %1030, %1000 : vector<16x16xf32>
    %1032 = arith.addf %998, %1031 : vector<16x16xf32>
    %c2_108 = arith.constant 2 : index
    %c2_109 = arith.constant 2 : index
    %c1_110 = arith.constant 1 : index
    %1033 = vector.load %arg5[%c2_108, %c2_109, %c1_110] : memref<4x18x18xf32, #tpu.memory_space<vmem>>, vector<1x16x16xf32>
    %1034 = vector.shape_cast %1033 : vector<1x16x16xf32> to vector<16x16xf32>
    %c25 = arith.constant 25 : index
    %1035 = memref.load %arg2[%c25] : memref<288xf32, #tpu.memory_space<smem>>
    %1036 = vector.broadcast %1035 : f32 to vector<16x16xf32>
    %1037 = arith.mulf %1036, %1034 : vector<16x16xf32>
    %1038 = arith.addf %1004, %1037 : vector<16x16xf32>
    %c61 = arith.constant 61 : index
    %1039 = memref.load %arg2[%c61] : memref<288xf32, #tpu.memory_space<smem>>
    %1040 = vector.broadcast %1039 : f32 to vector<16x16xf32>
    %1041 = arith.mulf %1040, %1034 : vector<16x16xf32>
    %1042 = arith.addf %1008, %1041 : vector<16x16xf32>
    %c97 = arith.constant 97 : index
    %1043 = memref.load %arg2[%c97] : memref<288xf32, #tpu.memory_space<smem>>
    %1044 = vector.broadcast %1043 : f32 to vector<16x16xf32>
    %1045 = arith.mulf %1044, %1034 : vector<16x16xf32>
    %1046 = arith.addf %1012, %1045 : vector<16x16xf32>
    %c133 = arith.constant 133 : index
    %1047 = memref.load %arg2[%c133] : memref<288xf32, #tpu.memory_space<smem>>
    %1048 = vector.broadcast %1047 : f32 to vector<16x16xf32>
    %1049 = arith.mulf %1048, %1034 : vector<16x16xf32>
    %1050 = arith.addf %1016, %1049 : vector<16x16xf32>
    %c169 = arith.constant 169 : index
    %1051 = memref.load %arg2[%c169] : memref<288xf32, #tpu.memory_space<smem>>
    %1052 = vector.broadcast %1051 : f32 to vector<16x16xf32>
    %1053 = arith.mulf %1052, %1034 : vector<16x16xf32>
    %1054 = arith.addf %1020, %1053 : vector<16x16xf32>
    %c205 = arith.constant 205 : index
    %1055 = memref.load %arg2[%c205] : memref<288xf32, #tpu.memory_space<smem>>
    %1056 = vector.broadcast %1055 : f32 to vector<16x16xf32>
    %1057 = arith.mulf %1056, %1034 : vector<16x16xf32>
    %1058 = arith.addf %1024, %1057 : vector<16x16xf32>
    %c241 = arith.constant 241 : index
    %1059 = memref.load %arg2[%c241] : memref<288xf32, #tpu.memory_space<smem>>
    %1060 = vector.broadcast %1059 : f32 to vector<16x16xf32>
    %1061 = arith.mulf %1060, %1034 : vector<16x16xf32>
    %1062 = arith.addf %1028, %1061 : vector<16x16xf32>
    %c277 = arith.constant 277 : index
    %1063 = memref.load %arg2[%c277] : memref<288xf32, #tpu.memory_space<smem>>
    %1064 = vector.broadcast %1063 : f32 to vector<16x16xf32>
    %1065 = arith.mulf %1064, %1034 : vector<16x16xf32>
    %1066 = arith.addf %1032, %1065 : vector<16x16xf32>
    %c3_111 = arith.constant 3 : index
    %c2_112 = arith.constant 2 : index
    %c1_113 = arith.constant 1 : index
    %1067 = vector.load %arg5[%c3_111, %c2_112, %c1_113] : memref<4x18x18xf32, #tpu.memory_space<vmem>>, vector<1x16x16xf32>
    %1068 = vector.shape_cast %1067 : vector<1x16x16xf32> to vector<16x16xf32>
    %c34 = arith.constant 34 : index
    %1069 = memref.load %arg2[%c34] : memref<288xf32, #tpu.memory_space<smem>>
    %1070 = vector.broadcast %1069 : f32 to vector<16x16xf32>
    %1071 = arith.mulf %1070, %1068 : vector<16x16xf32>
    %1072 = arith.addf %1038, %1071 : vector<16x16xf32>
    %c70 = arith.constant 70 : index
    %1073 = memref.load %arg2[%c70] : memref<288xf32, #tpu.memory_space<smem>>
    %1074 = vector.broadcast %1073 : f32 to vector<16x16xf32>
    %1075 = arith.mulf %1074, %1068 : vector<16x16xf32>
    %1076 = arith.addf %1042, %1075 : vector<16x16xf32>
    %c106 = arith.constant 106 : index
    %1077 = memref.load %arg2[%c106] : memref<288xf32, #tpu.memory_space<smem>>
    %1078 = vector.broadcast %1077 : f32 to vector<16x16xf32>
    %1079 = arith.mulf %1078, %1068 : vector<16x16xf32>
    %1080 = arith.addf %1046, %1079 : vector<16x16xf32>
    %c142 = arith.constant 142 : index
    %1081 = memref.load %arg2[%c142] : memref<288xf32, #tpu.memory_space<smem>>
    %1082 = vector.broadcast %1081 : f32 to vector<16x16xf32>
    %1083 = arith.mulf %1082, %1068 : vector<16x16xf32>
    %1084 = arith.addf %1050, %1083 : vector<16x16xf32>
    %c178 = arith.constant 178 : index
    %1085 = memref.load %arg2[%c178] : memref<288xf32, #tpu.memory_space<smem>>
    %1086 = vector.broadcast %1085 : f32 to vector<16x16xf32>
    %1087 = arith.mulf %1086, %1068 : vector<16x16xf32>
    %1088 = arith.addf %1054, %1087 : vector<16x16xf32>
    %c214 = arith.constant 214 : index
    %1089 = memref.load %arg2[%c214] : memref<288xf32, #tpu.memory_space<smem>>
    %1090 = vector.broadcast %1089 : f32 to vector<16x16xf32>
    %1091 = arith.mulf %1090, %1068 : vector<16x16xf32>
    %1092 = arith.addf %1058, %1091 : vector<16x16xf32>
    %c250 = arith.constant 250 : index
    %1093 = memref.load %arg2[%c250] : memref<288xf32, #tpu.memory_space<smem>>
    %1094 = vector.broadcast %1093 : f32 to vector<16x16xf32>
    %1095 = arith.mulf %1094, %1068 : vector<16x16xf32>
    %1096 = arith.addf %1062, %1095 : vector<16x16xf32>
    %c286 = arith.constant 286 : index
    %1097 = memref.load %arg2[%c286] : memref<288xf32, #tpu.memory_space<smem>>
    %1098 = vector.broadcast %1097 : f32 to vector<16x16xf32>
    %1099 = arith.mulf %1098, %1068 : vector<16x16xf32>
    %1100 = arith.addf %1066, %1099 : vector<16x16xf32>
    %c0_114 = arith.constant 0 : index
    %c2_115 = arith.constant 2 : index
    %c2_116 = arith.constant 2 : index
    %1101 = vector.load %arg5[%c0_114, %c2_115, %c2_116] : memref<4x18x18xf32, #tpu.memory_space<vmem>>, vector<1x16x16xf32>
    %1102 = vector.shape_cast %1101 : vector<1x16x16xf32> to vector<16x16xf32>
    %c8 = arith.constant 8 : index
    %1103 = memref.load %arg2[%c8] : memref<288xf32, #tpu.memory_space<smem>>
    %1104 = vector.broadcast %1103 : f32 to vector<16x16xf32>
    %1105 = arith.mulf %1104, %1102 : vector<16x16xf32>
    %1106 = arith.addf %1072, %1105 : vector<16x16xf32>
    %c44 = arith.constant 44 : index
    %1107 = memref.load %arg2[%c44] : memref<288xf32, #tpu.memory_space<smem>>
    %1108 = vector.broadcast %1107 : f32 to vector<16x16xf32>
    %1109 = arith.mulf %1108, %1102 : vector<16x16xf32>
    %1110 = arith.addf %1076, %1109 : vector<16x16xf32>
    %c80 = arith.constant 80 : index
    %1111 = memref.load %arg2[%c80] : memref<288xf32, #tpu.memory_space<smem>>
    %1112 = vector.broadcast %1111 : f32 to vector<16x16xf32>
    %1113 = arith.mulf %1112, %1102 : vector<16x16xf32>
    %1114 = arith.addf %1080, %1113 : vector<16x16xf32>
    %c116 = arith.constant 116 : index
    %1115 = memref.load %arg2[%c116] : memref<288xf32, #tpu.memory_space<smem>>
    %1116 = vector.broadcast %1115 : f32 to vector<16x16xf32>
    %1117 = arith.mulf %1116, %1102 : vector<16x16xf32>
    %1118 = arith.addf %1084, %1117 : vector<16x16xf32>
    %c152 = arith.constant 152 : index
    %1119 = memref.load %arg2[%c152] : memref<288xf32, #tpu.memory_space<smem>>
    %1120 = vector.broadcast %1119 : f32 to vector<16x16xf32>
    %1121 = arith.mulf %1120, %1102 : vector<16x16xf32>
    %1122 = arith.addf %1088, %1121 : vector<16x16xf32>
    %c188 = arith.constant 188 : index
    %1123 = memref.load %arg2[%c188] : memref<288xf32, #tpu.memory_space<smem>>
    %1124 = vector.broadcast %1123 : f32 to vector<16x16xf32>
    %1125 = arith.mulf %1124, %1102 : vector<16x16xf32>
    %1126 = arith.addf %1092, %1125 : vector<16x16xf32>
    %c224 = arith.constant 224 : index
    %1127 = memref.load %arg2[%c224] : memref<288xf32, #tpu.memory_space<smem>>
    %1128 = vector.broadcast %1127 : f32 to vector<16x16xf32>
    %1129 = arith.mulf %1128, %1102 : vector<16x16xf32>
    %1130 = arith.addf %1096, %1129 : vector<16x16xf32>
    %c260 = arith.constant 260 : index
    %1131 = memref.load %arg2[%c260] : memref<288xf32, #tpu.memory_space<smem>>
    %1132 = vector.broadcast %1131 : f32 to vector<16x16xf32>
    %1133 = arith.mulf %1132, %1102 : vector<16x16xf32>
    %1134 = arith.addf %1100, %1133 : vector<16x16xf32>
    %c1_117 = arith.constant 1 : index
    %c2_118 = arith.constant 2 : index
    %c2_119 = arith.constant 2 : index
    %1135 = vector.load %arg5[%c1_117, %c2_118, %c2_119] : memref<4x18x18xf32, #tpu.memory_space<vmem>>, vector<1x16x16xf32>
    %1136 = vector.shape_cast %1135 : vector<1x16x16xf32> to vector<16x16xf32>
    %c17 = arith.constant 17 : index
    %1137 = memref.load %arg2[%c17] : memref<288xf32, #tpu.memory_space<smem>>
    %1138 = vector.broadcast %1137 : f32 to vector<16x16xf32>
    %1139 = arith.mulf %1138, %1136 : vector<16x16xf32>
    %1140 = arith.addf %1106, %1139 : vector<16x16xf32>
    %c53 = arith.constant 53 : index
    %1141 = memref.load %arg2[%c53] : memref<288xf32, #tpu.memory_space<smem>>
    %1142 = vector.broadcast %1141 : f32 to vector<16x16xf32>
    %1143 = arith.mulf %1142, %1136 : vector<16x16xf32>
    %1144 = arith.addf %1110, %1143 : vector<16x16xf32>
    %c89 = arith.constant 89 : index
    %1145 = memref.load %arg2[%c89] : memref<288xf32, #tpu.memory_space<smem>>
    %1146 = vector.broadcast %1145 : f32 to vector<16x16xf32>
    %1147 = arith.mulf %1146, %1136 : vector<16x16xf32>
    %1148 = arith.addf %1114, %1147 : vector<16x16xf32>
    %c125 = arith.constant 125 : index
    %1149 = memref.load %arg2[%c125] : memref<288xf32, #tpu.memory_space<smem>>
    %1150 = vector.broadcast %1149 : f32 to vector<16x16xf32>
    %1151 = arith.mulf %1150, %1136 : vector<16x16xf32>
    %1152 = arith.addf %1118, %1151 : vector<16x16xf32>
    %c161 = arith.constant 161 : index
    %1153 = memref.load %arg2[%c161] : memref<288xf32, #tpu.memory_space<smem>>
    %1154 = vector.broadcast %1153 : f32 to vector<16x16xf32>
    %1155 = arith.mulf %1154, %1136 : vector<16x16xf32>
    %1156 = arith.addf %1122, %1155 : vector<16x16xf32>
    %c197 = arith.constant 197 : index
    %1157 = memref.load %arg2[%c197] : memref<288xf32, #tpu.memory_space<smem>>
    %1158 = vector.broadcast %1157 : f32 to vector<16x16xf32>
    %1159 = arith.mulf %1158, %1136 : vector<16x16xf32>
    %1160 = arith.addf %1126, %1159 : vector<16x16xf32>
    %c233 = arith.constant 233 : index
    %1161 = memref.load %arg2[%c233] : memref<288xf32, #tpu.memory_space<smem>>
    %1162 = vector.broadcast %1161 : f32 to vector<16x16xf32>
    %1163 = arith.mulf %1162, %1136 : vector<16x16xf32>
    %1164 = arith.addf %1130, %1163 : vector<16x16xf32>
    %c269 = arith.constant 269 : index
    %1165 = memref.load %arg2[%c269] : memref<288xf32, #tpu.memory_space<smem>>
    %1166 = vector.broadcast %1165 : f32 to vector<16x16xf32>
    %1167 = arith.mulf %1166, %1136 : vector<16x16xf32>
    %1168 = arith.addf %1134, %1167 : vector<16x16xf32>
    %c2_120 = arith.constant 2 : index
    %c2_121 = arith.constant 2 : index
    %c2_122 = arith.constant 2 : index
    %1169 = vector.load %arg5[%c2_120, %c2_121, %c2_122] : memref<4x18x18xf32, #tpu.memory_space<vmem>>, vector<1x16x16xf32>
    %1170 = vector.shape_cast %1169 : vector<1x16x16xf32> to vector<16x16xf32>
    %c26 = arith.constant 26 : index
    %1171 = memref.load %arg2[%c26] : memref<288xf32, #tpu.memory_space<smem>>
    %1172 = vector.broadcast %1171 : f32 to vector<16x16xf32>
    %1173 = arith.mulf %1172, %1170 : vector<16x16xf32>
    %1174 = arith.addf %1140, %1173 : vector<16x16xf32>
    %c62 = arith.constant 62 : index
    %1175 = memref.load %arg2[%c62] : memref<288xf32, #tpu.memory_space<smem>>
    %1176 = vector.broadcast %1175 : f32 to vector<16x16xf32>
    %1177 = arith.mulf %1176, %1170 : vector<16x16xf32>
    %1178 = arith.addf %1144, %1177 : vector<16x16xf32>
    %c98 = arith.constant 98 : index
    %1179 = memref.load %arg2[%c98] : memref<288xf32, #tpu.memory_space<smem>>
    %1180 = vector.broadcast %1179 : f32 to vector<16x16xf32>
    %1181 = arith.mulf %1180, %1170 : vector<16x16xf32>
    %1182 = arith.addf %1148, %1181 : vector<16x16xf32>
    %c134 = arith.constant 134 : index
    %1183 = memref.load %arg2[%c134] : memref<288xf32, #tpu.memory_space<smem>>
    %1184 = vector.broadcast %1183 : f32 to vector<16x16xf32>
    %1185 = arith.mulf %1184, %1170 : vector<16x16xf32>
    %1186 = arith.addf %1152, %1185 : vector<16x16xf32>
    %c170 = arith.constant 170 : index
    %1187 = memref.load %arg2[%c170] : memref<288xf32, #tpu.memory_space<smem>>
    %1188 = vector.broadcast %1187 : f32 to vector<16x16xf32>
    %1189 = arith.mulf %1188, %1170 : vector<16x16xf32>
    %1190 = arith.addf %1156, %1189 : vector<16x16xf32>
    %c206 = arith.constant 206 : index
    %1191 = memref.load %arg2[%c206] : memref<288xf32, #tpu.memory_space<smem>>
    %1192 = vector.broadcast %1191 : f32 to vector<16x16xf32>
    %1193 = arith.mulf %1192, %1170 : vector<16x16xf32>
    %1194 = arith.addf %1160, %1193 : vector<16x16xf32>
    %c242 = arith.constant 242 : index
    %1195 = memref.load %arg2[%c242] : memref<288xf32, #tpu.memory_space<smem>>
    %1196 = vector.broadcast %1195 : f32 to vector<16x16xf32>
    %1197 = arith.mulf %1196, %1170 : vector<16x16xf32>
    %1198 = arith.addf %1164, %1197 : vector<16x16xf32>
    %c278 = arith.constant 278 : index
    %1199 = memref.load %arg2[%c278] : memref<288xf32, #tpu.memory_space<smem>>
    %1200 = vector.broadcast %1199 : f32 to vector<16x16xf32>
    %1201 = arith.mulf %1200, %1170 : vector<16x16xf32>
    %1202 = arith.addf %1168, %1201 : vector<16x16xf32>
    %c3_123 = arith.constant 3 : index
    %c2_124 = arith.constant 2 : index
    %c2_125 = arith.constant 2 : index
    %1203 = vector.load %arg5[%c3_123, %c2_124, %c2_125] : memref<4x18x18xf32, #tpu.memory_space<vmem>>, vector<1x16x16xf32>
    %1204 = vector.shape_cast %1203 : vector<1x16x16xf32> to vector<16x16xf32>
    %c35 = arith.constant 35 : index
    %1205 = memref.load %arg2[%c35] : memref<288xf32, #tpu.memory_space<smem>>
    %1206 = vector.broadcast %1205 : f32 to vector<16x16xf32>
    %1207 = arith.mulf %1206, %1204 : vector<16x16xf32>
    %1208 = arith.addf %1174, %1207 : vector<16x16xf32>
    %c71 = arith.constant 71 : index
    %1209 = memref.load %arg2[%c71] : memref<288xf32, #tpu.memory_space<smem>>
    %1210 = vector.broadcast %1209 : f32 to vector<16x16xf32>
    %1211 = arith.mulf %1210, %1204 : vector<16x16xf32>
    %1212 = arith.addf %1178, %1211 : vector<16x16xf32>
    %c107 = arith.constant 107 : index
    %1213 = memref.load %arg2[%c107] : memref<288xf32, #tpu.memory_space<smem>>
    %1214 = vector.broadcast %1213 : f32 to vector<16x16xf32>
    %1215 = arith.mulf %1214, %1204 : vector<16x16xf32>
    %1216 = arith.addf %1182, %1215 : vector<16x16xf32>
    %c143 = arith.constant 143 : index
    %1217 = memref.load %arg2[%c143] : memref<288xf32, #tpu.memory_space<smem>>
    %1218 = vector.broadcast %1217 : f32 to vector<16x16xf32>
    %1219 = arith.mulf %1218, %1204 : vector<16x16xf32>
    %1220 = arith.addf %1186, %1219 : vector<16x16xf32>
    %c179 = arith.constant 179 : index
    %1221 = memref.load %arg2[%c179] : memref<288xf32, #tpu.memory_space<smem>>
    %1222 = vector.broadcast %1221 : f32 to vector<16x16xf32>
    %1223 = arith.mulf %1222, %1204 : vector<16x16xf32>
    %1224 = arith.addf %1190, %1223 : vector<16x16xf32>
    %c215 = arith.constant 215 : index
    %1225 = memref.load %arg2[%c215] : memref<288xf32, #tpu.memory_space<smem>>
    %1226 = vector.broadcast %1225 : f32 to vector<16x16xf32>
    %1227 = arith.mulf %1226, %1204 : vector<16x16xf32>
    %1228 = arith.addf %1194, %1227 : vector<16x16xf32>
    %c251 = arith.constant 251 : index
    %1229 = memref.load %arg2[%c251] : memref<288xf32, #tpu.memory_space<smem>>
    %1230 = vector.broadcast %1229 : f32 to vector<16x16xf32>
    %1231 = arith.mulf %1230, %1204 : vector<16x16xf32>
    %1232 = arith.addf %1198, %1231 : vector<16x16xf32>
    %c287 = arith.constant 287 : index
    %1233 = memref.load %arg2[%c287] : memref<288xf32, #tpu.memory_space<smem>>
    %1234 = vector.broadcast %1233 : f32 to vector<16x16xf32>
    %1235 = arith.mulf %1234, %1204 : vector<16x16xf32>
    %1236 = arith.addf %1202, %1235 : vector<16x16xf32>
    %c0_126 = arith.constant 0 : index
    %1237 = memref.load %arg3[%c0_126] : memref<8xf32, #tpu.memory_space<smem>>
    %1238 = vector.broadcast %1237 : f32 to vector<16x16xf32>
    %1239 = arith.addf %1208, %1238 : vector<16x16xf32>
    %cst_127 = arith.constant 0.000000e+00 : f32
    %1240 = vector.broadcast %cst_127 : f32 to vector<16x16xf32>
    %1241 = arith.maximumf %1239, %1240 : vector<16x16xf32>
    %c0_128 = arith.constant 0 : index
    %c0_129 = arith.constant 0 : index
    %c0_130 = arith.constant 0 : index
    %c0_131 = arith.constant 0 : index
    %1242 = vector.load %arg4[%c0_128, %c0_129, %c0_130, %c0_131] : memref<1x8x16x16xf32, #tpu.memory_space<vmem>>, vector<1x1x16x16xf32>
    %1243 = vector.shape_cast %1242 : vector<1x1x16x16xf32> to vector<16x16xf32>
    %1244 = vector.shape_cast %1241 : vector<16x16xf32> to vector<1x1x16x16xf32>
    tpu.vector_store %arg4[%c0_128, %c0_129, %c0_130, %c0_131], %1244 {strides = array<i32>} : memref<1x8x16x16xf32, #tpu.memory_space<vmem>>, vector<1x1x16x16xf32>,
    %c1_132 = arith.constant 1 : index
    %1245 = memref.load %arg3[%c1_132] : memref<8xf32, #tpu.memory_space<smem>>
    %1246 = vector.broadcast %1245 : f32 to vector<16x16xf32>
    %1247 = arith.addf %1212, %1246 : vector<16x16xf32>
    %cst_133 = arith.constant 0.000000e+00 : f32
    %1248 = vector.broadcast %cst_133 : f32 to vector<16x16xf32>
    %1249 = arith.maximumf %1247, %1248 : vector<16x16xf32>
    %c0_134 = arith.constant 0 : index
    %c1_135 = arith.constant 1 : index
    %c0_136 = arith.constant 0 : index
    %c0_137 = arith.constant 0 : index
    %1250 = vector.load %arg4[%c0_134, %c1_135, %c0_136, %c0_137] : memref<1x8x16x16xf32, #tpu.memory_space<vmem>>, vector<1x1x16x16xf32>
    %1251 = vector.shape_cast %1250 : vector<1x1x16x16xf32> to vector<16x16xf32>
    %1252 = vector.shape_cast %1249 : vector<16x16xf32> to vector<1x1x16x16xf32>
    tpu.vector_store %arg4[%c0_134, %c1_135, %c0_136, %c0_137], %1252 {strides = array<i32>} : memref<1x8x16x16xf32, #tpu.memory_space<vmem>>, vector<1x1x16x16xf32>,
    %c2_138 = arith.constant 2 : index
    %1253 = memref.load %arg3[%c2_138] : memref<8xf32, #tpu.memory_space<smem>>
    %1254 = vector.broadcast %1253 : f32 to vector<16x16xf32>
    %1255 = arith.addf %1216, %1254 : vector<16x16xf32>
    %cst_139 = arith.constant 0.000000e+00 : f32
    %1256 = vector.broadcast %cst_139 : f32 to vector<16x16xf32>
    %1257 = arith.maximumf %1255, %1256 : vector<16x16xf32>
    %c0_140 = arith.constant 0 : index
    %c2_141 = arith.constant 2 : index
    %c0_142 = arith.constant 0 : index
    %c0_143 = arith.constant 0 : index
    %1258 = vector.load %arg4[%c0_140, %c2_141, %c0_142, %c0_143] : memref<1x8x16x16xf32, #tpu.memory_space<vmem>>, vector<1x1x16x16xf32>
    %1259 = vector.shape_cast %1258 : vector<1x1x16x16xf32> to vector<16x16xf32>
    %1260 = vector.shape_cast %1257 : vector<16x16xf32> to vector<1x1x16x16xf32>
    tpu.vector_store %arg4[%c0_140, %c2_141, %c0_142, %c0_143], %1260 {strides = array<i32>} : memref<1x8x16x16xf32, #tpu.memory_space<vmem>>, vector<1x1x16x16xf32>,
    %c3_144 = arith.constant 3 : index
    %1261 = memref.load %arg3[%c3_144] : memref<8xf32, #tpu.memory_space<smem>>
    %1262 = vector.broadcast %1261 : f32 to vector<16x16xf32>
    %1263 = arith.addf %1220, %1262 : vector<16x16xf32>
    %cst_145 = arith.constant 0.000000e+00 : f32
    %1264 = vector.broadcast %cst_145 : f32 to vector<16x16xf32>
    %1265 = arith.maximumf %1263, %1264 : vector<16x16xf32>
    %c0_146 = arith.constant 0 : index
    %c3_147 = arith.constant 3 : index
    %c0_148 = arith.constant 0 : index
    %c0_149 = arith.constant 0 : index
    %1266 = vector.load %arg4[%c0_146, %c3_147, %c0_148, %c0_149] : memref<1x8x16x16xf32, #tpu.memory_space<vmem>>, vector<1x1x16x16xf32>
    %1267 = vector.shape_cast %1266 : vector<1x1x16x16xf32> to vector<16x16xf32>
    %1268 = vector.shape_cast %1265 : vector<16x16xf32> to vector<1x1x16x16xf32>
    tpu.vector_store %arg4[%c0_146, %c3_147, %c0_148, %c0_149], %1268 {strides = array<i32>} : memref<1x8x16x16xf32, #tpu.memory_space<vmem>>, vector<1x1x16x16xf32>,
    %c4_150 = arith.constant 4 : index
    %1269 = memref.load %arg3[%c4_150] : memref<8xf32, #tpu.memory_space<smem>>
    %1270 = vector.broadcast %1269 : f32 to vector<16x16xf32>
    %1271 = arith.addf %1224, %1270 : vector<16x16xf32>
    %cst_151 = arith.constant 0.000000e+00 : f32
    %1272 = vector.broadcast %cst_151 : f32 to vector<16x16xf32>
    %1273 = arith.maximumf %1271, %1272 : vector<16x16xf32>
    %c0_152 = arith.constant 0 : index
    %c4_153 = arith.constant 4 : index
    %c0_154 = arith.constant 0 : index
    %c0_155 = arith.constant 0 : index
    %1274 = vector.load %arg4[%c0_152, %c4_153, %c0_154, %c0_155] : memref<1x8x16x16xf32, #tpu.memory_space<vmem>>, vector<1x1x16x16xf32>
    %1275 = vector.shape_cast %1274 : vector<1x1x16x16xf32> to vector<16x16xf32>
    %1276 = vector.shape_cast %1273 : vector<16x16xf32> to vector<1x1x16x16xf32>
    tpu.vector_store %arg4[%c0_152, %c4_153, %c0_154, %c0_155], %1276 {strides = array<i32>} : memref<1x8x16x16xf32, #tpu.memory_space<vmem>>, vector<1x1x16x16xf32>,
    %c5_156 = arith.constant 5 : index
    %1277 = memref.load %arg3[%c5_156] : memref<8xf32, #tpu.memory_space<smem>>
    %1278 = vector.broadcast %1277 : f32 to vector<16x16xf32>
    %1279 = arith.addf %1228, %1278 : vector<16x16xf32>
    %cst_157 = arith.constant 0.000000e+00 : f32
    %1280 = vector.broadcast %cst_157 : f32 to vector<16x16xf32>
    %1281 = arith.maximumf %1279, %1280 : vector<16x16xf32>
    %c0_158 = arith.constant 0 : index
    %c5_159 = arith.constant 5 : index
    %c0_160 = arith.constant 0 : index
    %c0_161 = arith.constant 0 : index
    %1282 = vector.load %arg4[%c0_158, %c5_159, %c0_160, %c0_161] : memref<1x8x16x16xf32, #tpu.memory_space<vmem>>, vector<1x1x16x16xf32>
    %1283 = vector.shape_cast %1282 : vector<1x1x16x16xf32> to vector<16x16xf32>
    %1284 = vector.shape_cast %1281 : vector<16x16xf32> to vector<1x1x16x16xf32>
    tpu.vector_store %arg4[%c0_158, %c5_159, %c0_160, %c0_161], %1284 {strides = array<i32>} : memref<1x8x16x16xf32, #tpu.memory_space<vmem>>, vector<1x1x16x16xf32>,
    %c6_162 = arith.constant 6 : index
    %1285 = memref.load %arg3[%c6_162] : memref<8xf32, #tpu.memory_space<smem>>
    %1286 = vector.broadcast %1285 : f32 to vector<16x16xf32>
    %1287 = arith.addf %1232, %1286 : vector<16x16xf32>
    %cst_163 = arith.constant 0.000000e+00 : f32
    %1288 = vector.broadcast %cst_163 : f32 to vector<16x16xf32>
    %1289 = arith.maximumf %1287, %1288 : vector<16x16xf32>
    %c0_164 = arith.constant 0 : index
    %c6_165 = arith.constant 6 : index
    %c0_166 = arith.constant 0 : index
    %c0_167 = arith.constant 0 : index
    %1290 = vector.load %arg4[%c0_164, %c6_165, %c0_166, %c0_167] : memref<1x8x16x16xf32, #tpu.memory_space<vmem>>, vector<1x1x16x16xf32>
    %1291 = vector.shape_cast %1290 : vector<1x1x16x16xf32> to vector<16x16xf32>
    %1292 = vector.shape_cast %1289 : vector<16x16xf32> to vector<1x1x16x16xf32>
    tpu.vector_store %arg4[%c0_164, %c6_165, %c0_166, %c0_167], %1292 {strides = array<i32>} : memref<1x8x16x16xf32, #tpu.memory_space<vmem>>, vector<1x1x16x16xf32>,
    %c7_168 = arith.constant 7 : index
    %1293 = memref.load %arg3[%c7_168] : memref<8xf32, #tpu.memory_space<smem>>
    %1294 = vector.broadcast %1293 : f32 to vector<16x16xf32>
    %1295 = arith.addf %1236, %1294 : vector<16x16xf32>
    %cst_169 = arith.constant 0.000000e+00 : f32
    %1296 = vector.broadcast %cst_169 : f32 to vector<16x16xf32>
    %1297 = arith.maximumf %1295, %1296 : vector<16x16xf32>
    %c0_170 = arith.constant 0 : index
    %c7_171 = arith.constant 7 : index
    %c0_172 = arith.constant 0 : index
    %c0_173 = arith.constant 0 : index
    %1298 = vector.load %arg4[%c0_170, %c7_171, %c0_172, %c0_173] : memref<1x8x16x16xf32, #tpu.memory_space<vmem>>, vector<1x1x16x16xf32>
    %1299 = vector.shape_cast %1298 : vector<1x1x16x16xf32> to vector<16x16xf32>
    %1300 = vector.shape_cast %1297 : vector<16x16xf32> to vector<1x1x16x16xf32>
    tpu.vector_store %arg4[%c0_170, %c7_171, %c0_172, %c0_173], %1300 {strides = array<i32>} : memref<1x8x16x16xf32, #tpu.memory_space<vmem>>, vector<1x1x16x16xf32>,
    return
  }
  func.func @transform_0(%arg0: i32) -> (i32, i32, i32, i32) {
    %c0_i32 = arith.constant 0 : i32
    %c0_i32_0 = arith.constant 0 : i32
    %c0_i32_1 = arith.constant 0 : i32
    %c0_i32_2 = arith.constant 0 : i32
    return %arg0, %c0_i32, %c0_i32_0, %c0_i32_1 : i32, i32, i32, i32
  }
  func.func @transform_1(%arg0: i32) -> i32 {
    %c0_i32 = arith.constant 0 : i32
    %c0_i32_0 = arith.constant 0 : i32
    return %c0_i32 : i32
  }
  func.func @transform_2(%arg0: i32) -> i32 {
    %c0_i32 = arith.constant 0 : i32
    %c0_i32_0 = arith.constant 0 : i32
    return %c0_i32 : i32
  }
  func.func @transform_3(%arg0: i32) -> (i32, i32, i32, i32) {
    %c0_i32 = arith.constant 0 : i32
    %c0_i32_0 = arith.constant 0 : i32
    %c0_i32_1 = arith.constant 0 : i32
    %c0_i32_2 = arith.constant 0 : i32
    return %arg0, %c0_i32, %c0_i32_0, %c0_i32_1 : i32, i32, i32, i32
  }
}

</mosaic_0001>

<llo_original>
// kernel: tpu_custom_call.1
$region0: #{tpu_custom_call.1}
  #allocation0 [shape = 'u32[]', space=smem, size = 0x4, offset = 0x4, fixed_abs, tag = 'smem constant byte address 0x4 - core index']
  #allocation1 [shape = 'u32[144,128]{1,0:T(1,128)}', space=vmem, size = 0x12000, scoped, tag = 'internal scratch']
  #allocation2 [shape = 'f32[4,18,18]{2,1,0:T(8,128)}', space=vmem, size = 0xc000, scoped, tag = 'scratch operand']
  %s0 = inlined_call_operand.hbm [shape: f32[2,4,16,16], index: 0, kind: input, shape index: {}]
  %s1 = inlined_call_operand.hbm [shape: f32[288], index: 1, kind: input, shape index: {}]
  %s2 = inlined_call_operand.vmem [shape: f32[8], index: 2, kind: input, shape index: {}]
  %s3 = inlined_call_operand.hbm [shape: f32[2,8,16,16], index: 3, kind: output, shape index: {}]
  %s4 = sld [smem:[#allocation0]]
  $region57: #{tpu_custom_call.1} parent=0
    _
  %s6 = ssub.s32 1, %s4
  %s7 = scalar_select 0, %s6, %s4
  $region1: #{tpu_custom_call.1} parent=0
    #allocation3 [shape = 'u8[65536]{0}', space=vmem, size = 0x10000, scoped, tag = 'input window, operand 0']
    #allocation4 [shape = 's32[2]{0}', space=sflag, size = 0x8, scoped, tag = 'scoped memory for tpu_custom_call.1']
    #allocation5 [shape = 's32[2]{0}', space=sflag, size = 0x8, scoped, tag = 'scoped memory for tpu_custom_call.1']
    #allocation6 [shape = 's32[2]{0}', space=sflag, size = 0x8, scoped, tag = 'scoped memory for tpu_custom_call.1']
    #allocation7 [shape = 's32[2]{0}', space=sflag, size = 0x8, scoped, tag = 'scoped memory for tpu_custom_call.1']
    #allocation8 [shape = 'u8[1536]{0}', space=smem, size = 0x600, scoped, tag = 'input window, operand 1, single buffered']
    #allocation9 [shape = 'u8[512]{0}', space=smem, size = 0x200, scoped, tag = 'input window, operand 2, single buffered']
    #allocation10 [shape = 'u8[131072]{0}', space=vmem, size = 0x20000, scoped, tag = 'output window, operand 0']
    %8 = vsyncpa [#allocation4], 0
    %s9 = scalar_lea.sflag [#allocation4], 1
    %10 = vsyncpa %s9, 0
    %11 = vsyncpa [#allocation6], 0
    %12 = vsyncpa [#allocation7], 0
    %13 = vsyncpa [#allocation5], 0
    %s14 = scalar_lea.sflag [#allocation5], 1
    %15 = vsyncpa %s14, 0
    loop: start=0, step=1, limit=4
    $region2: #{tpu_custom_call.1} parent=1 // loop_pre_header
      _
    $region3: #{tpu_custom_call.1} parent=1 // loop_header
      %s17 = sphi 0, %s21
      %p18 = scmp.ge.s32.totalorder %s17, 4
      %s27 = sphi 0, %s29
      %s30 = sphi 0, %s27
      %s31 = sphi 0, %s30
      %s47 = sphi 0, %s31
      %s51 = sphi 0, %s51
      %s53 = sphi 0, %s51
      %s54 = sphi 0, %s53
      %s68 = sphi 0, %s54
      %s72 = sphi 0, %s72
      %s74 = sphi 0, %s72
      %s75 = sphi 0, %s74
      %s89 = sphi 0, %s75
      %s95 = sphi 0, %s97
      %s98 = sphi 0, %s95
      %s99 = sphi 0, %s98
      %s115 = sphi 0, %s99
    $region4: #{tpu_custom_call.1} parent=1 // loop_header_branch
      %20 = sbr.rel (%p18) target = $region8
    $region5: #{tpu_custom_call.1} parent=1 // loop_body
      %s22 = ssub.s32 %s17, 1
      %s23 = ssub.s32 %s17, 2
      %s24 = sadd.s32 %s17, 1
      %s25 = ssub.s32 %s17, %s24
      %p26 = scmp.eq.s32.totalorder %s25, 0
      %s28 = sadd.s32 %s27, 1
      %s29 = scalar_select %p26, %s27, %s28
      %p32 = pneg %p26
      %p33 = scmp.eq.s32.totalorder %s17, 1
      %p34 = por %p32, %p33
      %p35 = scmp.ne.s32.totalorder %s27, %s30
      %p36 = scmp.eq.s32.totalorder %s17, 0
      %p37 = por %p35, %p36
      %p38 = scmp.ne.s32.totalorder %s27, %s30
      %p39 = scmp.eq.s32.totalorder %s22, 1
      %p40 = por %p38, %p39
      %p41 = scmp.ne.s32.totalorder %s30, %s31
      %p42 = scmp.eq.s32.totalorder %s22, 0
      %p43 = por %p41, %p42
      %p44 = scmp.ne.s32.totalorder %s30, %s31
      %p45 = scmp.eq.s32.totalorder %s23, 1
      %p46 = por %p44, %p45
      %p48 = scmp.ne.s32.totalorder %s31, %s47
      %p49 = scmp.eq.s32.totalorder %s23, 0
      %p50 = por %p48, %p49
      %s52 = sadd.s32 %s51, 1
      %p55 = scmp.eq.s32.totalorder %s17, 1
      %p56 = scmp.ne.s32.totalorder %s51, %s53
      %p57 = scmp.eq.s32.totalorder %s17, 0
      %p58 = por %p56, %p57
      %p59 = scmp.ne.s32.totalorder %s51, %s53
      %p60 = scmp.eq.s32.totalorder %s22, 1
      %p61 = por %p59, %p60
      %p62 = scmp.ne.s32.totalorder %s53, %s54
      %p63 = scmp.eq.s32.totalorder %s22, 0
      %p64 = por %p62, %p63
      %p65 = scmp.ne.s32.totalorder %s53, %s54
      %p66 = scmp.eq.s32.totalorder %s23, 1
      %p67 = por %p65, %p66
      %p69 = scmp.ne.s32.totalorder %s54, %s68
      %p70 = scmp.eq.s32.totalorder %s23, 0
      %p71 = por %p69, %p70
      %s73 = sadd.s32 %s72, 1
      %p76 = scmp.eq.s32.totalorder %s17, 1
      %p77 = scmp.ne.s32.totalorder %s72, %s74
      %p78 = scmp.eq.s32.totalorder %s17, 0
      %p79 = por %p77, %p78
      %p80 = scmp.ne.s32.totalorder %s72, %s74
      %p81 = scmp.eq.s32.totalorder %s22, 1
      %p82 = por %p80, %p81
      %p83 = scmp.ne.s32.totalorder %s74, %s75
      %p84 = scmp.eq.s32.totalorder %s22, 0
      %p85 = por %p83, %p84
      %p86 = scmp.ne.s32.totalorder %s74, %s75
      %p87 = scmp.eq.s32.totalorder %s23, 1
      %p88 = por %p86, %p87
      %p90 = scmp.ne.s32.totalorder %s75, %s89
      %p91 = scmp.eq.s32.totalorder %s23, 0
      %p92 = por %p90, %p91
      %s93 = ssub.s32 %s17, %s24
      %p94 = scmp.eq.s32.totalorder %s93, 0
      %s96 = sadd.s32 %s95, 1
      %s97 = scalar_select %p94, %s95, %s96
      %p100 = pneg %p94
      %p101 = scmp.eq.s32.totalorder %s17, 1
      %p102 = por %p100, %p101
      %p103 = scmp.ne.s32.totalorder %s95, %s98
      %p104 = scmp.eq.s32.totalorder %s17, 0
      %p105 = por %p103, %p104
      %p106 = scmp.ne.s32.totalorder %s95, %s98
      %p107 = scmp.eq.s32.totalorder %s22, 1
      %p108 = por %p106, %p107
      %p109 = scmp.ne.s32.totalorder %s98, %s99
      %p110 = scmp.eq.s32.totalorder %s22, 0
      %p111 = por %p109, %p110
      %p112 = scmp.ne.s32.totalorder %s98, %s99
      %p113 = scmp.eq.s32.totalorder %s23, 1
      %p114 = por %p112, %p113
      %p116 = scmp.ne.s32.totalorder %s99, %s115
      %p117 = scmp.eq.s32.totalorder %s23, 0
      %p118 = por %p116, %p117
      %p119 = scmp.le.s32.totalorder 1, %s17
      %p120 = scmp.lt.s32.totalorder %s17, 3
      %p121 = pnand %p119, %p120
      %p122 = pneg %p121
      // Predicated region
      $region9: #{tpu_custom_call.1} parent=5 // pred_check
        _
      $region10: #{tpu_custom_call.1} parent=5 // pred_check_branch
        %124 = sbr.rel (%p121) target = $region12
      $region11: #{tpu_custom_call.1} parent=5 // pred_region
        %s125 = ssub.s32 %s17, 1
        // Predicated region
        $region13: #{tpu_custom_call.1} parent=11 // pred_check
          %p126 = pneg %p64
        $region14: #{tpu_custom_call.1} parent=11 // pred_check_branch
          %128 = sbr.rel (%p126) target = $region16
        $region15: #{tpu_custom_call.1} parent=11 // pred_region
          %s130 = ssub.s32 48, 48
          %131 = vsyncadd [#allocation6], %s130
          %134 = dma.hbm_to_smem %s1, 48, [#allocation8], [#allocation6]
        $region16: #{tpu_custom_call.1} parent=11 // pred_fallthru
          _
        // Predicated region
        $region17: #{tpu_custom_call.1} parent=11 // pred_check
          %p135 = pneg %p85
        $region18: #{tpu_custom_call.1} parent=11 // pred_check_branch
          %137 = sbr.rel (%p135) target = $region20
        $region19: #{tpu_custom_call.1} parent=11 // pred_region
          %s139 = ssub.s32 16, 16
          %140 = vsyncadd [#allocation7], %s139
          %s142 = sshll.u32 %s2, 4
          %s143 = int_to_ptr.vmem [resolvable:$true] %s142
          %145 = dma.vmem_to_smem %s143, 16, [#allocation9], [#allocation7]
        $region20: #{tpu_custom_call.1} parent=11 // pred_fallthru
          _
      $region12: #{tpu_custom_call.1} parent=5 // pred_fallthru
        _
      %p146 = scmp.lt.s32.totalorder %s17, 2
      // Predicated region
      $region21: #{tpu_custom_call.1} parent=5 // pred_check
        %p147 = pneg %p146
      $region22: #{tpu_custom_call.1} parent=5 // pred_check_branch
        %149 = sbr.rel (%p147) target = $region24
      $region23: #{tpu_custom_call.1} parent=5 // pred_region
        // Predicated region
        $region25: #{tpu_custom_call.1} parent=23 // pred_check
          %p150 = pneg %p37
        $region26: #{tpu_custom_call.1} parent=23 // pred_check_branch
          %152 = sbr.rel (%p150) target = $region28
        $region27: #{tpu_custom_call.1} parent=23 // pred_region
          %s153 = sand.u32 %s27, 1
          %s154 = scalar_lea.sflag [#allocation4], %s153
          %s155 = sand.u32 %s27, 1
          %s156 = smul.addr %s155, 64
          %s157 = scalar_lea.vmem [#allocation3], %s156
          %s159 = ssub.s32 1024, 1024
          %160 = vsyncadd %s154, %s159
          %s161 = smul.addr %s17, 8
          %s162 = smul.addr %s161, 128
          %s163 = scalar_lea.hbm %s0, %s162
          %s164 = sshll.u32 %s157, 4
          %s165 = int_to_ptr.vmem [resolvable:$true] %s164
          %170 = dma.hbm_to_vmem [thread:$0]  %s163, 1024, %s165, %s154, 128, 128, 8
        $region28: #{tpu_custom_call.1} parent=23 // pred_fallthru
          _
      $region24: #{tpu_custom_call.1} parent=5 // pred_fallthru
        _
      %p171 = scmp.le.s32.totalorder 1, %s17
      %p172 = scmp.lt.s32.totalorder %s17, 3
      %p173 = pnand %p171, %p172
      %p174 = pneg %p173
      // Predicated region
      $region29: #{tpu_custom_call.1} parent=5 // pred_check
        _
      $region30: #{tpu_custom_call.1} parent=5 // pred_check_branch
        %176 = sbr.rel (%p173) target = $region32
      $region31: #{tpu_custom_call.1} parent=5 // pred_region
        %s177 = ssub.s32 %s17, 1
        %s178 = sand.u32 %s30, 1
        %s179 = scalar_lea.sflag [#allocation4], %s178
        %s180 = sand.u32 %s30, 1
        %s181 = smul.addr %s180, 64
        %s182 = scalar_lea.vmem [#allocation3], %s181
        // Predicated region
        $region33: #{tpu_custom_call.1} parent=31 // pred_check
          %p183 = pneg %p43
        $region34: #{tpu_custom_call.1} parent=31 // pred_check_branch
          %185 = sbr.rel (%p183) target = $region36
        $region35: #{tpu_custom_call.1} parent=31 // pred_region
          %186 = dma.done %s179, 1024
        $region36: #{tpu_custom_call.1} parent=31 // pred_fallthru
          _
        // Predicated region
        $region37: #{tpu_custom_call.1} parent=31 // pred_check
          %p187 = pneg %p64
        $region38: #{tpu_custom_call.1} parent=31 // pred_check_branch
          %189 = sbr.rel (%p187) target = $region40
        $region39: #{tpu_custom_call.1} parent=31 // pred_region
          %190 = dma.done [#allocation6], 48
        $region40: #{tpu_custom_call.1} parent=31 // pred_fallthru
          _
        // Predicated region
        $region41: #{tpu_custom_call.1} parent=31 // pred_check
          %p191 = pneg %p85
        $region42: #{tpu_custom_call.1} parent=31 // pred_check_branch
          %193 = sbr.rel (%p191) target = $region44
        $region43: #{tpu_custom_call.1} parent=31 // pred_region
          %194 = dma.done [#allocation7], 16
        $region44: #{tpu_custom_call.1} parent=31 // pred_fallthru
          _
        %195 = sfence
        %s196 = sand.u32 %s30, 1
        %s197 = scalar_lea.sflag [#allocation4], %s196
        %s198 = sand.u32 %s30, 1
        %s199 = smul.addr %s198, 64
        %s200 = scalar_lea.vmem [#allocation3], %s199
        %p201 = pneg %p43
        %p202 = pneg %p40
        %p203 = pneg %p64
        %p204 = pneg %p61
        %p205 = pneg %p85
        %p206 = pneg %p82
        %p207 = pneg %p111
        %p208 = pneg %p108
        %s209 = sand.u32 %s98, 1
        %s210 = scalar_lea.sflag [#allocation5], %s209
        %s211 = sand.u32 %s98, 1
        %s212 = smul.addr %s211, 128
        %s213 = scalar_lea.vmem [#allocation10], %s212
        %vm214 = vcmask 146432
        %215 = vst.msk [vmem:[#allocation2] sm:$0xff] %vm214, 0.0
        %216 = vst.msk [vmem:[#allocation2 + $0x8] sm:$0xff] %vm214, 0.0
        %vm217 = vcmask 140288
        %218 = vst.msk [vmem:[#allocation2 + $0x10] sm:$0x3] %vm217, 0.0
        %219 = vst.msk [vmem:[#allocation2 + $0x18] sm:$0xff] %vm214, 0.0
        %220 = vst.msk [vmem:[#allocation2 + $0x20] sm:$0xff] %vm214, 0.0
        %221 = vst.msk [vmem:[#allocation2 + $0x28] sm:$0x3] %vm217, 0.0
        %222 = vst.msk [vmem:[#allocation2 + $0x30] sm:$0xff] %vm214, 0.0
        %223 = vst.msk [vmem:[#allocation2 + $0x38] sm:$0xff] %vm214, 0.0
        %224 = vst.msk [vmem:[#allocation2 + $0x40] sm:$0x3] %vm217, 0.0
        %225 = vst.msk [vmem:[#allocation2 + $0x48] sm:$0xff] %vm214, 0.0
        %226 = vst.msk [vmem:[#allocation2 + $0x50] sm:$0xff] %vm214, 0.0
        %227 = vst.msk [vmem:[#allocation2 + $0x58] sm:$0x3] %vm217, 0.0
        %v228 = vld [vmem:[%s182] sm:$0xff]
        %v229 = vld [vmem:[%s182 + $0x8] sm:$0xff]
        %v230 = vld [vmem:[%s182 + $0x10] sm:$0xff]
        %v231 = vld [vmem:[%s182 + $0x18] sm:$0xff]
        %v232 = vld [vmem:[%s182 + $0x20] sm:$0xff]
        %v233 = vld [vmem:[%s182 + $0x28] sm:$0xff]
        %v234 = vld [vmem:[%s182 + $0x30] sm:$0xff]
        %v235 = vld [vmem:[%s182 + $0x38] sm:$0xff]
        %244 = vrot.lane.b32.xlu0 %v228, 1
        %v245 = vpop.permute.xlu0 %244
        %246 = vrot.lane.b32.xlu0 %v229, 1
        %v247 = vpop.permute.xlu0 %246
        %248 = vrot.lane.b32.xlu0 %v230, 1
        %v249 = vpop.permute.xlu0 %248
        %250 = vrot.lane.b32.xlu0 %v231, 1
        %v251 = vpop.permute.xlu0 %250
        %252 = vrot.lane.b32.xlu0 %v232, 1
        %v253 = vpop.permute.xlu0 %252
        %254 = vrot.lane.b32.xlu0 %v233, 1
        %v255 = vpop.permute.xlu0 %254
        %256 = vrot.lane.b32.xlu0 %v234, 1
        %v257 = vpop.permute.xlu0 %256
        %258 = vrot.lane.b32.xlu0 %v235, 1
        %v259 = vpop.permute.xlu0 %258
        %vm268 = vcmask 138248
        %269 = vst.msk [vmem:[#allocation2 + $0x1] sm:$0xff] %vm268, %v245
        %270 = vst.msk [vmem:[#allocation2 + $0x9] sm:$0xff] %vm268, %v247
        %271 = vst.msk [vmem:[#allocation2 + $0x19] sm:$0xff] %vm268, %v249
        %272 = vst.msk [vmem:[#allocation2 + $0x21] sm:$0xff] %vm268, %v251
        %273 = vst.msk [vmem:[#allocation2 + $0x31] sm:$0xff] %vm268, %v253
        %274 = vst.msk [vmem:[#allocation2 + $0x39] sm:$0xff] %vm268, %v255
        %275 = vst.msk [vmem:[#allocation2 + $0x49] sm:$0xff] %vm268, %v257
        %276 = vst.msk [vmem:[#allocation2 + $0x51] sm:$0xff] %vm268, %v259
        %v277 = vld [vmem:[#allocation2] sm:$0xff]
        %v278 = vld [vmem:[#allocation2 + $0x8] sm:$0xff]
        %s279 = sld [smem:[#allocation8]]
        %v280 = vstv %s279
        %v281 = vmul.f32 %v280, %v277
        %v282 = vmul.f32 %v280, %v278
        %v283 = vadd.f32 %v281, 0.0
        %v284 = vadd.f32 %v282, 0.0
        %s285 = sld [smem:[#allocation8 + $0x24]]
        %v286 = vstv %s285
        %v287 = vmul.f32 %v286, %v277
        %v288 = vmul.f32 %v286, %v278
        %v289 = vadd.f32 %v287, 0.0
        %v290 = vadd.f32 %v288, 0.0
        %s291 = sld [smem:[#allocation8 + $0x48]]
        %v292 = vstv %s291
        %v293 = vmul.f32 %v292, %v277
        %v294 = vmul.f32 %v292, %v278
        %v295 = vadd.f32 %v293, 0.0
        %v296 = vadd.f32 %v294, 0.0
        %s297 = sld [smem:[#allocation8 + $0x6c]]
        %v298 = vstv %s297
        %v299 = vmul.f32 %v298, %v277
        %v300 = vmul.f32 %v298, %v278
        %v301 = vadd.f32 %v299, 0.0
        %v302 = vadd.f32 %v300, 0.0
        %s303 = sld [smem:[#allocation8 + $0x90]]
        %v304 = vstv %s303
        %v305 = vmul.f32 %v304, %v277
        %v306 = vmul.f32 %v304, %v278
        %v307 = vadd.f32 %v305, 0.0
        %v308 = vadd.f32 %v306, 0.0
        %s309 = sld [smem:[#allocation8 + $0xb4]]
        %v310 = vstv %s309
        %v311 = vmul.f32 %v310, %v277
        %v312 = vmul.f32 %v310, %v278
        %v313 = vadd.f32 %v311, 0.0
        %v314 = vadd.f32 %v312, 0.0
        %s315 = sld [smem:[#allocation8 + $0xd8]]
        %v316 = vstv %s315
        %v317 = vmul.f32 %v316, %v277
        %v318 = vmul.f32 %v316, %v278
        %v319 = vadd.f32 %v317, 0.0
        %v320 = vadd.f32 %v318, 0.0
        %s321 = sld [smem:[#allocation8 + $0xfc]]
        %v322 = vstv %s321
        %v323 = vmul.f32 %v322, %v277
        %v324 = vmul.f32 %v322, %v278
        %v325 = vadd.f32 %v323, 0.0
        %v326 = vadd.f32 %v324, 0.0
        %s327 = scalar_lea.vmem [#allocation2], 24
        %v328 = vld [vmem:[%s327] sm:$0xff]
        %v329 = vld [vmem:[%s327 + $0x8] sm:$0xff]
        %s330 = sld [smem:[#allocation8 + $0x9]]
        %v331 = vstv %s330
        %v332 = vmul.f32 %v331, %v328
        %v333 = vmul.f32 %v331, %v329
        %v334 = vadd.f32 %v283, %v332
        %v335 = vadd.f32 %v284, %v333
        %s336 = sld [smem:[#allocation8 + $0x2d]]
        %v337 = vstv %s336
        %v338 = vmul.f32 %v337, %v328
        %v339 = vmul.f32 %v337, %v329
        %v340 = vadd.f32 %v289, %v338
        %v341 = vadd.f32 %v290, %v339
        %s342 = sld [smem:[#allocation8 + $0x51]]
        %v343 = vstv %s342
        %v344 = vmul.f32 %v343, %v328
        %v345 = vmul.f32 %v343, %v329
        %v346 = vadd.f32 %v295, %v344
        %v347 = vadd.f32 %v296, %v345
        %s348 = sld [smem:[#allocation8 + $0x75]]
        %v349 = vstv %s348
        %v350 = vmul.f32 %v349, %v328
        %v351 = vmul.f32 %v349, %v329
        %v352 = vadd.f32 %v301, %v350
        %v353 = vadd.f32 %v302, %v351
        %s354 = sld [smem:[#allocation8 + $0x99]]
        %v355 = vstv %s354
        %v356 = vmul.f32 %v355, %v328
        %v357 = vmul.f32 %v355, %v329
        %v358 = vadd.f32 %v307, %v356
        %v359 = vadd.f32 %v308, %v357
        %s360 = sld [smem:[#allocation8 + $0xbd]]
        %v361 = vstv %s360
        %v362 = vmul.f32 %v361, %v328
        %v363 = vmul.f32 %v361, %v329
        %v364 = vadd.f32 %v313, %v362
        %v365 = vadd.f32 %v314, %v363
        %s366 = sld [smem:[#allocation8 + $0xe1]]
        %v367 = vstv %s366
        %v368 = vmul.f32 %v367, %v328
        %v369 = vmul.f32 %v367, %v329
        %v370 = vadd.f32 %v319, %v368
        %v371 = vadd.f32 %v320, %v369
        %s372 = sld [smem:[#allocation8 + $0x105]]
        %v373 = vstv %s372
        %v374 = vmul.f32 %v373, %v328
        %v375 = vmul.f32 %v373, %v329
        %v376 = vadd.f32 %v325, %v374
        %v377 = vadd.f32 %v326, %v375
        %s378 = scalar_lea.vmem [#allocation2], 48
        %v379 = vld [vmem:[%s378] sm:$0xff]
        %v380 = vld [vmem:[%s378 + $0x8] sm:$0xff]
        %s381 = sld [smem:[#allocation8 + $0x12]]
        %v382 = vstv %s381
        %v383 = vmul.f32 %v382, %v379
        %v384 = vmul.f32 %v382, %v380
        %v385 = vadd.f32 %v334, %v383
        %v386 = vadd.f32 %v335, %v384
        %s387 = sld [smem:[#allocation8 + $0x36]]
        %v388 = vstv %s387
        %v389 = vmul.f32 %v388, %v379
        %v390 = vmul.f32 %v388, %v380
        %v391 = vadd.f32 %v340, %v389
        %v392 = vadd.f32 %v341, %v390
        %s393 = sld [smem:[#allocation8 + $0x5a]]
        %v394 = vstv %s393
        %v395 = vmul.f32 %v394, %v379
        %v396 = vmul.f32 %v394, %v380
        %v397 = vadd.f32 %v346, %v395
        %v398 = vadd.f32 %v347, %v396
        %s399 = sld [smem:[#allocation8 + $0x7e]]
        %v400 = vstv %s399
        %v401 = vmul.f32 %v400, %v379
        %v402 = vmul.f32 %v400, %v380
        %v403 = vadd.f32 %v352, %v401
        %v404 = vadd.f32 %v353, %v402
        %s405 = sld [smem:[#allocation8 + $0xa2]]
        %v406 = vstv %s405
        %v407 = vmul.f32 %v406, %v379
        %v408 = vmul.f32 %v406, %v380
        %v409 = vadd.f32 %v358, %v407
        %v410 = vadd.f32 %v359, %v408
        %s411 = sld [smem:[#allocation8 + $0xc6]]
        %v412 = vstv %s411
        %v413 = vmul.f32 %v412, %v379
        %v414 = vmul.f32 %v412, %v380
        %v415 = vadd.f32 %v364, %v413
        %v416 = vadd.f32 %v365, %v414
        %s417 = sld [smem:[#allocation8 + $0xea]]
        %v418 = vstv %s417
        %v419 = vmul.f32 %v418, %v379
        %v420 = vmul.f32 %v418, %v380
        %v421 = vadd.f32 %v370, %v419
        %v422 = vadd.f32 %v371, %v420
        %s423 = sld [smem:[#allocation8 + $0x10e]]
        %v424 = vstv %s423
        %v425 = vmul.f32 %v424, %v379
        %v426 = vmul.f32 %v424, %v380
        %v427 = vadd.f32 %v376, %v425
        %v428 = vadd.f32 %v377, %v426
        %s429 = scalar_lea.vmem [#allocation2], 72
        %v430 = vld [vmem:[%s429] sm:$0xff]
        %v431 = vld [vmem:[%s429 + $0x8] sm:$0xff]
        %s432 = sld [smem:[#allocation8 + $0x1b]]
        %v433 = vstv %s432
        %v434 = vmul.f32 %v433, %v430
        %v435 = vmul.f32 %v433, %v431
        %v436 = vadd.f32 %v385, %v434
        %v437 = vadd.f32 %v386, %v435
        %s438 = sld [smem:[#allocation8 + $0x3f]]
        %v439 = vstv %s438
        %v440 = vmul.f32 %v439, %v430
        %v441 = vmul.f32 %v439, %v431
        %v442 = vadd.f32 %v391, %v440
        %v443 = vadd.f32 %v392, %v441
        %s444 = sld [smem:[#allocation8 + $0x63]]
        %v445 = vstv %s444
        %v446 = vmul.f32 %v445, %v430
        %v447 = vmul.f32 %v445, %v431
        %v448 = vadd.f32 %v397, %v446
        %v449 = vadd.f32 %v398, %v447
        %s450 = sld [smem:[#allocation8 + $0x87]]
        %v451 = vstv %s450
        %v452 = vmul.f32 %v451, %v430
        %v453 = vmul.f32 %v451, %v431
        %v454 = vadd.f32 %v403, %v452
        %v455 = vadd.f32 %v404, %v453
        %s456 = sld [smem:[#allocation8 + $0xab]]
        %v457 = vstv %s456
        %v458 = vmul.f32 %v457, %v430
        %v459 = vmul.f32 %v457, %v431
        %v460 = vadd.f32 %v409, %v458
        %v461 = vadd.f32 %v410, %v459
        %s462 = sld [smem:[#allocation8 + $0xcf]]
        %v463 = vstv %s462
        %v464 = vmul.f32 %v463, %v430
        %v465 = vmul.f32 %v463, %v431
        %v466 = vadd.f32 %v415, %v464
        %v467 = vadd.f32 %v416, %v465
        %s468 = sld [smem:[#allocation8 + $0xf3]]
        %v469 = vstv %s468
        %v470 = vmul.f32 %v469, %v430
        %v471 = vmul.f32 %v469, %v431
        %v472 = vadd.f32 %v421, %v470
        %v473 = vadd.f32 %v422, %v471
        %s474 = sld [smem:[#allocation8 + $0x117]]
        %v475 = vstv %s474
        %v476 = vmul.f32 %v475, %v430
        %v477 = vmul.f32 %v475, %v431
        %v478 = vadd.f32 %v427, %v476
        %v479 = vadd.f32 %v428, %v477
        %s480 = sld [smem:[#allocation8 + $0x1]]
        %v481 = vstv %s480
        %v482 = vmul.f32 %v481, %v277
        %v483 = vmul.f32 %v481, %v278
        %486 = vrot.lane.b32.xlu0 %v482, 127
        %v487 = vpop.permute.xlu0 %486
        %488 = vrot.lane.b32.xlu0 %v483, 127
        %v489 = vpop.permute.xlu0 %488
        %v492 = vadd.f32 %v436, %v487
        %v493 = vadd.f32 %v437, %v489
        %s494 = sld [smem:[#allocation8 + $0x25]]
        %v495 = vstv %s494
        %v496 = vmul.f32 %v495, %v277
        %v497 = vmul.f32 %v495, %v278
        %500 = vrot.lane.b32.xlu0 %v496, 127
        %v501 = vpop.permute.xlu0 %500
        %502 = vrot.lane.b32.xlu0 %v497, 127
        %v503 = vpop.permute.xlu0 %502
        %v506 = vadd.f32 %v442, %v501
        %v507 = vadd.f32 %v443, %v503
        %s508 = sld [smem:[#allocation8 + $0x49]]
        %v509 = vstv %s508
        %v510 = vmul.f32 %v509, %v277
        %v511 = vmul.f32 %v509, %v278
        %514 = vrot.lane.b32.xlu0 %v510, 127
        %v515 = vpop.permute.xlu0 %514
        %516 = vrot.lane.b32.xlu0 %v511, 127
        %v517 = vpop.permute.xlu0 %516
        %v520 = vadd.f32 %v448, %v515
        %v521 = vadd.f32 %v449, %v517
        %s522 = sld [smem:[#allocation8 + $0x6d]]
        %v523 = vstv %s522
        %v524 = vmul.f32 %v523, %v277
        %v525 = vmul.f32 %v523, %v278
        %528 = vrot.lane.b32.xlu0 %v524, 127
        %v529 = vpop.permute.xlu0 %528
        %530 = vrot.lane.b32.xlu0 %v525, 127
        %v531 = vpop.permute.xlu0 %530
        %v534 = vadd.f32 %v454, %v529
        %v535 = vadd.f32 %v455, %v531
        %s536 = sld [smem:[#allocation8 + $0x91]]
        %v537 = vstv %s536
        %v538 = vmul.f32 %v537, %v277
        %v539 = vmul.f32 %v537, %v278
        %542 = vrot.lane.b32.xlu0 %v538, 127
        %v543 = vpop.permute.xlu0 %542
        %544 = vrot.lane.b32.xlu0 %v539, 127
        %v545 = vpop.permute.xlu0 %544
        %v548 = vadd.f32 %v460, %v543
        %v549 = vadd.f32 %v461, %v545
        %s550 = sld [smem:[#allocation8 + $0xb5]]
        %v551 = vstv %s550
        %v552 = vmul.f32 %v551, %v277
        %v553 = vmul.f32 %v551, %v278
        %556 = vrot.lane.b32.xlu0 %v552, 127
        %v557 = vpop.permute.xlu0 %556
        %558 = vrot.lane.b32.xlu0 %v553, 127
        %v559 = vpop.permute.xlu0 %558
        %v562 = vadd.f32 %v466, %v557
        %v563 = vadd.f32 %v467, %v559
        %s564 = sld [smem:[#allocation8 + $0xd9]]
        %v565 = vstv %s564
        %v566 = vmul.f32 %v565, %v277
        %v567 = vmul.f32 %v565, %v278
        %570 = vrot.lane.b32.xlu0 %v566, 127
        %v571 = vpop.permute.xlu0 %570
        %572 = vrot.lane.b32.xlu0 %v567, 127
        %v573 = vpop.permute.xlu0 %572
        %v576 = vadd.f32 %v472, %v571
        %v577 = vadd.f32 %v473, %v573
        %s578 = sld [smem:[#allocation8 + $0xfd]]
        %v579 = vstv %s578
        %v580 = vmul.f32 %v579, %v277
        %v581 = vmul.f32 %v579, %v278
        %584 = vrot.lane.b32.xlu0 %v580, 127
        %v585 = vpop.permute.xlu0 %584
        %586 = vrot.lane.b32.xlu0 %v581, 127
        %v587 = vpop.permute.xlu0 %586
        %v590 = vadd.f32 %v478, %v585
        %v591 = vadd.f32 %v479, %v587
        %s592 = sld [smem:[#allocation8 + $0xa]]
        %v593 = vstv %s592
        %v594 = vmul.f32 %v593, %v328
        %v595 = vmul.f32 %v593, %v329
        %598 = vrot.lane.b32.xlu0 %v594, 127
        %v599 = vpop.permute.xlu0 %598
        %600 = vrot.lane.b32.xlu0 %v595, 127
        %v601 = vpop.permute.xlu0 %600
        %v604 = vadd.f32 %v492, %v599
        %v605 = vadd.f32 %v493, %v601
        %s606 = sld [smem:[#allocation8 + $0x2e]]
        %v607 = vstv %s606
        %v608 = vmul.f32 %v607, %v328
        %v609 = vmul.f32 %v607, %v329
        %612 = vrot.lane.b32.xlu0 %v608, 127
        %v613 = vpop.permute.xlu0 %612
        %614 = vrot.lane.b32.xlu0 %v609, 127
        %v615 = vpop.permute.xlu0 %614
        %v618 = vadd.f32 %v506, %v613
        %v619 = vadd.f32 %v507, %v615
        %s620 = sld [smem:[#allocation8 + $0x52]]
        %v621 = vstv %s620
        %v622 = vmul.f32 %v621, %v328
        %v623 = vmul.f32 %v621, %v329
        %626 = vrot.lane.b32.xlu0 %v622, 127
        %v627 = vpop.permute.xlu0 %626
        %628 = vrot.lane.b32.xlu0 %v623, 127
        %v629 = vpop.permute.xlu0 %628
        %v632 = vadd.f32 %v520, %v627
        %v633 = vadd.f32 %v521, %v629
        %s634 = sld [smem:[#allocation8 + $0x76]]
        %v635 = vstv %s634
        %v636 = vmul.f32 %v635, %v328
        %v637 = vmul.f32 %v635, %v329
        %640 = vrot.lane.b32.xlu0 %v636, 127
        %v641 = vpop.permute.xlu0 %640
        %642 = vrot.lane.b32.xlu0 %v637, 127
        %v643 = vpop.permute.xlu0 %642
        %v646 = vadd.f32 %v534, %v641
        %v647 = vadd.f32 %v535, %v643
        %s648 = sld [smem:[#allocation8 + $0x9a]]
        %v649 = vstv %s648
        %v650 = vmul.f32 %v649, %v328
        %v651 = vmul.f32 %v649, %v329
        %654 = vrot.lane.b32.xlu0 %v650, 127
        %v655 = vpop.permute.xlu0 %654
        %656 = vrot.lane.b32.xlu0 %v651, 127
        %v657 = vpop.permute.xlu0 %656
        %v660 = vadd.f32 %v548, %v655
        %v661 = vadd.f32 %v549, %v657
        %s662 = sld [smem:[#allocation8 + $0xbe]]
        %v663 = vstv %s662
        %v664 = vmul.f32 %v663, %v328
        %v665 = vmul.f32 %v663, %v329
        %668 = vrot.lane.b32.xlu0 %v664, 127
        %v669 = vpop.permute.xlu0 %668
        %670 = vrot.lane.b32.xlu0 %v665, 127
        %v671 = vpop.permute.xlu0 %670
        %v674 = vadd.f32 %v562, %v669
        %v675 = vadd.f32 %v563, %v671
        %s676 = sld [smem:[#allocation8 + $0xe2]]
        %v677 = vstv %s676
        %v678 = vmul.f32 %v677, %v328
        %v679 = vmul.f32 %v677, %v329
        %682 = vrot.lane.b32.xlu0 %v678, 127
        %v683 = vpop.permute.xlu0 %682
        %684 = vrot.lane.b32.xlu0 %v679, 127
        %v685 = vpop.permute.xlu0 %684
        %v688 = vadd.f32 %v576, %v683
        %v689 = vadd.f32 %v577, %v685
        %s690 = sld [smem:[#allocation8 + $0x106]]
        %v691 = vstv %s690
        %v692 = vmul.f32 %v691, %v328
        %v693 = vmul.f32 %v691, %v329
        %696 = vrot.lane.b32.xlu0 %v692, 127
        %v697 = vpop.permute.xlu0 %696
        %698 = vrot.lane.b32.xlu0 %v693, 127
        %v699 = vpop.permute.xlu0 %698
        %v702 = vadd.f32 %v590, %v697
        %v703 = vadd.f32 %v591, %v699
        %s704 = sld [smem:[#allocation8 + $0x13]]
        %v705 = vstv %s704
        %v706 = vmul.f32 %v705, %v379
        %v707 = vmul.f32 %v705, %v380
        %710 = vrot.lane.b32.xlu0 %v706, 127
        %v711 = vpop.permute.xlu0 %710
        %712 = vrot.lane.b32.xlu0 %v707, 127
        %v713 = vpop.permute.xlu0 %712
        %v716 = vadd.f32 %v604, %v711
        %v717 = vadd.f32 %v605, %v713
        %s718 = sld [smem:[#allocation8 + $0x37]]
        %v719 = vstv %s718
        %v720 = vmul.f32 %v719, %v379
        %v721 = vmul.f32 %v719, %v380
        %724 = vrot.lane.b32.xlu0 %v720, 127
        %v725 = vpop.permute.xlu0 %724
        %726 = vrot.lane.b32.xlu0 %v721, 127
        %v727 = vpop.permute.xlu0 %726
        %v730 = vadd.f32 %v618, %v725
        %v731 = vadd.f32 %v619, %v727
        %s732 = sld [smem:[#allocation8 + $0x5b]]
        %v733 = vstv %s732
        %v734 = vmul.f32 %v733, %v379
        %v735 = vmul.f32 %v733, %v380
        %738 = vrot.lane.b32.xlu0 %v734, 127
        %v739 = vpop.permute.xlu0 %738
        %740 = vrot.lane.b32.xlu0 %v735, 127
        %v741 = vpop.permute.xlu0 %740
        %v744 = vadd.f32 %v632, %v739
        %v745 = vadd.f32 %v633, %v741
        %s746 = sld [smem:[#allocation8 + $0x7f]]
        %v747 = vstv %s746
        %v748 = vmul.f32 %v747, %v379
        %v749 = vmul.f32 %v747, %v380
        %752 = vrot.lane.b32.xlu0 %v748, 127
        %v753 = vpop.permute.xlu0 %752
        %754 = vrot.lane.b32.xlu0 %v749, 127
        %v755 = vpop.permute.xlu0 %754
        %v758 = vadd.f32 %v646, %v753
        %v759 = vadd.f32 %v647, %v755
        %s760 = sld [smem:[#allocation8 + $0xa3]]
        %v761 = vstv %s760
        %v762 = vmul.f32 %v761, %v379
        %v763 = vmul.f32 %v761, %v380
        %766 = vrot.lane.b32.xlu0 %v762, 127
        %v767 = vpop.permute.xlu0 %766
        %768 = vrot.lane.b32.xlu0 %v763, 127
        %v769 = vpop.permute.xlu0 %768
        %v772 = vadd.f32 %v660, %v767
        %v773 = vadd.f32 %v661, %v769
        %s774 = sld [smem:[#allocation8 + $0xc7]]
        %v775 = vstv %s774
        %v776 = vmul.f32 %v775, %v379
        %v777 = vmul.f32 %v775, %v380
        %780 = vrot.lane.b32.xlu0 %v776, 127
        %v781 = vpop.permute.xlu0 %780
        %782 = vrot.lane.b32.xlu0 %v777, 127
        %v783 = vpop.permute.xlu0 %782
        %v786 = vadd.f32 %v674, %v781
        %v787 = vadd.f32 %v675, %v783
        %s788 = sld [smem:[#allocation8 + $0xeb]]
        %v789 = vstv %s788
        %v790 = vmul.f32 %v789, %v379
        %v791 = vmul.f32 %v789, %v380
        %794 = vrot.lane.b32.xlu0 %v790, 127
        %v795 = vpop.permute.xlu0 %794
        %796 = vrot.lane.b32.xlu0 %v791, 127
        %v797 = vpop.permute.xlu0 %796
        %v800 = vadd.f32 %v688, %v795
        %v801 = vadd.f32 %v689, %v797
        %s802 = sld [smem:[#allocation8 + $0x10f]]
        %v803 = vstv %s802
        %v804 = vmul.f32 %v803, %v379
        %v805 = vmul.f32 %v803, %v380
        %808 = vrot.lane.b32.xlu0 %v804, 127
        %v809 = vpop.permute.xlu0 %808
        %810 = vrot.lane.b32.xlu0 %v805, 127
        %v811 = vpop.permute.xlu0 %810
        %v814 = vadd.f32 %v702, %v809
        %v815 = vadd.f32 %v703, %v811
        %s816 = sld [smem:[#allocation8 + $0x1c]]
        %v817 = vstv %s816
        %v818 = vmul.f32 %v817, %v430
        %v819 = vmul.f32 %v817, %v431
        %822 = vrot.lane.b32.xlu0 %v818, 127
        %v823 = vpop.permute.xlu0 %822
        %824 = vrot.lane.b32.xlu0 %v819, 127
        %v825 = vpop.permute.xlu0 %824
        %v828 = vadd.f32 %v716, %v823
        %v829 = vadd.f32 %v717, %v825
        %s830 = sld [smem:[#allocation8 + $0x40]]
        %v831 = vstv %s830
        %v832 = vmul.f32 %v831, %v430
        %v833 = vmul.f32 %v831, %v431
        %836 = vrot.lane.b32.xlu0 %v832, 127
        %v837 = vpop.permute.xlu0 %836
        %838 = vrot.lane.b32.xlu0 %v833, 127
        %v839 = vpop.permute.xlu0 %838
        %v842 = vadd.f32 %v730, %v837
        %v843 = vadd.f32 %v731, %v839
        %s844 = sld [smem:[#allocation8 + $0x64]]
        %v845 = vstv %s844
        %v846 = vmul.f32 %v845, %v430
        %v847 = vmul.f32 %v845, %v431
        %850 = vrot.lane.b32.xlu0 %v846, 127
        %v851 = vpop.permute.xlu0 %850
        %852 = vrot.lane.b32.xlu0 %v847, 127
        %v853 = vpop.permute.xlu0 %852
        %v856 = vadd.f32 %v744, %v851
        %v857 = vadd.f32 %v745, %v853
        %s858 = sld [smem:[#allocation8 + $0x88]]
        %v859 = vstv %s858
        %v860 = vmul.f32 %v859, %v430
        %v861 = vmul.f32 %v859, %v431
        %864 = vrot.lane.b32.xlu0 %v860, 127
        %v865 = vpop.permute.xlu0 %864
        %866 = vrot.lane.b32.xlu0 %v861, 127
        %v867 = vpop.permute.xlu0 %866
        %v870 = vadd.f32 %v758, %v865
        %v871 = vadd.f32 %v759, %v867
        %s872 = sld [smem:[#allocation8 + $0xac]]
        %v873 = vstv %s872
        %v874 = vmul.f32 %v873, %v430
        %v875 = vmul.f32 %v873, %v431
        %878 = vrot.lane.b32.xlu0 %v874, 127
        %v879 = vpop.permute.xlu0 %878
        %880 = vrot.lane.b32.xlu0 %v875, 127
        %v881 = vpop.permute.xlu0 %880
        %v884 = vadd.f32 %v772, %v879
        %v885 = vadd.f32 %v773, %v881
        %s886 = sld [smem:[#allocation8 + $0xd0]]
        %v887 = vstv %s886
        %v888 = vmul.f32 %v887, %v430
        %v889 = vmul.f32 %v887, %v431
        %892 = vrot.lane.b32.xlu0 %v888, 127
        %v893 = vpop.permute.xlu0 %892
        %894 = vrot.lane.b32.xlu0 %v889, 127
        %v895 = vpop.permute.xlu0 %894
        %v898 = vadd.f32 %v786, %v893
        %v899 = vadd.f32 %v787, %v895
        %s900 = sld [smem:[#allocation8 + $0xf4]]
        %v901 = vstv %s900
        %v902 = vmul.f32 %v901, %v430
        %v903 = vmul.f32 %v901, %v431
        %906 = vrot.lane.b32.xlu0 %v902, 127
        %v907 = vpop.permute.xlu0 %906
        %908 = vrot.lane.b32.xlu0 %v903, 127
        %v909 = vpop.permute.xlu0 %908
        %v912 = vadd.f32 %v800, %v907
        %v913 = vadd.f32 %v801, %v909
        %s914 = sld [smem:[#allocation8 + $0x118]]
        %v915 = vstv %s914
        %v916 = vmul.f32 %v915, %v430
        %v917 = vmul.f32 %v915, %v431
        %920 = vrot.lane.b32.xlu0 %v916, 127
        %v921 = vpop.permute.xlu0 %920
        %922 = vrot.lane.b32.xlu0 %v917, 127
        %v923 = vpop.permute.xlu0 %922
        %v926 = vadd.f32 %v814, %v921
        %v927 = vadd.f32 %v815, %v923
        %s928 = sld [smem:[#allocation8 + $0x2]]
        %v929 = vstv %s928
        %v930 = vmul.f32 %v929, %v277
        %v931 = vmul.f32 %v929, %v278
        %934 = vrot.lane.b32.xlu0 %v930, 126
        %v935 = vpop.permute.xlu0 %934
        %936 = vrot.lane.b32.xlu0 %v931, 126
        %v937 = vpop.permute.xlu0 %936
        %v940 = vadd.f32 %v828, %v935
        %v941 = vadd.f32 %v829, %v937
        %s942 = sld [smem:[#allocation8 + $0x26]]
        %v943 = vstv %s942
        %v944 = vmul.f32 %v943, %v277
        %v945 = vmul.f32 %v943, %v278
        %948 = vrot.lane.b32.xlu0 %v944, 126
        %v949 = vpop.permute.xlu0 %948
        %950 = vrot.lane.b32.xlu0 %v945, 126
        %v951 = vpop.permute.xlu0 %950
        %v954 = vadd.f32 %v842, %v949
        %v955 = vadd.f32 %v843, %v951
        %s956 = sld [smem:[#allocation8 + $0x4a]]
        %v957 = vstv %s956
        %v958 = vmul.f32 %v957, %v277
        %v959 = vmul.f32 %v957, %v278
        %962 = vrot.lane.b32.xlu0 %v958, 126
        %v963 = vpop.permute.xlu0 %962
        %964 = vrot.lane.b32.xlu0 %v959, 126
        %v965 = vpop.permute.xlu0 %964
        %v968 = vadd.f32 %v856, %v963
        %v969 = vadd.f32 %v857, %v965
        %s970 = sld [smem:[#allocation8 + $0x6e]]
        %v971 = vstv %s970
        %v972 = vmul.f32 %v971, %v277
        %v973 = vmul.f32 %v971, %v278
        %976 = vrot.lane.b32.xlu0 %v972, 126
        %v977 = vpop.permute.xlu0 %976
        %978 = vrot.lane.b32.xlu0 %v973, 126
        %v979 = vpop.permute.xlu0 %978
        %v982 = vadd.f32 %v870, %v977
        %v983 = vadd.f32 %v871, %v979
        %s984 = sld [smem:[#allocation8 + $0x92]]
        %v985 = vstv %s984
        %v986 = vmul.f32 %v985, %v277
        %v987 = vmul.f32 %v985, %v278
        %990 = vrot.lane.b32.xlu0 %v986, 126
        %v991 = vpop.permute.xlu0 %990
        %992 = vrot.lane.b32.xlu0 %v987, 126
        %v993 = vpop.permute.xlu0 %992
        %v996 = vadd.f32 %v884, %v991
        %v997 = vadd.f32 %v885, %v993
        %s998 = sld [smem:[#allocation8 + $0xb6]]
        %v999 = vstv %s998
        %v1000 = vmul.f32 %v999, %v277
        %v1001 = vmul.f32 %v999, %v278
        %1004 = vrot.lane.b32.xlu0 %v1000, 126
        %v1005 = vpop.permute.xlu0 %1004
        %1006 = vrot.lane.b32.xlu0 %v1001, 126
        %v1007 = vpop.permute.xlu0 %1006
        %v1010 = vadd.f32 %v898, %v1005
        %v1011 = vadd.f32 %v899, %v1007
        %s1012 = sld [smem:[#allocation8 + $0xda]]
        %v1013 = vstv %s1012
        %v1014 = vmul.f32 %v1013, %v277
        %v1015 = vmul.f32 %v1013, %v278
        %1018 = vrot.lane.b32.xlu0 %v1014, 126
        %v1019 = vpop.permute.xlu0 %1018
        %1020 = vrot.lane.b32.xlu0 %v1015, 126
        %v1021 = vpop.permute.xlu0 %1020
        %v1024 = vadd.f32 %v912, %v1019
        %v1025 = vadd.f32 %v913, %v1021
        %s1026 = sld [smem:[#allocation8 + $0xfe]]
        %v1027 = vstv %s1026
        %v1028 = vmul.f32 %v1027, %v277
        %v1029 = vmul.f32 %v1027, %v278
        %1032 = vrot.lane.b32.xlu0 %v1028, 126
        %v1033 = vpop.permute.xlu0 %1032
        %1034 = vrot.lane.b32.xlu0 %v1029, 126
        %v1035 = vpop.permute.xlu0 %1034
        %v1038 = vadd.f32 %v926, %v1033
        %v1039 = vadd.f32 %v927, %v1035
        %s1040 = sld [smem:[#allocation8 + $0xb]]
        %v1041 = vstv %s1040
        %v1042 = vmul.f32 %v1041, %v328
        %v1043 = vmul.f32 %v1041, %v329
        %1046 = vrot.lane.b32.xlu0 %v1042, 126
        %v1047 = vpop.permute.xlu0 %1046
        %1048 = vrot.lane.b32.xlu0 %v1043, 126
        %v1049 = vpop.permute.xlu0 %1048
        %v1052 = vadd.f32 %v940, %v1047
        %v1053 = vadd.f32 %v941, %v1049
        %s1054 = sld [smem:[#allocation8 + $0x2f]]
        %v1055 = vstv %s1054
        %v1056 = vmul.f32 %v1055, %v328
        %v1057 = vmul.f32 %v1055, %v329
        %1060 = vrot.lane.b32.xlu0 %v1056, 126
        %v1061 = vpop.permute.xlu0 %1060
        %1062 = vrot.lane.b32.xlu0 %v1057, 126
        %v1063 = vpop.permute.xlu0 %1062
        %v1066 = vadd.f32 %v954, %v1061
        %v1067 = vadd.f32 %v955, %v1063
        %s1068 = sld [smem:[#allocation8 + $0x53]]
        %v1069 = vstv %s1068
        %v1070 = vmul.f32 %v1069, %v328
        %v1071 = vmul.f32 %v1069, %v329
        %1074 = vrot.lane.b32.xlu0 %v1070, 126
        %v1075 = vpop.permute.xlu0 %1074
        %1076 = vrot.lane.b32.xlu0 %v1071, 126
        %v1077 = vpop.permute.xlu0 %1076
        %v1080 = vadd.f32 %v968, %v1075
        %v1081 = vadd.f32 %v969, %v1077
        %s1082 = sld [smem:[#allocation8 + $0x77]]
        %v1083 = vstv %s1082
        %v1084 = vmul.f32 %v1083, %v328
        %v1085 = vmul.f32 %v1083, %v329
        %1088 = vrot.lane.b32.xlu0 %v1084, 126
        %v1089 = vpop.permute.xlu0 %1088
        %1090 = vrot.lane.b32.xlu0 %v1085, 126
        %v1091 = vpop.permute.xlu0 %1090
        %v1094 = vadd.f32 %v982, %v1089
        %v1095 = vadd.f32 %v983, %v1091
        %s1096 = sld [smem:[#allocation8 + $0x9b]]
        %v1097 = vstv %s1096
        %v1098 = vmul.f32 %v1097, %v328
        %v1099 = vmul.f32 %v1097, %v329
        %1102 = vrot.lane.b32.xlu0 %v1098, 126
        %v1103 = vpop.permute.xlu0 %1102
        %1104 = vrot.lane.b32.xlu0 %v1099, 126
        %v1105 = vpop.permute.xlu0 %1104
        %v1108 = vadd.f32 %v996, %v1103
        %v1109 = vadd.f32 %v997, %v1105
        %s1110 = sld [smem:[#allocation8 + $0xbf]]
        %v1111 = vstv %s1110
        %v1112 = vmul.f32 %v1111, %v328
        %v1113 = vmul.f32 %v1111, %v329
        %1116 = vrot.lane.b32.xlu0 %v1112, 126
        %v1117 = vpop.permute.xlu0 %1116
        %1118 = vrot.lane.b32.xlu0 %v1113, 126
        %v1119 = vpop.permute.xlu0 %1118
        %v1122 = vadd.f32 %v1010, %v1117
        %v1123 = vadd.f32 %v1011, %v1119
        %s1124 = sld [smem:[#allocation8 + $0xe3]]
        %v1125 = vstv %s1124
        %v1126 = vmul.f32 %v1125, %v328
        %v1127 = vmul.f32 %v1125, %v329
        %1130 = vrot.lane.b32.xlu0 %v1126, 126
        %v1131 = vpop.permute.xlu0 %1130
        %1132 = vrot.lane.b32.xlu0 %v1127, 126
        %v1133 = vpop.permute.xlu0 %1132
        %v1136 = vadd.f32 %v1024, %v1131
        %v1137 = vadd.f32 %v1025, %v1133
        %s1138 = sld [smem:[#allocation8 + $0x107]]
        %v1139 = vstv %s1138
        %v1140 = vmul.f32 %v1139, %v328
        %v1141 = vmul.f32 %v1139, %v329
        %1144 = vrot.lane.b32.xlu0 %v1140, 126
        %v1145 = vpop.permute.xlu0 %1144
        %1146 = vrot.lane.b32.xlu0 %v1141, 126
        %v1147 = vpop.permute.xlu0 %1146
        %v1150 = vadd.f32 %v1038, %v1145
        %v1151 = vadd.f32 %v1039, %v1147
        %s1152 = sld [smem:[#allocation8 + $0x14]]
        %v1153 = vstv %s1152
        %v1154 = vmul.f32 %v1153, %v379
        %v1155 = vmul.f32 %v1153, %v380
        %1158 = vrot.lane.b32.xlu0 %v1154, 126
        %v1159 = vpop.permute.xlu0 %1158
        %1160 = vrot.lane.b32.xlu0 %v1155, 126
        %v1161 = vpop.permute.xlu0 %1160
        %v1164 = vadd.f32 %v1052, %v1159
        %v1165 = vadd.f32 %v1053, %v1161
        %s1166 = sld [smem:[#allocation8 + $0x38]]
        %v1167 = vstv %s1166
        %v1168 = vmul.f32 %v1167, %v379
        %v1169 = vmul.f32 %v1167, %v380
        %1172 = vrot.lane.b32.xlu0 %v1168, 126
        %v1173 = vpop.permute.xlu0 %1172
        %1174 = vrot.lane.b32.xlu0 %v1169, 126
        %v1175 = vpop.permute.xlu0 %1174
        %v1178 = vadd.f32 %v1066, %v1173
        %v1179 = vadd.f32 %v1067, %v1175
        %s1180 = sld [smem:[#allocation8 + $0x5c]]
        %v1181 = vstv %s1180
        %v1182 = vmul.f32 %v1181, %v379
        %v1183 = vmul.f32 %v1181, %v380
        %1186 = vrot.lane.b32.xlu0 %v1182, 126
        %v1187 = vpop.permute.xlu0 %1186
        %1188 = vrot.lane.b32.xlu0 %v1183, 126
        %v1189 = vpop.permute.xlu0 %1188
        %v1192 = vadd.f32 %v1080, %v1187
        %v1193 = vadd.f32 %v1081, %v1189
        %s1194 = sld [smem:[#allocation8 + $0x80]]
        %v1195 = vstv %s1194
        %v1196 = vmul.f32 %v1195, %v379
        %v1197 = vmul.f32 %v1195, %v380
        %1200 = vrot.lane.b32.xlu0 %v1196, 126
        %v1201 = vpop.permute.xlu0 %1200
        %1202 = vrot.lane.b32.xlu0 %v1197, 126
        %v1203 = vpop.permute.xlu0 %1202
        %v1206 = vadd.f32 %v1094, %v1201
        %v1207 = vadd.f32 %v1095, %v1203
        %s1208 = sld [smem:[#allocation8 + $0xa4]]
        %v1209 = vstv %s1208
        %v1210 = vmul.f32 %v1209, %v379
        %v1211 = vmul.f32 %v1209, %v380
        %1214 = vrot.lane.b32.xlu0 %v1210, 126
        %v1215 = vpop.permute.xlu0 %1214
        %1216 = vrot.lane.b32.xlu0 %v1211, 126
        %v1217 = vpop.permute.xlu0 %1216
        %v1220 = vadd.f32 %v1108, %v1215
        %v1221 = vadd.f32 %v1109, %v1217
        %s1222 = sld [smem:[#allocation8 + $0xc8]]
        %v1223 = vstv %s1222
        %v1224 = vmul.f32 %v1223, %v379
        %v1225 = vmul.f32 %v1223, %v380
        %1228 = vrot.lane.b32.xlu0 %v1224, 126
        %v1229 = vpop.permute.xlu0 %1228
        %1230 = vrot.lane.b32.xlu0 %v1225, 126
        %v1231 = vpop.permute.xlu0 %1230
        %v1234 = vadd.f32 %v1122, %v1229
        %v1235 = vadd.f32 %v1123, %v1231
        %s1236 = sld [smem:[#allocation8 + $0xec]]
        %v1237 = vstv %s1236
        %v1238 = vmul.f32 %v1237, %v379
        %v1239 = vmul.f32 %v1237, %v380
        %1242 = vrot.lane.b32.xlu0 %v1238, 126
        %v1243 = vpop.permute.xlu0 %1242
        %1244 = vrot.lane.b32.xlu0 %v1239, 126
        %v1245 = vpop.permute.xlu0 %1244
        %v1248 = vadd.f32 %v1136, %v1243
        %v1249 = vadd.f32 %v1137, %v1245
        %s1250 = sld [smem:[#allocation8 + $0x110]]
        %v1251 = vstv %s1250
        %v1252 = vmul.f32 %v1251, %v379
        %v1253 = vmul.f32 %v1251, %v380
        %1256 = vrot.lane.b32.xlu0 %v1252, 126
        %v1257 = vpop.permute.xlu0 %1256
        %1258 = vrot.lane.b32.xlu0 %v1253, 126
        %v1259 = vpop.permute.xlu0 %1258
        %v1262 = vadd.f32 %v1150, %v1257
        %v1263 = vadd.f32 %v1151, %v1259
        %s1264 = sld [smem:[#allocation8 + $0x1d]]
        %v1265 = vstv %s1264
        %v1266 = vmul.f32 %v1265, %v430
        %v1267 = vmul.f32 %v1265, %v431
        %1270 = vrot.lane.b32.xlu0 %v1266, 126
        %v1271 = vpop.permute.xlu0 %1270
        %1272 = vrot.lane.b32.xlu0 %v1267, 126
        %v1273 = vpop.permute.xlu0 %1272
        %v1276 = vadd.f32 %v1164, %v1271
        %v1277 = vadd.f32 %v1165, %v1273
        %s1278 = sld [smem:[#allocation8 + $0x41]]
        %v1279 = vstv %s1278
        %v1280 = vmul.f32 %v1279, %v430
        %v1281 = vmul.f32 %v1279, %v431
        %1284 = vrot.lane.b32.xlu0 %v1280, 126
        %v1285 = vpop.permute.xlu0 %1284
        %1286 = vrot.lane.b32.xlu0 %v1281, 126
        %v1287 = vpop.permute.xlu0 %1286
        %v1290 = vadd.f32 %v1178, %v1285
        %v1291 = vadd.f32 %v1179, %v1287
        %s1292 = sld [smem:[#allocation8 + $0x65]]
        %v1293 = vstv %s1292
        %v1294 = vmul.f32 %v1293, %v430
        %v1295 = vmul.f32 %v1293, %v431
        %1298 = vrot.lane.b32.xlu0 %v1294, 126
        %v1299 = vpop.permute.xlu0 %1298
        %1300 = vrot.lane.b32.xlu0 %v1295, 126
        %v1301 = vpop.permute.xlu0 %1300
        %v1304 = vadd.f32 %v1192, %v1299
        %v1305 = vadd.f32 %v1193, %v1301
        %s1306 = sld [smem:[#allocation8 + $0x89]]
        %v1307 = vstv %s1306
        %v1308 = vmul.f32 %v1307, %v430
        %v1309 = vmul.f32 %v1307, %v431
        %1312 = vrot.lane.b32.xlu0 %v1308, 126
        %v1313 = vpop.permute.xlu0 %1312
        %1314 = vrot.lane.b32.xlu0 %v1309, 126
        %v1315 = vpop.permute.xlu0 %1314
        %v1318 = vadd.f32 %v1206, %v1313
        %v1319 = vadd.f32 %v1207, %v1315
        %s1320 = sld [smem:[#allocation8 + $0xad]]
        %v1321 = vstv %s1320
        %v1322 = vmul.f32 %v1321, %v430
        %v1323 = vmul.f32 %v1321, %v431
        %1326 = vrot.lane.b32.xlu0 %v1322, 126
        %v1327 = vpop.permute.xlu0 %1326
        %1328 = vrot.lane.b32.xlu0 %v1323, 126
        %v1329 = vpop.permute.xlu0 %1328
        %v1332 = vadd.f32 %v1220, %v1327
        %v1333 = vadd.f32 %v1221, %v1329
        %s1334 = sld [smem:[#allocation8 + $0xd1]]
        %v1335 = vstv %s1334
        %v1336 = vmul.f32 %v1335, %v430
        %v1337 = vmul.f32 %v1335, %v431
        %1340 = vrot.lane.b32.xlu0 %v1336, 126
        %v1341 = vpop.permute.xlu0 %1340
        %1342 = vrot.lane.b32.xlu0 %v1337, 126
        %v1343 = vpop.permute.xlu0 %1342
        %v1346 = vadd.f32 %v1234, %v1341
        %v1347 = vadd.f32 %v1235, %v1343
        %s1348 = sld [smem:[#allocation8 + $0xf5]]
        %v1349 = vstv %s1348
        %v1350 = vmul.f32 %v1349, %v430
        %v1351 = vmul.f32 %v1349, %v431
        %1354 = vrot.lane.b32.xlu0 %v1350, 126
        %v1355 = vpop.permute.xlu0 %1354
        %1356 = vrot.lane.b32.xlu0 %v1351, 126
        %v1357 = vpop.permute.xlu0 %1356
        %v1360 = vadd.f32 %v1248, %v1355
        %v1361 = vadd.f32 %v1249, %v1357
        %s1362 = sld [smem:[#allocation8 + $0x119]]
        %v1363 = vstv %s1362
        %v1364 = vmul.f32 %v1363, %v430
        %v1365 = vmul.f32 %v1363, %v431
        %1368 = vrot.lane.b32.xlu0 %v1364, 126
        %v1369 = vpop.permute.xlu0 %1368
        %1370 = vrot.lane.b32.xlu0 %v1365, 126
        %v1371 = vpop.permute.xlu0 %1370
        %v1374 = vadd.f32 %v1262, %v1369
        %v1375 = vadd.f32 %v1263, %v1371
        %v1376 = vld [vmem:[#allocation2 + $0x1] sm:$0xff]
        %v1377 = vld [vmem:[#allocation2 + $0x9] sm:$0xff]
        %s1378 = sld [smem:[#allocation8 + $0x3]]
        %v1379 = vstv %s1378
        %v1380 = vmul.f32 %v1379, %v1376
        %v1381 = vmul.f32 %v1379, %v1377
        %v1382 = vadd.f32 %v1276, %v1380
        %v1383 = vadd.f32 %v1277, %v1381
        %s1384 = sld [smem:[#allocation8 + $0x27]]
        %v1385 = vstv %s1384
        %v1386 = vmul.f32 %v1385, %v1376
        %v1387 = vmul.f32 %v1385, %v1377
        %v1388 = vadd.f32 %v1290, %v1386
        %v1389 = vadd.f32 %v1291, %v1387
        %s1390 = sld [smem:[#allocation8 + $0x4b]]
        %v1391 = vstv %s1390
        %v1392 = vmul.f32 %v1391, %v1376
        %v1393 = vmul.f32 %v1391, %v1377
        %v1394 = vadd.f32 %v1304, %v1392
        %v1395 = vadd.f32 %v1305, %v1393
        %s1396 = sld [smem:[#allocation8 + $0x6f]]
        %v1397 = vstv %s1396
        %v1398 = vmul.f32 %v1397, %v1376
        %v1399 = vmul.f32 %v1397, %v1377
        %v1400 = vadd.f32 %v1318, %v1398
        %v1401 = vadd.f32 %v1319, %v1399
        %s1402 = sld [smem:[#allocation8 + $0x93]]
        %v1403 = vstv %s1402
        %v1404 = vmul.f32 %v1403, %v1376
        %v1405 = vmul.f32 %v1403, %v1377
        %v1406 = vadd.f32 %v1332, %v1404
        %v1407 = vadd.f32 %v1333, %v1405
        %s1408 = sld [smem:[#allocation8 + $0xb7]]
        %v1409 = vstv %s1408
        %v1410 = vmul.f32 %v1409, %v1376
        %v1411 = vmul.f32 %v1409, %v1377
        %v1412 = vadd.f32 %v1346, %v1410
        %v1413 = vadd.f32 %v1347, %v1411
        %s1414 = sld [smem:[#allocation8 + $0xdb]]
        %v1415 = vstv %s1414
        %v1416 = vmul.f32 %v1415, %v1376
        %v1417 = vmul.f32 %v1415, %v1377
        %v1418 = vadd.f32 %v1360, %v1416
        %v1419 = vadd.f32 %v1361, %v1417
        %s1420 = sld [smem:[#allocation8 + $0xff]]
        %v1421 = vstv %s1420
        %v1422 = vmul.f32 %v1421, %v1376
        %v1423 = vmul.f32 %v1421, %v1377
        %v1424 = vadd.f32 %v1374, %v1422
        %v1425 = vadd.f32 %v1375, %v1423
        %v1426 = vld [vmem:[%s327 + $0x1] sm:$0xff]
        %v1427 = vld [vmem:[%s327 + $0x9] sm:$0xff]
        %s1428 = sld [smem:[#allocation8 + $0xc]]
        %v1429 = vstv %s1428
        %v1430 = vmul.f32 %v1429, %v1426
        %v1431 = vmul.f32 %v1429, %v1427
        %v1432 = vadd.f32 %v1382, %v1430
        %v1433 = vadd.f32 %v1383, %v1431
        %s1434 = sld [smem:[#allocation8 + $0x30]]
        %v1435 = vstv %s1434
        %v1436 = vmul.f32 %v1435, %v1426
        %v1437 = vmul.f32 %v1435, %v1427
        %v1438 = vadd.f32 %v1388, %v1436
        %v1439 = vadd.f32 %v1389, %v1437
        %s1440 = sld [smem:[#allocation8 + $0x54]]
        %v1441 = vstv %s1440
        %v1442 = vmul.f32 %v1441, %v1426
        %v1443 = vmul.f32 %v1441, %v1427
        %v1444 = vadd.f32 %v1394, %v1442
        %v1445 = vadd.f32 %v1395, %v1443
        %s1446 = sld [smem:[#allocation8 + $0x78]]
        %v1447 = vstv %s1446
        %v1448 = vmul.f32 %v1447, %v1426
        %v1449 = vmul.f32 %v1447, %v1427
        %v1450 = vadd.f32 %v1400, %v1448
        %v1451 = vadd.f32 %v1401, %v1449
        %s1452 = sld [smem:[#allocation8 + $0x9c]]
        %v1453 = vstv %s1452
        %v1454 = vmul.f32 %v1453, %v1426
        %v1455 = vmul.f32 %v1453, %v1427
        %v1456 = vadd.f32 %v1406, %v1454
        %v1457 = vadd.f32 %v1407, %v1455
        %s1458 = sld [smem:[#allocation8 + $0xc0]]
        %v1459 = vstv %s1458
        %v1460 = vmul.f32 %v1459, %v1426
        %v1461 = vmul.f32 %v1459, %v1427
        %v1462 = vadd.f32 %v1412, %v1460
        %v1463 = vadd.f32 %v1413, %v1461
        %s1464 = sld [smem:[#allocation8 + $0xe4]]
        %v1465 = vstv %s1464
        %v1466 = vmul.f32 %v1465, %v1426
        %v1467 = vmul.f32 %v1465, %v1427
        %v1468 = vadd.f32 %v1418, %v1466
        %v1469 = vadd.f32 %v1419, %v1467
        %s1470 = sld [smem:[#allocation8 + $0x108]]
        %v1471 = vstv %s1470
        %v1472 = vmul.f32 %v1471, %v1426
        %v1473 = vmul.f32 %v1471, %v1427
        %v1474 = vadd.f32 %v1424, %v1472
        %v1475 = vadd.f32 %v1425, %v1473
        %v1476 = vld [vmem:[%s378 + $0x1] sm:$0xff]
        %v1477 = vld [vmem:[%s378 + $0x9] sm:$0xff]
        %s1478 = sld [smem:[#allocation8 + $0x15]]
        %v1479 = vstv %s1478
        %v1480 = vmul.f32 %v1479, %v1476
        %v1481 = vmul.f32 %v1479, %v1477
        %v1482 = vadd.f32 %v1432, %v1480
        %v1483 = vadd.f32 %v1433, %v1481
        %s1484 = sld [smem:[#allocation8 + $0x39]]
        %v1485 = vstv %s1484
        %v1486 = vmul.f32 %v1485, %v1476
        %v1487 = vmul.f32 %v1485, %v1477
        %v1488 = vadd.f32 %v1438, %v1486
        %v1489 = vadd.f32 %v1439, %v1487
        %s1490 = sld [smem:[#allocation8 + $0x5d]]
        %v1491 = vstv %s1490
        %v1492 = vmul.f32 %v1491, %v1476
        %v1493 = vmul.f32 %v1491, %v1477
        %v1494 = vadd.f32 %v1444, %v1492
        %v1495 = vadd.f32 %v1445, %v1493
        %s1496 = sld [smem:[#allocation8 + $0x81]]
        %v1497 = vstv %s1496
        %v1498 = vmul.f32 %v1497, %v1476
        %v1499 = vmul.f32 %v1497, %v1477
        %v1500 = vadd.f32 %v1450, %v1498
        %v1501 = vadd.f32 %v1451, %v1499
        %s1502 = sld [smem:[#allocation8 + $0xa5]]
        %v1503 = vstv %s1502
        %v1504 = vmul.f32 %v1503, %v1476
        %v1505 = vmul.f32 %v1503, %v1477
        %v1506 = vadd.f32 %v1456, %v1504
        %v1507 = vadd.f32 %v1457, %v1505
        %s1508 = sld [smem:[#allocation8 + $0xc9]]
        %v1509 = vstv %s1508
        %v1510 = vmul.f32 %v1509, %v1476
        %v1511 = vmul.f32 %v1509, %v1477
        %v1512 = vadd.f32 %v1462, %v1510
        %v1513 = vadd.f32 %v1463, %v1511
        %s1514 = sld [smem:[#allocation8 + $0xed]]
        %v1515 = vstv %s1514
        %v1516 = vmul.f32 %v1515, %v1476
        %v1517 = vmul.f32 %v1515, %v1477
        %v1518 = vadd.f32 %v1468, %v1516
        %v1519 = vadd.f32 %v1469, %v1517
        %s1520 = sld [smem:[#allocation8 + $0x111]]
        %v1521 = vstv %s1520
        %v1522 = vmul.f32 %v1521, %v1476
        %v1523 = vmul.f32 %v1521, %v1477
        %v1524 = vadd.f32 %v1474, %v1522
        %v1525 = vadd.f32 %v1475, %v1523
        %v1526 = vld [vmem:[%s429 + $0x1] sm:$0xff]
        %v1527 = vld [vmem:[%s429 + $0x9] sm:$0xff]
        %s1528 = sld [smem:[#allocation8 + $0x1e]]
        %v1529 = vstv %s1528
        %v1530 = vmul.f32 %v1529, %v1526
        %v1531 = vmul.f32 %v1529, %v1527
        %v1532 = vadd.f32 %v1482, %v1530
        %v1533 = vadd.f32 %v1483, %v1531
        %s1534 = sld [smem:[#allocation8 + $0x42]]
        %v1535 = vstv %s1534
        %v1536 = vmul.f32 %v1535, %v1526
        %v1537 = vmul.f32 %v1535, %v1527
        %v1538 = vadd.f32 %v1488, %v1536
        %v1539 = vadd.f32 %v1489, %v1537
        %s1540 = sld [smem:[#allocation8 + $0x66]]
        %v1541 = vstv %s1540
        %v1542 = vmul.f32 %v1541, %v1526
        %v1543 = vmul.f32 %v1541, %v1527
        %v1544 = vadd.f32 %v1494, %v1542
        %v1545 = vadd.f32 %v1495, %v1543
        %s1546 = sld [smem:[#allocation8 + $0x8a]]
        %v1547 = vstv %s1546
        %v1548 = vmul.f32 %v1547, %v1526
        %v1549 = vmul.f32 %v1547, %v1527
        %v1550 = vadd.f32 %v1500, %v1548
        %v1551 = vadd.f32 %v1501, %v1549
        %s1552 = sld [smem:[#allocation8 + $0xae]]
        %v1553 = vstv %s1552
        %v1554 = vmul.f32 %v1553, %v1526
        %v1555 = vmul.f32 %v1553, %v1527
        %v1556 = vadd.f32 %v1506, %v1554
        %v1557 = vadd.f32 %v1507, %v1555
        %s1558 = sld [smem:[#allocation8 + $0xd2]]
        %v1559 = vstv %s1558
        %v1560 = vmul.f32 %v1559, %v1526
        %v1561 = vmul.f32 %v1559, %v1527
        %v1562 = vadd.f32 %v1512, %v1560
        %v1563 = vadd.f32 %v1513, %v1561
        %s1564 = sld [smem:[#allocation8 + $0xf6]]
        %v1565 = vstv %s1564
        %v1566 = vmul.f32 %v1565, %v1526
        %v1567 = vmul.f32 %v1565, %v1527
        %v1568 = vadd.f32 %v1518, %v1566
        %v1569 = vadd.f32 %v1519, %v1567
        %s1570 = sld [smem:[#allocation8 + $0x11a]]
        %v1571 = vstv %s1570
        %v1572 = vmul.f32 %v1571, %v1526
        %v1573 = vmul.f32 %v1571, %v1527
        %v1574 = vadd.f32 %v1524, %v1572
        %v1575 = vadd.f32 %v1525, %v1573
        %s1576 = sld [smem:[#allocation8 + $0x4]]
        %v1577 = vstv %s1576
        %v1578 = vmul.f32 %v1577, %v1376
        %v1579 = vmul.f32 %v1577, %v1377
        %1582 = vrot.lane.b32.xlu0 %v1578, 127
        %v1583 = vpop.permute.xlu0 %1582
        %1584 = vrot.lane.b32.xlu0 %v1579, 127
        %v1585 = vpop.permute.xlu0 %1584
        %v1588 = vadd.f32 %v1532, %v1583
        %v1589 = vadd.f32 %v1533, %v1585
        %s1590 = sld [smem:[#allocation8 + $0x28]]
        %v1591 = vstv %s1590
        %v1592 = vmul.f32 %v1591, %v1376
        %v1593 = vmul.f32 %v1591, %v1377
        %1596 = vrot.lane.b32.xlu0 %v1592, 127
        %v1597 = vpop.permute.xlu0 %1596
        %1598 = vrot.lane.b32.xlu0 %v1593, 127
        %v1599 = vpop.permute.xlu0 %1598
        %v1602 = vadd.f32 %v1538, %v1597
        %v1603 = vadd.f32 %v1539, %v1599
        %s1604 = sld [smem:[#allocation8 + $0x4c]]
        %v1605 = vstv %s1604
        %v1606 = vmul.f32 %v1605, %v1376
        %v1607 = vmul.f32 %v1605, %v1377
        %1610 = vrot.lane.b32.xlu0 %v1606, 127
        %v1611 = vpop.permute.xlu0 %1610
        %1612 = vrot.lane.b32.xlu0 %v1607, 127
        %v1613 = vpop.permute.xlu0 %1612
        %v1616 = vadd.f32 %v1544, %v1611
        %v1617 = vadd.f32 %v1545, %v1613
        %s1618 = sld [smem:[#allocation8 + $0x70]]
        %v1619 = vstv %s1618
        %v1620 = vmul.f32 %v1619, %v1376
        %v1621 = vmul.f32 %v1619, %v1377
        %1624 = vrot.lane.b32.xlu0 %v1620, 127
        %v1625 = vpop.permute.xlu0 %1624
        %1626 = vrot.lane.b32.xlu0 %v1621, 127
        %v1627 = vpop.permute.xlu0 %1626
        %v1630 = vadd.f32 %v1550, %v1625
        %v1631 = vadd.f32 %v1551, %v1627
        %s1632 = sld [smem:[#allocation8 + $0x94]]
        %v1633 = vstv %s1632
        %v1634 = vmul.f32 %v1633, %v1376
        %v1635 = vmul.f32 %v1633, %v1377
        %1638 = vrot.lane.b32.xlu0 %v1634, 127
        %v1639 = vpop.permute.xlu0 %1638
        %1640 = vrot.lane.b32.xlu0 %v1635, 127
        %v1641 = vpop.permute.xlu0 %1640
        %v1644 = vadd.f32 %v1556, %v1639
        %v1645 = vadd.f32 %v1557, %v1641
        %s1646 = sld [smem:[#allocation8 + $0xb8]]
        %v1647 = vstv %s1646
        %v1648 = vmul.f32 %v1647, %v1376
        %v1649 = vmul.f32 %v1647, %v1377
        %1652 = vrot.lane.b32.xlu0 %v1648, 127
        %v1653 = vpop.permute.xlu0 %1652
        %1654 = vrot.lane.b32.xlu0 %v1649, 127
        %v1655 = vpop.permute.xlu0 %1654
        %v1658 = vadd.f32 %v1562, %v1653
        %v1659 = vadd.f32 %v1563, %v1655
        %s1660 = sld [smem:[#allocation8 + $0xdc]]
        %v1661 = vstv %s1660
        %v1662 = vmul.f32 %v1661, %v1376
        %v1663 = vmul.f32 %v1661, %v1377
        %1666 = vrot.lane.b32.xlu0 %v1662, 127
        %v1667 = vpop.permute.xlu0 %1666
        %1668 = vrot.lane.b32.xlu0 %v1663, 127
        %v1669 = vpop.permute.xlu0 %1668
        %v1672 = vadd.f32 %v1568, %v1667
        %v1673 = vadd.f32 %v1569, %v1669
        %s1674 = sld [smem:[#allocation8 + $0x100]]
        %v1675 = vstv %s1674
        %v1676 = vmul.f32 %v1675, %v1376
        %v1677 = vmul.f32 %v1675, %v1377
        %1680 = vrot.lane.b32.xlu0 %v1676, 127
        %v1681 = vpop.permute.xlu0 %1680
        %1682 = vrot.lane.b32.xlu0 %v1677, 127
        %v1683 = vpop.permute.xlu0 %1682
        %v1686 = vadd.f32 %v1574, %v1681
        %v1687 = vadd.f32 %v1575, %v1683
        %s1688 = sld [smem:[#allocation8 + $0xd]]
        %v1689 = vstv %s1688
        %v1690 = vmul.f32 %v1689, %v1426
        %v1691 = vmul.f32 %v1689, %v1427
        %1694 = vrot.lane.b32.xlu0 %v1690, 127
        %v1695 = vpop.permute.xlu0 %1694
        %1696 = vrot.lane.b32.xlu0 %v1691, 127
        %v1697 = vpop.permute.xlu0 %1696
        %v1700 = vadd.f32 %v1588, %v1695
        %v1701 = vadd.f32 %v1589, %v1697
        %s1702 = sld [smem:[#allocation8 + $0x31]]
        %v1703 = vstv %s1702
        %v1704 = vmul.f32 %v1703, %v1426
        %v1705 = vmul.f32 %v1703, %v1427
        %1708 = vrot.lane.b32.xlu0 %v1704, 127
        %v1709 = vpop.permute.xlu0 %1708
        %1710 = vrot.lane.b32.xlu0 %v1705, 127
        %v1711 = vpop.permute.xlu0 %1710
        %v1714 = vadd.f32 %v1602, %v1709
        %v1715 = vadd.f32 %v1603, %v1711
        %s1716 = sld [smem:[#allocation8 + $0x55]]
        %v1717 = vstv %s1716
        %v1718 = vmul.f32 %v1717, %v1426
        %v1719 = vmul.f32 %v1717, %v1427
        %1722 = vrot.lane.b32.xlu0 %v1718, 127
        %v1723 = vpop.permute.xlu0 %1722
        %1724 = vrot.lane.b32.xlu0 %v1719, 127
        %v1725 = vpop.permute.xlu0 %1724
        %v1728 = vadd.f32 %v1616, %v1723
        %v1729 = vadd.f32 %v1617, %v1725
        %s1730 = sld [smem:[#allocation8 + $0x79]]
        %v1731 = vstv %s1730
        %v1732 = vmul.f32 %v1731, %v1426
        %v1733 = vmul.f32 %v1731, %v1427
        %1736 = vrot.lane.b32.xlu0 %v1732, 127
        %v1737 = vpop.permute.xlu0 %1736
        %1738 = vrot.lane.b32.xlu0 %v1733, 127
        %v1739 = vpop.permute.xlu0 %1738
        %v1742 = vadd.f32 %v1630, %v1737
        %v1743 = vadd.f32 %v1631, %v1739
        %s1744 = sld [smem:[#allocation8 + $0x9d]]
        %v1745 = vstv %s1744
        %v1746 = vmul.f32 %v1745, %v1426
        %v1747 = vmul.f32 %v1745, %v1427
        %1750 = vrot.lane.b32.xlu0 %v1746, 127
        %v1751 = vpop.permute.xlu0 %1750
        %1752 = vrot.lane.b32.xlu0 %v1747, 127
        %v1753 = vpop.permute.xlu0 %1752
        %v1756 = vadd.f32 %v1644, %v1751
        %v1757 = vadd.f32 %v1645, %v1753
        %s1758 = sld [smem:[#allocation8 + $0xc1]]
        %v1759 = vstv %s1758
        %v1760 = vmul.f32 %v1759, %v1426
        %v1761 = vmul.f32 %v1759, %v1427
        %1764 = vrot.lane.b32.xlu0 %v1760, 127
        %v1765 = vpop.permute.xlu0 %1764
        %1766 = vrot.lane.b32.xlu0 %v1761, 127
        %v1767 = vpop.permute.xlu0 %1766
        %v1770 = vadd.f32 %v1658, %v1765
        %v1771 = vadd.f32 %v1659, %v1767
        %s1772 = sld [smem:[#allocation8 + $0xe5]]
        %v1773 = vstv %s1772
        %v1774 = vmul.f32 %v1773, %v1426
        %v1775 = vmul.f32 %v1773, %v1427
        %1778 = vrot.lane.b32.xlu0 %v1774, 127
        %v1779 = vpop.permute.xlu0 %1778
        %1780 = vrot.lane.b32.xlu0 %v1775, 127
        %v1781 = vpop.permute.xlu0 %1780
        %v1784 = vadd.f32 %v1672, %v1779
        %v1785 = vadd.f32 %v1673, %v1781
        %s1786 = sld [smem:[#allocation8 + $0x109]]
        %v1787 = vstv %s1786
        %v1788 = vmul.f32 %v1787, %v1426
        %v1789 = vmul.f32 %v1787, %v1427
        %1792 = vrot.lane.b32.xlu0 %v1788, 127
        %v1793 = vpop.permute.xlu0 %1792
        %1794 = vrot.lane.b32.xlu0 %v1789, 127
        %v1795 = vpop.permute.xlu0 %1794
        %v1798 = vadd.f32 %v1686, %v1793
        %v1799 = vadd.f32 %v1687, %v1795
        %s1800 = sld [smem:[#allocation8 + $0x16]]
        %v1801 = vstv %s1800
        %v1802 = vmul.f32 %v1801, %v1476
        %v1803 = vmul.f32 %v1801, %v1477
        %1806 = vrot.lane.b32.xlu0 %v1802, 127
        %v1807 = vpop.permute.xlu0 %1806
        %1808 = vrot.lane.b32.xlu0 %v1803, 127
        %v1809 = vpop.permute.xlu0 %1808
        %v1812 = vadd.f32 %v1700, %v1807
        %v1813 = vadd.f32 %v1701, %v1809
        %s1814 = sld [smem:[#allocation8 + $0x3a]]
        %v1815 = vstv %s1814
        %v1816 = vmul.f32 %v1815, %v1476
        %v1817 = vmul.f32 %v1815, %v1477
        %1820 = vrot.lane.b32.xlu0 %v1816, 127
        %v1821 = vpop.permute.xlu0 %1820
        %1822 = vrot.lane.b32.xlu0 %v1817, 127
        %v1823 = vpop.permute.xlu0 %1822
        %v1826 = vadd.f32 %v1714, %v1821
        %v1827 = vadd.f32 %v1715, %v1823
        %s1828 = sld [smem:[#allocation8 + $0x5e]]
        %v1829 = vstv %s1828
        %v1830 = vmul.f32 %v1829, %v1476
        %v1831 = vmul.f32 %v1829, %v1477
        %1834 = vrot.lane.b32.xlu0 %v1830, 127
        %v1835 = vpop.permute.xlu0 %1834
        %1836 = vrot.lane.b32.xlu0 %v1831, 127
        %v1837 = vpop.permute.xlu0 %1836
        %v1840 = vadd.f32 %v1728, %v1835
        %v1841 = vadd.f32 %v1729, %v1837
        %s1842 = sld [smem:[#allocation8 + $0x82]]
        %v1843 = vstv %s1842
        %v1844 = vmul.f32 %v1843, %v1476
        %v1845 = vmul.f32 %v1843, %v1477
        %1848 = vrot.lane.b32.xlu0 %v1844, 127
        %v1849 = vpop.permute.xlu0 %1848
        %1850 = vrot.lane.b32.xlu0 %v1845, 127
        %v1851 = vpop.permute.xlu0 %1850
        %v1854 = vadd.f32 %v1742, %v1849
        %v1855 = vadd.f32 %v1743, %v1851
        %s1856 = sld [smem:[#allocation8 + $0xa6]]
        %v1857 = vstv %s1856
        %v1858 = vmul.f32 %v1857, %v1476
        %v1859 = vmul.f32 %v1857, %v1477
        %1862 = vrot.lane.b32.xlu0 %v1858, 127
        %v1863 = vpop.permute.xlu0 %1862
        %1864 = vrot.lane.b32.xlu0 %v1859, 127
        %v1865 = vpop.permute.xlu0 %1864
        %v1868 = vadd.f32 %v1756, %v1863
        %v1869 = vadd.f32 %v1757, %v1865
        %s1870 = sld [smem:[#allocation8 + $0xca]]
        %v1871 = vstv %s1870
        %v1872 = vmul.f32 %v1871, %v1476
        %v1873 = vmul.f32 %v1871, %v1477
        %1876 = vrot.lane.b32.xlu0 %v1872, 127
        %v1877 = vpop.permute.xlu0 %1876
        %1878 = vrot.lane.b32.xlu0 %v1873, 127
        %v1879 = vpop.permute.xlu0 %1878
        %v1882 = vadd.f32 %v1770, %v1877
        %v1883 = vadd.f32 %v1771, %v1879
        %s1884 = sld [smem:[#allocation8 + $0xee]]
        %v1885 = vstv %s1884
        %v1886 = vmul.f32 %v1885, %v1476
        %v1887 = vmul.f32 %v1885, %v1477
        %1890 = vrot.lane.b32.xlu0 %v1886, 127
        %v1891 = vpop.permute.xlu0 %1890
        %1892 = vrot.lane.b32.xlu0 %v1887, 127
        %v1893 = vpop.permute.xlu0 %1892
        %v1896 = vadd.f32 %v1784, %v1891
        %v1897 = vadd.f32 %v1785, %v1893
        %s1898 = sld [smem:[#allocation8 + $0x112]]
        %v1899 = vstv %s1898
        %v1900 = vmul.f32 %v1899, %v1476
        %v1901 = vmul.f32 %v1899, %v1477
        %1904 = vrot.lane.b32.xlu0 %v1900, 127
        %v1905 = vpop.permute.xlu0 %1904
        %1906 = vrot.lane.b32.xlu0 %v1901, 127
        %v1907 = vpop.permute.xlu0 %1906
        %v1910 = vadd.f32 %v1798, %v1905
        %v1911 = vadd.f32 %v1799, %v1907
        %s1912 = sld [smem:[#allocation8 + $0x1f]]
        %v1913 = vstv %s1912
        %v1914 = vmul.f32 %v1913, %v1526
        %v1915 = vmul.f32 %v1913, %v1527
        %1918 = vrot.lane.b32.xlu0 %v1914, 127
        %v1919 = vpop.permute.xlu0 %1918
        %1920 = vrot.lane.b32.xlu0 %v1915, 127
        %v1921 = vpop.permute.xlu0 %1920
        %v1924 = vadd.f32 %v1812, %v1919
        %v1925 = vadd.f32 %v1813, %v1921
        %s1926 = sld [smem:[#allocation8 + $0x43]]
        %v1927 = vstv %s1926
        %v1928 = vmul.f32 %v1927, %v1526
        %v1929 = vmul.f32 %v1927, %v1527
        %1932 = vrot.lane.b32.xlu0 %v1928, 127
        %v1933 = vpop.permute.xlu0 %1932
        %1934 = vrot.lane.b32.xlu0 %v1929, 127
        %v1935 = vpop.permute.xlu0 %1934
        %v1938 = vadd.f32 %v1826, %v1933
        %v1939 = vadd.f32 %v1827, %v1935
        %s1940 = sld [smem:[#allocation8 + $0x67]]
        %v1941 = vstv %s1940
        %v1942 = vmul.f32 %v1941, %v1526
        %v1943 = vmul.f32 %v1941, %v1527
        %1946 = vrot.lane.b32.xlu0 %v1942, 127
        %v1947 = vpop.permute.xlu0 %1946
        %1948 = vrot.lane.b32.xlu0 %v1943, 127
        %v1949 = vpop.permute.xlu0 %1948
        %v1952 = vadd.f32 %v1840, %v1947
        %v1953 = vadd.f32 %v1841, %v1949
        %s1954 = sld [smem:[#allocation8 + $0x8b]]
        %v1955 = vstv %s1954
        %v1956 = vmul.f32 %v1955, %v1526
        %v1957 = vmul.f32 %v1955, %v1527
        %1960 = vrot.lane.b32.xlu0 %v1956, 127
        %v1961 = vpop.permute.xlu0 %1960
        %1962 = vrot.lane.b32.xlu0 %v1957, 127
        %v1963 = vpop.permute.xlu0 %1962
        %v1966 = vadd.f32 %v1854, %v1961
        %v1967 = vadd.f32 %v1855, %v1963
        %s1968 = sld [smem:[#allocation8 + $0xaf]]
        %v1969 = vstv %s1968
        %v1970 = vmul.f32 %v1969, %v1526
        %v1971 = vmul.f32 %v1969, %v1527
        %1974 = vrot.lane.b32.xlu0 %v1970, 127
        %v1975 = vpop.permute.xlu0 %1974
        %1976 = vrot.lane.b32.xlu0 %v1971, 127
        %v1977 = vpop.permute.xlu0 %1976
        %v1980 = vadd.f32 %v1868, %v1975
        %v1981 = vadd.f32 %v1869, %v1977
        %s1982 = sld [smem:[#allocation8 + $0xd3]]
        %v1983 = vstv %s1982
        %v1984 = vmul.f32 %v1983, %v1526
        %v1985 = vmul.f32 %v1983, %v1527
        %1988 = vrot.lane.b32.xlu0 %v1984, 127
        %v1989 = vpop.permute.xlu0 %1988
        %1990 = vrot.lane.b32.xlu0 %v1985, 127
        %v1991 = vpop.permute.xlu0 %1990
        %v1994 = vadd.f32 %v1882, %v1989
        %v1995 = vadd.f32 %v1883, %v1991
        %s1996 = sld [smem:[#allocation8 + $0xf7]]
        %v1997 = vstv %s1996
        %v1998 = vmul.f32 %v1997, %v1526
        %v1999 = vmul.f32 %v1997, %v1527
        %2002 = vrot.lane.b32.xlu0 %v1998, 127
        %v2003 = vpop.permute.xlu0 %2002
        %2004 = vrot.lane.b32.xlu0 %v1999, 127
        %v2005 = vpop.permute.xlu0 %2004
        %v2008 = vadd.f32 %v1896, %v2003
        %v2009 = vadd.f32 %v1897, %v2005
        %s2010 = sld [smem:[#allocation8 + $0x11b]]
        %v2011 = vstv %s2010
        %v2012 = vmul.f32 %v2011, %v1526
        %v2013 = vmul.f32 %v2011, %v1527
        %2016 = vrot.lane.b32.xlu0 %v2012, 127
        %v2017 = vpop.permute.xlu0 %2016
        %2018 = vrot.lane.b32.xlu0 %v2013, 127
        %v2019 = vpop.permute.xlu0 %2018
        %v2022 = vadd.f32 %v1910, %v2017
        %v2023 = vadd.f32 %v1911, %v2019
        %s2024 = sld [smem:[#allocation8 + $0x5]]
        %v2025 = vstv %s2024
        %v2026 = vmul.f32 %v2025, %v1376
        %v2027 = vmul.f32 %v2025, %v1377
        %2030 = vrot.lane.b32.xlu0 %v2026, 126
        %v2031 = vpop.permute.xlu0 %2030
        %2032 = vrot.lane.b32.xlu0 %v2027, 126
        %v2033 = vpop.permute.xlu0 %2032
        %v2036 = vadd.f32 %v1924, %v2031
        %v2037 = vadd.f32 %v1925, %v2033
        %s2038 = sld [smem:[#allocation8 + $0x29]]
        %v2039 = vstv %s2038
        %v2040 = vmul.f32 %v2039, %v1376
        %v2041 = vmul.f32 %v2039, %v1377
        %2044 = vrot.lane.b32.xlu0 %v2040, 126
        %v2045 = vpop.permute.xlu0 %2044
        %2046 = vrot.lane.b32.xlu0 %v2041, 126
        %v2047 = vpop.permute.xlu0 %2046
        %v2050 = vadd.f32 %v1938, %v2045
        %v2051 = vadd.f32 %v1939, %v2047
        %s2052 = sld [smem:[#allocation8 + $0x4d]]
        %v2053 = vstv %s2052
        %v2054 = vmul.f32 %v2053, %v1376
        %v2055 = vmul.f32 %v2053, %v1377
        %2058 = vrot.lane.b32.xlu0 %v2054, 126
        %v2059 = vpop.permute.xlu0 %2058
        %2060 = vrot.lane.b32.xlu0 %v2055, 126
        %v2061 = vpop.permute.xlu0 %2060
        %v2064 = vadd.f32 %v1952, %v2059
        %v2065 = vadd.f32 %v1953, %v2061
        %s2066 = sld [smem:[#allocation8 + $0x71]]
        %v2067 = vstv %s2066
        %v2068 = vmul.f32 %v2067, %v1376
        %v2069 = vmul.f32 %v2067, %v1377
        %2072 = vrot.lane.b32.xlu0 %v2068, 126
        %v2073 = vpop.permute.xlu0 %2072
        %2074 = vrot.lane.b32.xlu0 %v2069, 126
        %v2075 = vpop.permute.xlu0 %2074
        %v2078 = vadd.f32 %v1966, %v2073
        %v2079 = vadd.f32 %v1967, %v2075
        %s2080 = sld [smem:[#allocation8 + $0x95]]
        %v2081 = vstv %s2080
        %v2082 = vmul.f32 %v2081, %v1376
        %v2083 = vmul.f32 %v2081, %v1377
        %2086 = vrot.lane.b32.xlu0 %v2082, 126
        %v2087 = vpop.permute.xlu0 %2086
        %2088 = vrot.lane.b32.xlu0 %v2083, 126
        %v2089 = vpop.permute.xlu0 %2088
        %v2092 = vadd.f32 %v1980, %v2087
        %v2093 = vadd.f32 %v1981, %v2089
        %s2094 = sld [smem:[#allocation8 + $0xb9]]
        %v2095 = vstv %s2094
        %v2096 = vmul.f32 %v2095, %v1376
        %v2097 = vmul.f32 %v2095, %v1377
        %2100 = vrot.lane.b32.xlu0 %v2096, 126
        %v2101 = vpop.permute.xlu0 %2100
        %2102 = vrot.lane.b32.xlu0 %v2097, 126
        %v2103 = vpop.permute.xlu0 %2102
        %v2106 = vadd.f32 %v1994, %v2101
        %v2107 = vadd.f32 %v1995, %v2103
        %s2108 = sld [smem:[#allocation8 + $0xdd]]
        %v2109 = vstv %s2108
        %v2110 = vmul.f32 %v2109, %v1376
        %v2111 = vmul.f32 %v2109, %v1377
        %2114 = vrot.lane.b32.xlu0 %v2110, 126
        %v2115 = vpop.permute.xlu0 %2114
        %2116 = vrot.lane.b32.xlu0 %v2111, 126
        %v2117 = vpop.permute.xlu0 %2116
        %v2120 = vadd.f32 %v2008, %v2115
        %v2121 = vadd.f32 %v2009, %v2117
        %s2122 = sld [smem:[#allocation8 + $0x101]]
        %v2123 = vstv %s2122
        %v2124 = vmul.f32 %v2123, %v1376
        %v2125 = vmul.f32 %v2123, %v1377
        %2128 = vrot.lane.b32.xlu0 %v2124, 126
        %v2129 = vpop.permute.xlu0 %2128
        %2130 = vrot.lane.b32.xlu0 %v2125, 126
        %v2131 = vpop.permute.xlu0 %2130
        %v2134 = vadd.f32 %v2022, %v2129
        %v2135 = vadd.f32 %v2023, %v2131
        %s2136 = sld [smem:[#allocation8 + $0xe]]
        %v2137 = vstv %s2136
        %v2138 = vmul.f32 %v2137, %v1426
        %v2139 = vmul.f32 %v2137, %v1427
        %2142 = vrot.lane.b32.xlu0 %v2138, 126
        %v2143 = vpop.permute.xlu0 %2142
        %2144 = vrot.lane.b32.xlu0 %v2139, 126
        %v2145 = vpop.permute.xlu0 %2144
        %v2148 = vadd.f32 %v2036, %v2143
        %v2149 = vadd.f32 %v2037, %v2145
        %s2150 = sld [smem:[#allocation8 + $0x32]]
        %v2151 = vstv %s2150
        %v2152 = vmul.f32 %v2151, %v1426
        %v2153 = vmul.f32 %v2151, %v1427
        %2156 = vrot.lane.b32.xlu0 %v2152, 126
        %v2157 = vpop.permute.xlu0 %2156
        %2158 = vrot.lane.b32.xlu0 %v2153, 126
        %v2159 = vpop.permute.xlu0 %2158
        %v2162 = vadd.f32 %v2050, %v2157
        %v2163 = vadd.f32 %v2051, %v2159
        %s2164 = sld [smem:[#allocation8 + $0x56]]
        %v2165 = vstv %s2164
        %v2166 = vmul.f32 %v2165, %v1426
        %v2167 = vmul.f32 %v2165, %v1427
        %2170 = vrot.lane.b32.xlu0 %v2166, 126
        %v2171 = vpop.permute.xlu0 %2170
        %2172 = vrot.lane.b32.xlu0 %v2167, 126
        %v2173 = vpop.permute.xlu0 %2172
        %v2176 = vadd.f32 %v2064, %v2171
        %v2177 = vadd.f32 %v2065, %v2173
        %s2178 = sld [smem:[#allocation8 + $0x7a]]
        %v2179 = vstv %s2178
        %v2180 = vmul.f32 %v2179, %v1426
        %v2181 = vmul.f32 %v2179, %v1427
        %2184 = vrot.lane.b32.xlu0 %v2180, 126
        %v2185 = vpop.permute.xlu0 %2184
        %2186 = vrot.lane.b32.xlu0 %v2181, 126
        %v2187 = vpop.permute.xlu0 %2186
        %v2190 = vadd.f32 %v2078, %v2185
        %v2191 = vadd.f32 %v2079, %v2187
        %s2192 = sld [smem:[#allocation8 + $0x9e]]
        %v2193 = vstv %s2192
        %v2194 = vmul.f32 %v2193, %v1426
        %v2195 = vmul.f32 %v2193, %v1427
        %2198 = vrot.lane.b32.xlu0 %v2194, 126
        %v2199 = vpop.permute.xlu0 %2198
        %2200 = vrot.lane.b32.xlu0 %v2195, 126
        %v2201 = vpop.permute.xlu0 %2200
        %v2204 = vadd.f32 %v2092, %v2199
        %v2205 = vadd.f32 %v2093, %v2201
        %s2206 = sld [smem:[#allocation8 + $0xc2]]
        %v2207 = vstv %s2206
        %v2208 = vmul.f32 %v2207, %v1426
        %v2209 = vmul.f32 %v2207, %v1427
        %2212 = vrot.lane.b32.xlu0 %v2208, 126
        %v2213 = vpop.permute.xlu0 %2212
        %2214 = vrot.lane.b32.xlu0 %v2209, 126
        %v2215 = vpop.permute.xlu0 %2214
        %v2218 = vadd.f32 %v2106, %v2213
        %v2219 = vadd.f32 %v2107, %v2215
        %s2220 = sld [smem:[#allocation8 + $0xe6]]
        %v2221 = vstv %s2220
        %v2222 = vmul.f32 %v2221, %v1426
        %v2223 = vmul.f32 %v2221, %v1427
        %2226 = vrot.lane.b32.xlu0 %v2222, 126
        %v2227 = vpop.permute.xlu0 %2226
        %2228 = vrot.lane.b32.xlu0 %v2223, 126
        %v2229 = vpop.permute.xlu0 %2228
        %v2232 = vadd.f32 %v2120, %v2227
        %v2233 = vadd.f32 %v2121, %v2229
        %s2234 = sld [smem:[#allocation8 + $0x10a]]
        %v2235 = vstv %s2234
        %v2236 = vmul.f32 %v2235, %v1426
        %v2237 = vmul.f32 %v2235, %v1427
        %2240 = vrot.lane.b32.xlu0 %v2236, 126
        %v2241 = vpop.permute.xlu0 %2240
        %2242 = vrot.lane.b32.xlu0 %v2237, 126
        %v2243 = vpop.permute.xlu0 %2242
        %v2246 = vadd.f32 %v2134, %v2241
        %v2247 = vadd.f32 %v2135, %v2243
        %s2248 = sld [smem:[#allocation8 + $0x17]]
        %v2249 = vstv %s2248
        %v2250 = vmul.f32 %v2249, %v1476
        %v2251 = vmul.f32 %v2249, %v1477
        %2254 = vrot.lane.b32.xlu0 %v2250, 126
        %v2255 = vpop.permute.xlu0 %2254
        %2256 = vrot.lane.b32.xlu0 %v2251, 126
        %v2257 = vpop.permute.xlu0 %2256
        %v2260 = vadd.f32 %v2148, %v2255
        %v2261 = vadd.f32 %v2149, %v2257
        %s2262 = sld [smem:[#allocation8 + $0x3b]]
        %v2263 = vstv %s2262
        %v2264 = vmul.f32 %v2263, %v1476
        %v2265 = vmul.f32 %v2263, %v1477
        %2268 = vrot.lane.b32.xlu0 %v2264, 126
        %v2269 = vpop.permute.xlu0 %2268
        %2270 = vrot.lane.b32.xlu0 %v2265, 126
        %v2271 = vpop.permute.xlu0 %2270
        %v2274 = vadd.f32 %v2162, %v2269
        %v2275 = vadd.f32 %v2163, %v2271
        %s2276 = sld [smem:[#allocation8 + $0x5f]]
        %v2277 = vstv %s2276
        %v2278 = vmul.f32 %v2277, %v1476
        %v2279 = vmul.f32 %v2277, %v1477
        %2282 = vrot.lane.b32.xlu0 %v2278, 126
        %v2283 = vpop.permute.xlu0 %2282
        %2284 = vrot.lane.b32.xlu0 %v2279, 126
        %v2285 = vpop.permute.xlu0 %2284
        %v2288 = vadd.f32 %v2176, %v2283
        %v2289 = vadd.f32 %v2177, %v2285
        %s2290 = sld [smem:[#allocation8 + $0x83]]
        %v2291 = vstv %s2290
        %v2292 = vmul.f32 %v2291, %v1476
        %v2293 = vmul.f32 %v2291, %v1477
        %2296 = vrot.lane.b32.xlu0 %v2292, 126
        %v2297 = vpop.permute.xlu0 %2296
        %2298 = vrot.lane.b32.xlu0 %v2293, 126
        %v2299 = vpop.permute.xlu0 %2298
        %v2302 = vadd.f32 %v2190, %v2297
        %v2303 = vadd.f32 %v2191, %v2299
        %s2304 = sld [smem:[#allocation8 + $0xa7]]
        %v2305 = vstv %s2304
        %v2306 = vmul.f32 %v2305, %v1476
        %v2307 = vmul.f32 %v2305, %v1477
        %2310 = vrot.lane.b32.xlu0 %v2306, 126
        %v2311 = vpop.permute.xlu0 %2310
        %2312 = vrot.lane.b32.xlu0 %v2307, 126
        %v2313 = vpop.permute.xlu0 %2312
        %v2316 = vadd.f32 %v2204, %v2311
        %v2317 = vadd.f32 %v2205, %v2313
        %s2318 = sld [smem:[#allocation8 + $0xcb]]
        %v2319 = vstv %s2318
        %v2320 = vmul.f32 %v2319, %v1476
        %v2321 = vmul.f32 %v2319, %v1477
        %2324 = vrot.lane.b32.xlu0 %v2320, 126
        %v2325 = vpop.permute.xlu0 %2324
        %2326 = vrot.lane.b32.xlu0 %v2321, 126
        %v2327 = vpop.permute.xlu0 %2326
        %v2330 = vadd.f32 %v2218, %v2325
        %v2331 = vadd.f32 %v2219, %v2327
        %s2332 = sld [smem:[#allocation8 + $0xef]]
        %v2333 = vstv %s2332
        %v2334 = vmul.f32 %v2333, %v1476
        %v2335 = vmul.f32 %v2333, %v1477
        %2338 = vrot.lane.b32.xlu0 %v2334, 126
        %v2339 = vpop.permute.xlu0 %2338
        %2340 = vrot.lane.b32.xlu0 %v2335, 126
        %v2341 = vpop.permute.xlu0 %2340
        %v2344 = vadd.f32 %v2232, %v2339
        %v2345 = vadd.f32 %v2233, %v2341
        %s2346 = sld [smem:[#allocation8 + $0x113]]
        %v2347 = vstv %s2346
        %v2348 = vmul.f32 %v2347, %v1476
        %v2349 = vmul.f32 %v2347, %v1477
        %2352 = vrot.lane.b32.xlu0 %v2348, 126
        %v2353 = vpop.permute.xlu0 %2352
        %2354 = vrot.lane.b32.xlu0 %v2349, 126
        %v2355 = vpop.permute.xlu0 %2354
        %v2358 = vadd.f32 %v2246, %v2353
        %v2359 = vadd.f32 %v2247, %v2355
        %s2360 = sld [smem:[#allocation8 + $0x20]]
        %v2361 = vstv %s2360
        %v2362 = vmul.f32 %v2361, %v1526
        %v2363 = vmul.f32 %v2361, %v1527
        %2366 = vrot.lane.b32.xlu0 %v2362, 126
        %v2367 = vpop.permute.xlu0 %2366
        %2368 = vrot.lane.b32.xlu0 %v2363, 126
        %v2369 = vpop.permute.xlu0 %2368
        %v2372 = vadd.f32 %v2260, %v2367
        %v2373 = vadd.f32 %v2261, %v2369
        %s2374 = sld [smem:[#allocation8 + $0x44]]
        %v2375 = vstv %s2374
        %v2376 = vmul.f32 %v2375, %v1526
        %v2377 = vmul.f32 %v2375, %v1527
        %2380 = vrot.lane.b32.xlu0 %v2376, 126
        %v2381 = vpop.permute.xlu0 %2380
        %2382 = vrot.lane.b32.xlu0 %v2377, 126
        %v2383 = vpop.permute.xlu0 %2382
        %v2386 = vadd.f32 %v2274, %v2381
        %v2387 = vadd.f32 %v2275, %v2383
        %s2388 = sld [smem:[#allocation8 + $0x68]]
        %v2389 = vstv %s2388
        %v2390 = vmul.f32 %v2389, %v1526
        %v2391 = vmul.f32 %v2389, %v1527
        %2394 = vrot.lane.b32.xlu0 %v2390, 126
        %v2395 = vpop.permute.xlu0 %2394
        %2396 = vrot.lane.b32.xlu0 %v2391, 126
        %v2397 = vpop.permute.xlu0 %2396
        %v2400 = vadd.f32 %v2288, %v2395
        %v2401 = vadd.f32 %v2289, %v2397
        %s2402 = sld [smem:[#allocation8 + $0x8c]]
        %v2403 = vstv %s2402
        %v2404 = vmul.f32 %v2403, %v1526
        %v2405 = vmul.f32 %v2403, %v1527
        %2408 = vrot.lane.b32.xlu0 %v2404, 126
        %v2409 = vpop.permute.xlu0 %2408
        %2410 = vrot.lane.b32.xlu0 %v2405, 126
        %v2411 = vpop.permute.xlu0 %2410
        %v2414 = vadd.f32 %v2302, %v2409
        %v2415 = vadd.f32 %v2303, %v2411
        %s2416 = sld [smem:[#allocation8 + $0xb0]]
        %v2417 = vstv %s2416
        %v2418 = vmul.f32 %v2417, %v1526
        %v2419 = vmul.f32 %v2417, %v1527
        %2422 = vrot.lane.b32.xlu0 %v2418, 126
        %v2423 = vpop.permute.xlu0 %2422
        %2424 = vrot.lane.b32.xlu0 %v2419, 126
        %v2425 = vpop.permute.xlu0 %2424
        %v2428 = vadd.f32 %v2316, %v2423
        %v2429 = vadd.f32 %v2317, %v2425
        %s2430 = sld [smem:[#allocation8 + $0xd4]]
        %v2431 = vstv %s2430
        %v2432 = vmul.f32 %v2431, %v1526
        %v2433 = vmul.f32 %v2431, %v1527
        %2436 = vrot.lane.b32.xlu0 %v2432, 126
        %v2437 = vpop.permute.xlu0 %2436
        %2438 = vrot.lane.b32.xlu0 %v2433, 126
        %v2439 = vpop.permute.xlu0 %2438
        %v2442 = vadd.f32 %v2330, %v2437
        %v2443 = vadd.f32 %v2331, %v2439
        %s2444 = sld [smem:[#allocation8 + $0xf8]]
        %v2445 = vstv %s2444
        %v2446 = vmul.f32 %v2445, %v1526
        %v2447 = vmul.f32 %v2445, %v1527
        %2450 = vrot.lane.b32.xlu0 %v2446, 126
        %v2451 = vpop.permute.xlu0 %2450
        %2452 = vrot.lane.b32.xlu0 %v2447, 126
        %v2453 = vpop.permute.xlu0 %2452
        %v2456 = vadd.f32 %v2344, %v2451
        %v2457 = vadd.f32 %v2345, %v2453
        %s2458 = sld [smem:[#allocation8 + $0x11c]]
        %v2459 = vstv %s2458
        %v2460 = vmul.f32 %v2459, %v1526
        %v2461 = vmul.f32 %v2459, %v1527
        %2464 = vrot.lane.b32.xlu0 %v2460, 126
        %v2465 = vpop.permute.xlu0 %2464
        %2466 = vrot.lane.b32.xlu0 %v2461, 126
        %v2467 = vpop.permute.xlu0 %2466
        %v2470 = vadd.f32 %v2358, %v2465
        %v2471 = vadd.f32 %v2359, %v2467
        %v2472 = vld [vmem:[#allocation2 + $0x2] sm:$0xff]
        %v2473 = vld [vmem:[#allocation2 + $0xa] sm:$0xff]
        %s2474 = sld [smem:[#allocation8 + $0x6]]
        %v2475 = vstv %s2474
        %v2476 = vmul.f32 %v2475, %v2472
        %v2477 = vmul.f32 %v2475, %v2473
        %v2478 = vadd.f32 %v2372, %v2476
        %v2479 = vadd.f32 %v2373, %v2477
        %s2480 = sld [smem:[#allocation8 + $0x2a]]
        %v2481 = vstv %s2480
        %v2482 = vmul.f32 %v2481, %v2472
        %v2483 = vmul.f32 %v2481, %v2473
        %v2484 = vadd.f32 %v2386, %v2482
        %v2485 = vadd.f32 %v2387, %v2483
        %s2486 = sld [smem:[#allocation8 + $0x4e]]
        %v2487 = vstv %s2486
        %v2488 = vmul.f32 %v2487, %v2472
        %v2489 = vmul.f32 %v2487, %v2473
        %v2490 = vadd.f32 %v2400, %v2488
        %v2491 = vadd.f32 %v2401, %v2489
        %s2492 = sld [smem:[#allocation8 + $0x72]]
        %v2493 = vstv %s2492
        %v2494 = vmul.f32 %v2493, %v2472
        %v2495 = vmul.f32 %v2493, %v2473
        %v2496 = vadd.f32 %v2414, %v2494
        %v2497 = vadd.f32 %v2415, %v2495
        %s2498 = sld [smem:[#allocation8 + $0x96]]
        %v2499 = vstv %s2498
        %v2500 = vmul.f32 %v2499, %v2472
        %v2501 = vmul.f32 %v2499, %v2473
        %v2502 = vadd.f32 %v2428, %v2500
        %v2503 = vadd.f32 %v2429, %v2501
        %s2504 = sld [smem:[#allocation8 + $0xba]]
        %v2505 = vstv %s2504
        %v2506 = vmul.f32 %v2505, %v2472
        %v2507 = vmul.f32 %v2505, %v2473
        %v2508 = vadd.f32 %v2442, %v2506
        %v2509 = vadd.f32 %v2443, %v2507
        %s2510 = sld [smem:[#allocation8 + $0xde]]
        %v2511 = vstv %s2510
        %v2512 = vmul.f32 %v2511, %v2472
        %v2513 = vmul.f32 %v2511, %v2473
        %v2514 = vadd.f32 %v2456, %v2512
        %v2515 = vadd.f32 %v2457, %v2513
        %s2516 = sld [smem:[#allocation8 + $0x102]]
        %v2517 = vstv %s2516
        %v2518 = vmul.f32 %v2517, %v2472
        %v2519 = vmul.f32 %v2517, %v2473
        %v2520 = vadd.f32 %v2470, %v2518
        %v2521 = vadd.f32 %v2471, %v2519
        %v2522 = vld [vmem:[%s327 + $0x2] sm:$0xff]
        %v2523 = vld [vmem:[%s327 + $0xa] sm:$0xff]
        %s2524 = sld [smem:[#allocation8 + $0xf]]
        %v2525 = vstv %s2524
        %v2526 = vmul.f32 %v2525, %v2522
        %v2527 = vmul.f32 %v2525, %v2523
        %v2528 = vadd.f32 %v2478, %v2526
        %v2529 = vadd.f32 %v2479, %v2527
        %s2530 = sld [smem:[#allocation8 + $0x33]]
        %v2531 = vstv %s2530
        %v2532 = vmul.f32 %v2531, %v2522
        %v2533 = vmul.f32 %v2531, %v2523
        %v2534 = vadd.f32 %v2484, %v2532
        %v2535 = vadd.f32 %v2485, %v2533
        %s2536 = sld [smem:[#allocation8 + $0x57]]
        %v2537 = vstv %s2536
        %v2538 = vmul.f32 %v2537, %v2522
        %v2539 = vmul.f32 %v2537, %v2523
        %v2540 = vadd.f32 %v2490, %v2538
        %v2541 = vadd.f32 %v2491, %v2539
        %s2542 = sld [smem:[#allocation8 + $0x7b]]
        %v2543 = vstv %s2542
        %v2544 = vmul.f32 %v2543, %v2522
        %v2545 = vmul.f32 %v2543, %v2523
        %v2546 = vadd.f32 %v2496, %v2544
        %v2547 = vadd.f32 %v2497, %v2545
        %s2548 = sld [smem:[#allocation8 + $0x9f]]
        %v2549 = vstv %s2548
        %v2550 = vmul.f32 %v2549, %v2522
        %v2551 = vmul.f32 %v2549, %v2523
        %v2552 = vadd.f32 %v2502, %v2550
        %v2553 = vadd.f32 %v2503, %v2551
        %s2554 = sld [smem:[#allocation8 + $0xc3]]
        %v2555 = vstv %s2554
        %v2556 = vmul.f32 %v2555, %v2522
        %v2557 = vmul.f32 %v2555, %v2523
        %v2558 = vadd.f32 %v2508, %v2556
        %v2559 = vadd.f32 %v2509, %v2557
        %s2560 = sld [smem:[#allocation8 + $0xe7]]
        %v2561 = vstv %s2560
        %v2562 = vmul.f32 %v2561, %v2522
        %v2563 = vmul.f32 %v2561, %v2523
        %v2564 = vadd.f32 %v2514, %v2562
        %v2565 = vadd.f32 %v2515, %v2563
        %s2566 = sld [smem:[#allocation8 + $0x10b]]
        %v2567 = vstv %s2566
        %v2568 = vmul.f32 %v2567, %v2522
        %v2569 = vmul.f32 %v2567, %v2523
        %v2570 = vadd.f32 %v2520, %v2568
        %v2571 = vadd.f32 %v2521, %v2569
        %v2572 = vld [vmem:[%s378 + $0x2] sm:$0xff]
        %v2573 = vld [vmem:[%s378 + $0xa] sm:$0xff]
        %s2574 = sld [smem:[#allocation8 + $0x18]]
        %v2575 = vstv %s2574
        %v2576 = vmul.f32 %v2575, %v2572
        %v2577 = vmul.f32 %v2575, %v2573
        %v2578 = vadd.f32 %v2528, %v2576
        %v2579 = vadd.f32 %v2529, %v2577
        %s2580 = sld [smem:[#allocation8 + $0x3c]]
        %v2581 = vstv %s2580
        %v2582 = vmul.f32 %v2581, %v2572
        %v2583 = vmul.f32 %v2581, %v2573
        %v2584 = vadd.f32 %v2534, %v2582
        %v2585 = vadd.f32 %v2535, %v2583
        %s2586 = sld [smem:[#allocation8 + $0x60]]
        %v2587 = vstv %s2586
        %v2588 = vmul.f32 %v2587, %v2572
        %v2589 = vmul.f32 %v2587, %v2573
        %v2590 = vadd.f32 %v2540, %v2588
        %v2591 = vadd.f32 %v2541, %v2589
        %s2592 = sld [smem:[#allocation8 + $0x84]]
        %v2593 = vstv %s2592
        %v2594 = vmul.f32 %v2593, %v2572
        %v2595 = vmul.f32 %v2593, %v2573
        %v2596 = vadd.f32 %v2546, %v2594
        %v2597 = vadd.f32 %v2547, %v2595
        %s2598 = sld [smem:[#allocation8 + $0xa8]]
        %v2599 = vstv %s2598
        %v2600 = vmul.f32 %v2599, %v2572
        %v2601 = vmul.f32 %v2599, %v2573
        %v2602 = vadd.f32 %v2552, %v2600
        %v2603 = vadd.f32 %v2553, %v2601
        %s2604 = sld [smem:[#allocation8 + $0xcc]]
        %v2605 = vstv %s2604
        %v2606 = vmul.f32 %v2605, %v2572
        %v2607 = vmul.f32 %v2605, %v2573
        %v2608 = vadd.f32 %v2558, %v2606
        %v2609 = vadd.f32 %v2559, %v2607
        %s2610 = sld [smem:[#allocation8 + $0xf0]]
        %v2611 = vstv %s2610
        %v2612 = vmul.f32 %v2611, %v2572
        %v2613 = vmul.f32 %v2611, %v2573
        %v2614 = vadd.f32 %v2564, %v2612
        %v2615 = vadd.f32 %v2565, %v2613
        %s2616 = sld [smem:[#allocation8 + $0x114]]
        %v2617 = vstv %s2616
        %v2618 = vmul.f32 %v2617, %v2572
        %v2619 = vmul.f32 %v2617, %v2573
        %v2620 = vadd.f32 %v2570, %v2618
        %v2621 = vadd.f32 %v2571, %v2619
        %v2622 = vld [vmem:[%s429 + $0x2] sm:$0xff]
        %v2623 = vld [vmem:[%s429 + $0xa] sm:$0xff]
        %s2624 = sld [smem:[#allocation8 + $0x21]]
        %v2625 = vstv %s2624
        %v2626 = vmul.f32 %v2625, %v2622
        %v2627 = vmul.f32 %v2625, %v2623
        %v2628 = vadd.f32 %v2578, %v2626
        %v2629 = vadd.f32 %v2579, %v2627
        %s2630 = sld [smem:[#allocation8 + $0x45]]
        %v2631 = vstv %s2630
        %v2632 = vmul.f32 %v2631, %v2622
        %v2633 = vmul.f32 %v2631, %v2623
        %v2634 = vadd.f32 %v2584, %v2632
        %v2635 = vadd.f32 %v2585, %v2633
        %s2636 = sld [smem:[#allocation8 + $0x69]]
        %v2637 = vstv %s2636
        %v2638 = vmul.f32 %v2637, %v2622
        %v2639 = vmul.f32 %v2637, %v2623
        %v2640 = vadd.f32 %v2590, %v2638
        %v2641 = vadd.f32 %v2591, %v2639
        %s2642 = sld [smem:[#allocation8 + $0x8d]]
        %v2643 = vstv %s2642
        %v2644 = vmul.f32 %v2643, %v2622
        %v2645 = vmul.f32 %v2643, %v2623
        %v2646 = vadd.f32 %v2596, %v2644
        %v2647 = vadd.f32 %v2597, %v2645
        %s2648 = sld [smem:[#allocation8 + $0xb1]]
        %v2649 = vstv %s2648
        %v2650 = vmul.f32 %v2649, %v2622
        %v2651 = vmul.f32 %v2649, %v2623
        %v2652 = vadd.f32 %v2602, %v2650
        %v2653 = vadd.f32 %v2603, %v2651
        %s2654 = sld [smem:[#allocation8 + $0xd5]]
        %v2655 = vstv %s2654
        %v2656 = vmul.f32 %v2655, %v2622
        %v2657 = vmul.f32 %v2655, %v2623
        %v2658 = vadd.f32 %v2608, %v2656
        %v2659 = vadd.f32 %v2609, %v2657
        %s2660 = sld [smem:[#allocation8 + $0xf9]]
        %v2661 = vstv %s2660
        %v2662 = vmul.f32 %v2661, %v2622
        %v2663 = vmul.f32 %v2661, %v2623
        %v2664 = vadd.f32 %v2614, %v2662
        %v2665 = vadd.f32 %v2615, %v2663
        %s2666 = sld [smem:[#allocation8 + $0x11d]]
        %v2667 = vstv %s2666
        %v2668 = vmul.f32 %v2667, %v2622
        %v2669 = vmul.f32 %v2667, %v2623
        %v2670 = vadd.f32 %v2620, %v2668
        %v2671 = vadd.f32 %v2621, %v2669
        %s2672 = sld [smem:[#allocation8 + $0x7]]
        %v2673 = vstv %s2672
        %v2674 = vmul.f32 %v2673, %v2472
        %v2675 = vmul.f32 %v2673, %v2473
        %2678 = vrot.lane.b32.xlu0 %v2674, 127
        %v2679 = vpop.permute.xlu0 %2678
        %2680 = vrot.lane.b32.xlu0 %v2675, 127
        %v2681 = vpop.permute.xlu0 %2680
        %v2684 = vadd.f32 %v2628, %v2679
        %v2685 = vadd.f32 %v2629, %v2681
        %s2686 = sld [smem:[#allocation8 + $0x2b]]
        %v2687 = vstv %s2686
        %v2688 = vmul.f32 %v2687, %v2472
        %v2689 = vmul.f32 %v2687, %v2473
        %2692 = vrot.lane.b32.xlu0 %v2688, 127
        %v2693 = vpop.permute.xlu0 %2692
        %2694 = vrot.lane.b32.xlu0 %v2689, 127
        %v2695 = vpop.permute.xlu0 %2694
        %v2698 = vadd.f32 %v2634, %v2693
        %v2699 = vadd.f32 %v2635, %v2695
        %s2700 = sld [smem:[#allocation8 + $0x4f]]
        %v2701 = vstv %s2700
        %v2702 = vmul.f32 %v2701, %v2472
        %v2703 = vmul.f32 %v2701, %v2473
        %2706 = vrot.lane.b32.xlu0 %v2702, 127
        %v2707 = vpop.permute.xlu0 %2706
        %2708 = vrot.lane.b32.xlu0 %v2703, 127
        %v2709 = vpop.permute.xlu0 %2708
        %v2712 = vadd.f32 %v2640, %v2707
        %v2713 = vadd.f32 %v2641, %v2709
        %s2714 = sld [smem:[#allocation8 + $0x73]]
        %v2715 = vstv %s2714
        %v2716 = vmul.f32 %v2715, %v2472
        %v2717 = vmul.f32 %v2715, %v2473
        %2720 = vrot.lane.b32.xlu0 %v2716, 127
        %v2721 = vpop.permute.xlu0 %2720
        %2722 = vrot.lane.b32.xlu0 %v2717, 127
        %v2723 = vpop.permute.xlu0 %2722
        %v2726 = vadd.f32 %v2646, %v2721
        %v2727 = vadd.f32 %v2647, %v2723
        %s2728 = sld [smem:[#allocation8 + $0x97]]
        %v2729 = vstv %s2728
        %v2730 = vmul.f32 %v2729, %v2472
        %v2731 = vmul.f32 %v2729, %v2473
        %2734 = vrot.lane.b32.xlu0 %v2730, 127
        %v2735 = vpop.permute.xlu0 %2734
        %2736 = vrot.lane.b32.xlu0 %v2731, 127
        %v2737 = vpop.permute.xlu0 %2736
        %v2740 = vadd.f32 %v2652, %v2735
        %v2741 = vadd.f32 %v2653, %v2737
        %s2742 = sld [smem:[#allocation8 + $0xbb]]
        %v2743 = vstv %s2742
        %v2744 = vmul.f32 %v2743, %v2472
        %v2745 = vmul.f32 %v2743, %v2473
        %2748 = vrot.lane.b32.xlu0 %v2744, 127
        %v2749 = vpop.permute.xlu0 %2748
        %2750 = vrot.lane.b32.xlu0 %v2745, 127
        %v2751 = vpop.permute.xlu0 %2750
        %v2754 = vadd.f32 %v2658, %v2749
        %v2755 = vadd.f32 %v2659, %v2751
        %s2756 = sld [smem:[#allocation8 + $0xdf]]
        %v2757 = vstv %s2756
        %v2758 = vmul.f32 %v2757, %v2472
        %v2759 = vmul.f32 %v2757, %v2473
        %2762 = vrot.lane.b32.xlu0 %v2758, 127
        %v2763 = vpop.permute.xlu0 %2762
        %2764 = vrot.lane.b32.xlu0 %v2759, 127
        %v2765 = vpop.permute.xlu0 %2764
        %v2768 = vadd.f32 %v2664, %v2763
        %v2769 = vadd.f32 %v2665, %v2765
        %s2770 = sld [smem:[#allocation8 + $0x103]]
        %v2771 = vstv %s2770
        %v2772 = vmul.f32 %v2771, %v2472
        %v2773 = vmul.f32 %v2771, %v2473
        %2776 = vrot.lane.b32.xlu0 %v2772, 127
        %v2777 = vpop.permute.xlu0 %2776
        %2778 = vrot.lane.b32.xlu0 %v2773, 127
        %v2779 = vpop.permute.xlu0 %2778
        %v2782 = vadd.f32 %v2670, %v2777
        %v2783 = vadd.f32 %v2671, %v2779
        %s2784 = sld [smem:[#allocation8 + $0x10]]
        %v2785 = vstv %s2784
        %v2786 = vmul.f32 %v2785, %v2522
        %v2787 = vmul.f32 %v2785, %v2523
        %2790 = vrot.lane.b32.xlu0 %v2786, 127
        %v2791 = vpop.permute.xlu0 %2790
        %2792 = vrot.lane.b32.xlu0 %v2787, 127
        %v2793 = vpop.permute.xlu0 %2792
        %v2796 = vadd.f32 %v2684, %v2791
        %v2797 = vadd.f32 %v2685, %v2793
        %s2798 = sld [smem:[#allocation8 + $0x34]]
        %v2799 = vstv %s2798
        %v2800 = vmul.f32 %v2799, %v2522
        %v2801 = vmul.f32 %v2799, %v2523
        %2804 = vrot.lane.b32.xlu0 %v2800, 127
        %v2805 = vpop.permute.xlu0 %2804
        %2806 = vrot.lane.b32.xlu0 %v2801, 127
        %v2807 = vpop.permute.xlu0 %2806
        %v2810 = vadd.f32 %v2698, %v2805
        %v2811 = vadd.f32 %v2699, %v2807
        %s2812 = sld [smem:[#allocation8 + $0x58]]
        %v2813 = vstv %s2812
        %v2814 = vmul.f32 %v2813, %v2522
        %v2815 = vmul.f32 %v2813, %v2523
        %2818 = vrot.lane.b32.xlu0 %v2814, 127
        %v2819 = vpop.permute.xlu0 %2818
        %2820 = vrot.lane.b32.xlu0 %v2815, 127
        %v2821 = vpop.permute.xlu0 %2820
        %v2824 = vadd.f32 %v2712, %v2819
        %v2825 = vadd.f32 %v2713, %v2821
        %s2826 = sld [smem:[#allocation8 + $0x7c]]
        %v2827 = vstv %s2826
        %v2828 = vmul.f32 %v2827, %v2522
        %v2829 = vmul.f32 %v2827, %v2523
        %2832 = vrot.lane.b32.xlu0 %v2828, 127
        %v2833 = vpop.permute.xlu0 %2832
        %2834 = vrot.lane.b32.xlu0 %v2829, 127
        %v2835 = vpop.permute.xlu0 %2834
        %v2838 = vadd.f32 %v2726, %v2833
        %v2839 = vadd.f32 %v2727, %v2835
        %s2840 = sld [smem:[#allocation8 + $0xa0]]
        %v2841 = vstv %s2840
        %v2842 = vmul.f32 %v2841, %v2522
        %v2843 = vmul.f32 %v2841, %v2523
        %2846 = vrot.lane.b32.xlu0 %v2842, 127
        %v2847 = vpop.permute.xlu0 %2846
        %2848 = vrot.lane.b32.xlu0 %v2843, 127
        %v2849 = vpop.permute.xlu0 %2848
        %v2852 = vadd.f32 %v2740, %v2847
        %v2853 = vadd.f32 %v2741, %v2849
        %s2854 = sld [smem:[#allocation8 + $0xc4]]
        %v2855 = vstv %s2854
        %v2856 = vmul.f32 %v2855, %v2522
        %v2857 = vmul.f32 %v2855, %v2523
        %2860 = vrot.lane.b32.xlu0 %v2856, 127
        %v2861 = vpop.permute.xlu0 %2860
        %2862 = vrot.lane.b32.xlu0 %v2857, 127
        %v2863 = vpop.permute.xlu0 %2862
        %v2866 = vadd.f32 %v2754, %v2861
        %v2867 = vadd.f32 %v2755, %v2863
        %s2868 = sld [smem:[#allocation8 + $0xe8]]
        %v2869 = vstv %s2868
        %v2870 = vmul.f32 %v2869, %v2522
        %v2871 = vmul.f32 %v2869, %v2523
        %2874 = vrot.lane.b32.xlu0 %v2870, 127
        %v2875 = vpop.permute.xlu0 %2874
        %2876 = vrot.lane.b32.xlu0 %v2871, 127
        %v2877 = vpop.permute.xlu0 %2876
        %v2880 = vadd.f32 %v2768, %v2875
        %v2881 = vadd.f32 %v2769, %v2877
        %s2882 = sld [smem:[#allocation8 + $0x10c]]
        %v2883 = vstv %s2882
        %v2884 = vmul.f32 %v2883, %v2522
        %v2885 = vmul.f32 %v2883, %v2523
        %2888 = vrot.lane.b32.xlu0 %v2884, 127
        %v2889 = vpop.permute.xlu0 %2888
        %2890 = vrot.lane.b32.xlu0 %v2885, 127
        %v2891 = vpop.permute.xlu0 %2890
        %v2894 = vadd.f32 %v2782, %v2889
        %v2895 = vadd.f32 %v2783, %v2891
        %s2896 = sld [smem:[#allocation8 + $0x19]]
        %v2897 = vstv %s2896
        %v2898 = vmul.f32 %v2897, %v2572
        %v2899 = vmul.f32 %v2897, %v2573
        %2902 = vrot.lane.b32.xlu0 %v2898, 127
        %v2903 = vpop.permute.xlu0 %2902
        %2904 = vrot.lane.b32.xlu0 %v2899, 127
        %v2905 = vpop.permute.xlu0 %2904
        %v2908 = vadd.f32 %v2796, %v2903
        %v2909 = vadd.f32 %v2797, %v2905
        %s2910 = sld [smem:[#allocation8 + $0x3d]]
        %v2911 = vstv %s2910
        %v2912 = vmul.f32 %v2911, %v2572
        %v2913 = vmul.f32 %v2911, %v2573
        %2916 = vrot.lane.b32.xlu0 %v2912, 127
        %v2917 = vpop.permute.xlu0 %2916
        %2918 = vrot.lane.b32.xlu0 %v2913, 127
        %v2919 = vpop.permute.xlu0 %2918
        %v2922 = vadd.f32 %v2810, %v2917
        %v2923 = vadd.f32 %v2811, %v2919
        %s2924 = sld [smem:[#allocation8 + $0x61]]
        %v2925 = vstv %s2924
        %v2926 = vmul.f32 %v2925, %v2572
        %v2927 = vmul.f32 %v2925, %v2573
        %2930 = vrot.lane.b32.xlu0 %v2926, 127
        %v2931 = vpop.permute.xlu0 %2930
        %2932 = vrot.lane.b32.xlu0 %v2927, 127
        %v2933 = vpop.permute.xlu0 %2932
        %v2936 = vadd.f32 %v2824, %v2931
        %v2937 = vadd.f32 %v2825, %v2933
        %s2938 = sld [smem:[#allocation8 + $0x85]]
        %v2939 = vstv %s2938
        %v2940 = vmul.f32 %v2939, %v2572
        %v2941 = vmul.f32 %v2939, %v2573
        %2944 = vrot.lane.b32.xlu0 %v2940, 127
        %v2945 = vpop.permute.xlu0 %2944
        %2946 = vrot.lane.b32.xlu0 %v2941, 127
        %v2947 = vpop.permute.xlu0 %2946
        %v2950 = vadd.f32 %v2838, %v2945
        %v2951 = vadd.f32 %v2839, %v2947
        %s2952 = sld [smem:[#allocation8 + $0xa9]]
        %v2953 = vstv %s2952
        %v2954 = vmul.f32 %v2953, %v2572
        %v2955 = vmul.f32 %v2953, %v2573
        %2958 = vrot.lane.b32.xlu0 %v2954, 127
        %v2959 = vpop.permute.xlu0 %2958
        %2960 = vrot.lane.b32.xlu0 %v2955, 127
        %v2961 = vpop.permute.xlu0 %2960
        %v2964 = vadd.f32 %v2852, %v2959
        %v2965 = vadd.f32 %v2853, %v2961
        %s2966 = sld [smem:[#allocation8 + $0xcd]]
        %v2967 = vstv %s2966
        %v2968 = vmul.f32 %v2967, %v2572
        %v2969 = vmul.f32 %v2967, %v2573
        %2972 = vrot.lane.b32.xlu0 %v2968, 127
        %v2973 = vpop.permute.xlu0 %2972
        %2974 = vrot.lane.b32.xlu0 %v2969, 127
        %v2975 = vpop.permute.xlu0 %2974
        %v2978 = vadd.f32 %v2866, %v2973
        %v2979 = vadd.f32 %v2867, %v2975
        %s2980 = sld [smem:[#allocation8 + $0xf1]]
        %v2981 = vstv %s2980
        %v2982 = vmul.f32 %v2981, %v2572
        %v2983 = vmul.f32 %v2981, %v2573
        %2986 = vrot.lane.b32.xlu0 %v2982, 127
        %v2987 = vpop.permute.xlu0 %2986
        %2988 = vrot.lane.b32.xlu0 %v2983, 127
        %v2989 = vpop.permute.xlu0 %2988
        %v2992 = vadd.f32 %v2880, %v2987
        %v2993 = vadd.f32 %v2881, %v2989
        %s2994 = sld [smem:[#allocation8 + $0x115]]
        %v2995 = vstv %s2994
        %v2996 = vmul.f32 %v2995, %v2572
        %v2997 = vmul.f32 %v2995, %v2573
        %3000 = vrot.lane.b32.xlu0 %v2996, 127
        %v3001 = vpop.permute.xlu0 %3000
        %3002 = vrot.lane.b32.xlu0 %v2997, 127
        %v3003 = vpop.permute.xlu0 %3002
        %v3006 = vadd.f32 %v2894, %v3001
        %v3007 = vadd.f32 %v2895, %v3003
        %s3008 = sld [smem:[#allocation8 + $0x22]]
        %v3009 = vstv %s3008
        %v3010 = vmul.f32 %v3009, %v2622
        %v3011 = vmul.f32 %v3009, %v2623
        %3014 = vrot.lane.b32.xlu0 %v3010, 127
        %v3015 = vpop.permute.xlu0 %3014
        %3016 = vrot.lane.b32.xlu0 %v3011, 127
        %v3017 = vpop.permute.xlu0 %3016
        %v3020 = vadd.f32 %v2908, %v3015
        %v3021 = vadd.f32 %v2909, %v3017
        %s3022 = sld [smem:[#allocation8 + $0x46]]
        %v3023 = vstv %s3022
        %v3024 = vmul.f32 %v3023, %v2622
        %v3025 = vmul.f32 %v3023, %v2623
        %3028 = vrot.lane.b32.xlu0 %v3024, 127
        %v3029 = vpop.permute.xlu0 %3028
        %3030 = vrot.lane.b32.xlu0 %v3025, 127
        %v3031 = vpop.permute.xlu0 %3030
        %v3034 = vadd.f32 %v2922, %v3029
        %v3035 = vadd.f32 %v2923, %v3031
        %s3036 = sld [smem:[#allocation8 + $0x6a]]
        %v3037 = vstv %s3036
        %v3038 = vmul.f32 %v3037, %v2622
        %v3039 = vmul.f32 %v3037, %v2623
        %3042 = vrot.lane.b32.xlu0 %v3038, 127
        %v3043 = vpop.permute.xlu0 %3042
        %3044 = vrot.lane.b32.xlu0 %v3039, 127
        %v3045 = vpop.permute.xlu0 %3044
        %v3048 = vadd.f32 %v2936, %v3043
        %v3049 = vadd.f32 %v2937, %v3045
        %s3050 = sld [smem:[#allocation8 + $0x8e]]
        %v3051 = vstv %s3050
        %v3052 = vmul.f32 %v3051, %v2622
        %v3053 = vmul.f32 %v3051, %v2623
        %3056 = vrot.lane.b32.xlu0 %v3052, 127
        %v3057 = vpop.permute.xlu0 %3056
        %3058 = vrot.lane.b32.xlu0 %v3053, 127
        %v3059 = vpop.permute.xlu0 %3058
        %v3062 = vadd.f32 %v2950, %v3057
        %v3063 = vadd.f32 %v2951, %v3059
        %s3064 = sld [smem:[#allocation8 + $0xb2]]
        %v3065 = vstv %s3064
        %v3066 = vmul.f32 %v3065, %v2622
        %v3067 = vmul.f32 %v3065, %v2623
        %3070 = vrot.lane.b32.xlu0 %v3066, 127
        %v3071 = vpop.permute.xlu0 %3070
        %3072 = vrot.lane.b32.xlu0 %v3067, 127
        %v3073 = vpop.permute.xlu0 %3072
        %v3076 = vadd.f32 %v2964, %v3071
        %v3077 = vadd.f32 %v2965, %v3073
        %s3078 = sld [smem:[#allocation8 + $0xd6]]
        %v3079 = vstv %s3078
        %v3080 = vmul.f32 %v3079, %v2622
        %v3081 = vmul.f32 %v3079, %v2623
        %3084 = vrot.lane.b32.xlu0 %v3080, 127
        %v3085 = vpop.permute.xlu0 %3084
        %3086 = vrot.lane.b32.xlu0 %v3081, 127
        %v3087 = vpop.permute.xlu0 %3086
        %v3090 = vadd.f32 %v2978, %v3085
        %v3091 = vadd.f32 %v2979, %v3087
        %s3092 = sld [smem:[#allocation8 + $0xfa]]
        %v3093 = vstv %s3092
        %v3094 = vmul.f32 %v3093, %v2622
        %v3095 = vmul.f32 %v3093, %v2623
        %3098 = vrot.lane.b32.xlu0 %v3094, 127
        %v3099 = vpop.permute.xlu0 %3098
        %3100 = vrot.lane.b32.xlu0 %v3095, 127
        %v3101 = vpop.permute.xlu0 %3100
        %v3104 = vadd.f32 %v2992, %v3099
        %v3105 = vadd.f32 %v2993, %v3101
        %s3106 = sld [smem:[#allocation8 + $0x11e]]
        %v3107 = vstv %s3106
        %v3108 = vmul.f32 %v3107, %v2622
        %v3109 = vmul.f32 %v3107, %v2623
        %3112 = vrot.lane.b32.xlu0 %v3108, 127
        %v3113 = vpop.permute.xlu0 %3112
        %3114 = vrot.lane.b32.xlu0 %v3109, 127
        %v3115 = vpop.permute.xlu0 %3114
        %v3118 = vadd.f32 %v3006, %v3113
        %v3119 = vadd.f32 %v3007, %v3115
        %s3120 = sld [smem:[#allocation8 + $0x8]]
        %v3121 = vstv %s3120
        %v3122 = vmul.f32 %v3121, %v2472
        %v3123 = vmul.f32 %v3121, %v2473
        %3126 = vrot.lane.b32.xlu0 %v3122, 126
        %v3127 = vpop.permute.xlu0 %3126
        %3128 = vrot.lane.b32.xlu0 %v3123, 126
        %v3129 = vpop.permute.xlu0 %3128
        %v3132 = vadd.f32 %v3020, %v3127
        %v3133 = vadd.f32 %v3021, %v3129
        %s3134 = sld [smem:[#allocation8 + $0x2c]]
        %v3135 = vstv %s3134
        %v3136 = vmul.f32 %v3135, %v2472
        %v3137 = vmul.f32 %v3135, %v2473
        %3140 = vrot.lane.b32.xlu0 %v3136, 126
        %v3141 = vpop.permute.xlu0 %3140
        %3142 = vrot.lane.b32.xlu0 %v3137, 126
        %v3143 = vpop.permute.xlu0 %3142
        %v3146 = vadd.f32 %v3034, %v3141
        %v3147 = vadd.f32 %v3035, %v3143
        %s3148 = sld [smem:[#allocation8 + $0x50]]
        %v3149 = vstv %s3148
        %v3150 = vmul.f32 %v3149, %v2472
        %v3151 = vmul.f32 %v3149, %v2473
        %3154 = vrot.lane.b32.xlu0 %v3150, 126
        %v3155 = vpop.permute.xlu0 %3154
        %3156 = vrot.lane.b32.xlu0 %v3151, 126
        %v3157 = vpop.permute.xlu0 %3156
        %v3160 = vadd.f32 %v3048, %v3155
        %v3161 = vadd.f32 %v3049, %v3157
        %s3162 = sld [smem:[#allocation8 + $0x74]]
        %v3163 = vstv %s3162
        %v3164 = vmul.f32 %v3163, %v2472
        %v3165 = vmul.f32 %v3163, %v2473
        %3168 = vrot.lane.b32.xlu0 %v3164, 126
        %v3169 = vpop.permute.xlu0 %3168
        %3170 = vrot.lane.b32.xlu0 %v3165, 126
        %v3171 = vpop.permute.xlu0 %3170
        %v3174 = vadd.f32 %v3062, %v3169
        %v3175 = vadd.f32 %v3063, %v3171
        %s3176 = sld [smem:[#allocation8 + $0x98]]
        %v3177 = vstv %s3176
        %v3178 = vmul.f32 %v3177, %v2472
        %v3179 = vmul.f32 %v3177, %v2473
        %3182 = vrot.lane.b32.xlu0 %v3178, 126
        %v3183 = vpop.permute.xlu0 %3182
        %3184 = vrot.lane.b32.xlu0 %v3179, 126
        %v3185 = vpop.permute.xlu0 %3184
        %v3188 = vadd.f32 %v3076, %v3183
        %v3189 = vadd.f32 %v3077, %v3185
        %s3190 = sld [smem:[#allocation8 + $0xbc]]
        %v3191 = vstv %s3190
        %v3192 = vmul.f32 %v3191, %v2472
        %v3193 = vmul.f32 %v3191, %v2473
        %3196 = vrot.lane.b32.xlu0 %v3192, 126
        %v3197 = vpop.permute.xlu0 %3196
        %3198 = vrot.lane.b32.xlu0 %v3193, 126
        %v3199 = vpop.permute.xlu0 %3198
        %v3202 = vadd.f32 %v3090, %v3197
        %v3203 = vadd.f32 %v3091, %v3199
        %s3204 = sld [smem:[#allocation8 + $0xe0]]
        %v3205 = vstv %s3204
        %v3206 = vmul.f32 %v3205, %v2472
        %v3207 = vmul.f32 %v3205, %v2473
        %3210 = vrot.lane.b32.xlu0 %v3206, 126
        %v3211 = vpop.permute.xlu0 %3210
        %3212 = vrot.lane.b32.xlu0 %v3207, 126
        %v3213 = vpop.permute.xlu0 %3212
        %v3216 = vadd.f32 %v3104, %v3211
        %v3217 = vadd.f32 %v3105, %v3213
        %s3218 = sld [smem:[#allocation8 + $0x104]]
        %v3219 = vstv %s3218
        %v3220 = vmul.f32 %v3219, %v2472
        %v3221 = vmul.f32 %v3219, %v2473
        %3224 = vrot.lane.b32.xlu0 %v3220, 126
        %v3225 = vpop.permute.xlu0 %3224
        %3226 = vrot.lane.b32.xlu0 %v3221, 126
        %v3227 = vpop.permute.xlu0 %3226
        %v3230 = vadd.f32 %v3118, %v3225
        %v3231 = vadd.f32 %v3119, %v3227
        %s3232 = sld [smem:[#allocation8 + $0x11]]
        %v3233 = vstv %s3232
        %v3234 = vmul.f32 %v3233, %v2522
        %v3235 = vmul.f32 %v3233, %v2523
        %3238 = vrot.lane.b32.xlu0 %v3234, 126
        %v3239 = vpop.permute.xlu0 %3238
        %3240 = vrot.lane.b32.xlu0 %v3235, 126
        %v3241 = vpop.permute.xlu0 %3240
        %v3244 = vadd.f32 %v3132, %v3239
        %v3245 = vadd.f32 %v3133, %v3241
        %s3246 = sld [smem:[#allocation8 + $0x35]]
        %v3247 = vstv %s3246
        %v3248 = vmul.f32 %v3247, %v2522
        %v3249 = vmul.f32 %v3247, %v2523
        %3252 = vrot.lane.b32.xlu0 %v3248, 126
        %v3253 = vpop.permute.xlu0 %3252
        %3254 = vrot.lane.b32.xlu0 %v3249, 126
        %v3255 = vpop.permute.xlu0 %3254
        %v3258 = vadd.f32 %v3146, %v3253
        %v3259 = vadd.f32 %v3147, %v3255
        %s3260 = sld [smem:[#allocation8 + $0x59]]
        %v3261 = vstv %s3260
        %v3262 = vmul.f32 %v3261, %v2522
        %v3263 = vmul.f32 %v3261, %v2523
        %3266 = vrot.lane.b32.xlu0 %v3262, 126
        %v3267 = vpop.permute.xlu0 %3266
        %3268 = vrot.lane.b32.xlu0 %v3263, 126
        %v3269 = vpop.permute.xlu0 %3268
        %v3272 = vadd.f32 %v3160, %v3267
        %v3273 = vadd.f32 %v3161, %v3269
        %s3274 = sld [smem:[#allocation8 + $0x7d]]
        %v3275 = vstv %s3274
        %v3276 = vmul.f32 %v3275, %v2522
        %v3277 = vmul.f32 %v3275, %v2523
        %3280 = vrot.lane.b32.xlu0 %v3276, 126
        %v3281 = vpop.permute.xlu0 %3280
        %3282 = vrot.lane.b32.xlu0 %v3277, 126
        %v3283 = vpop.permute.xlu0 %3282
        %v3286 = vadd.f32 %v3174, %v3281
        %v3287 = vadd.f32 %v3175, %v3283
        %s3288 = sld [smem:[#allocation8 + $0xa1]]
        %v3289 = vstv %s3288
        %v3290 = vmul.f32 %v3289, %v2522
        %v3291 = vmul.f32 %v3289, %v2523
        %3294 = vrot.lane.b32.xlu0 %v3290, 126
        %v3295 = vpop.permute.xlu0 %3294
        %3296 = vrot.lane.b32.xlu0 %v3291, 126
        %v3297 = vpop.permute.xlu0 %3296
        %v3300 = vadd.f32 %v3188, %v3295
        %v3301 = vadd.f32 %v3189, %v3297
        %s3302 = sld [smem:[#allocation8 + $0xc5]]
        %v3303 = vstv %s3302
        %v3304 = vmul.f32 %v3303, %v2522
        %v3305 = vmul.f32 %v3303, %v2523
        %3308 = vrot.lane.b32.xlu0 %v3304, 126
        %v3309 = vpop.permute.xlu0 %3308
        %3310 = vrot.lane.b32.xlu0 %v3305, 126
        %v3311 = vpop.permute.xlu0 %3310
        %v3314 = vadd.f32 %v3202, %v3309
        %v3315 = vadd.f32 %v3203, %v3311
        %s3316 = sld [smem:[#allocation8 + $0xe9]]
        %v3317 = vstv %s3316
        %v3318 = vmul.f32 %v3317, %v2522
        %v3319 = vmul.f32 %v3317, %v2523
        %3322 = vrot.lane.b32.xlu0 %v3318, 126
        %v3323 = vpop.permute.xlu0 %3322
        %3324 = vrot.lane.b32.xlu0 %v3319, 126
        %v3325 = vpop.permute.xlu0 %3324
        %v3328 = vadd.f32 %v3216, %v3323
        %v3329 = vadd.f32 %v3217, %v3325
        %s3330 = sld [smem:[#allocation8 + $0x10d]]
        %v3331 = vstv %s3330
        %v3332 = vmul.f32 %v3331, %v2522
        %v3333 = vmul.f32 %v3331, %v2523
        %3336 = vrot.lane.b32.xlu0 %v3332, 126
        %v3337 = vpop.permute.xlu0 %3336
        %3338 = vrot.lane.b32.xlu0 %v3333, 126
        %v3339 = vpop.permute.xlu0 %3338
        %v3342 = vadd.f32 %v3230, %v3337
        %v3343 = vadd.f32 %v3231, %v3339
        %s3344 = sld [smem:[#allocation8 + $0x1a]]
        %v3345 = vstv %s3344
        %v3346 = vmul.f32 %v3345, %v2572
        %v3347 = vmul.f32 %v3345, %v2573
        %3350 = vrot.lane.b32.xlu0 %v3346, 126
        %v3351 = vpop.permute.xlu0 %3350
        %3352 = vrot.lane.b32.xlu0 %v3347, 126
        %v3353 = vpop.permute.xlu0 %3352
        %v3356 = vadd.f32 %v3244, %v3351
        %v3357 = vadd.f32 %v3245, %v3353
        %s3358 = sld [smem:[#allocation8 + $0x3e]]
        %v3359 = vstv %s3358
        %v3360 = vmul.f32 %v3359, %v2572
        %v3361 = vmul.f32 %v3359, %v2573
        %3364 = vrot.lane.b32.xlu0 %v3360, 126
        %v3365 = vpop.permute.xlu0 %3364
        %3366 = vrot.lane.b32.xlu0 %v3361, 126
        %v3367 = vpop.permute.xlu0 %3366
        %v3370 = vadd.f32 %v3258, %v3365
        %v3371 = vadd.f32 %v3259, %v3367
        %s3372 = sld [smem:[#allocation8 + $0x62]]
        %v3373 = vstv %s3372
        %v3374 = vmul.f32 %v3373, %v2572
        %v3375 = vmul.f32 %v3373, %v2573
        %3378 = vrot.lane.b32.xlu0 %v3374, 126
        %v3379 = vpop.permute.xlu0 %3378
        %3380 = vrot.lane.b32.xlu0 %v3375, 126
        %v3381 = vpop.permute.xlu0 %3380
        %v3384 = vadd.f32 %v3272, %v3379
        %v3385 = vadd.f32 %v3273, %v3381
        %s3386 = sld [smem:[#allocation8 + $0x86]]
        %v3387 = vstv %s3386
        %v3388 = vmul.f32 %v3387, %v2572
        %v3389 = vmul.f32 %v3387, %v2573
        %3392 = vrot.lane.b32.xlu0 %v3388, 126
        %v3393 = vpop.permute.xlu0 %3392
        %3394 = vrot.lane.b32.xlu0 %v3389, 126
        %v3395 = vpop.permute.xlu0 %3394
        %v3398 = vadd.f32 %v3286, %v3393
        %v3399 = vadd.f32 %v3287, %v3395
        %s3400 = sld [smem:[#allocation8 + $0xaa]]
        %v3401 = vstv %s3400
        %v3402 = vmul.f32 %v3401, %v2572
        %v3403 = vmul.f32 %v3401, %v2573
        %3406 = vrot.lane.b32.xlu0 %v3402, 126
        %v3407 = vpop.permute.xlu0 %3406
        %3408 = vrot.lane.b32.xlu0 %v3403, 126
        %v3409 = vpop.permute.xlu0 %3408
        %v3412 = vadd.f32 %v3300, %v3407
        %v3413 = vadd.f32 %v3301, %v3409
        %s3414 = sld [smem:[#allocation8 + $0xce]]
        %v3415 = vstv %s3414
        %v3416 = vmul.f32 %v3415, %v2572
        %v3417 = vmul.f32 %v3415, %v2573
        %3420 = vrot.lane.b32.xlu0 %v3416, 126
        %v3421 = vpop.permute.xlu0 %3420
        %3422 = vrot.lane.b32.xlu0 %v3417, 126
        %v3423 = vpop.permute.xlu0 %3422
        %v3426 = vadd.f32 %v3314, %v3421
        %v3427 = vadd.f32 %v3315, %v3423
        %s3428 = sld [smem:[#allocation8 + $0xf2]]
        %v3429 = vstv %s3428
        %v3430 = vmul.f32 %v3429, %v2572
        %v3431 = vmul.f32 %v3429, %v2573
        %3434 = vrot.lane.b32.xlu0 %v3430, 126
        %v3435 = vpop.permute.xlu0 %3434
        %3436 = vrot.lane.b32.xlu0 %v3431, 126
        %v3437 = vpop.permute.xlu0 %3436
        %v3440 = vadd.f32 %v3328, %v3435
        %v3441 = vadd.f32 %v3329, %v3437
        %s3442 = sld [smem:[#allocation8 + $0x116]]
        %v3443 = vstv %s3442
        %v3444 = vmul.f32 %v3443, %v2572
        %v3445 = vmul.f32 %v3443, %v2573
        %3448 = vrot.lane.b32.xlu0 %v3444, 126
        %v3449 = vpop.permute.xlu0 %3448
        %3450 = vrot.lane.b32.xlu0 %v3445, 126
        %v3451 = vpop.permute.xlu0 %3450
        %v3454 = vadd.f32 %v3342, %v3449
        %v3455 = vadd.f32 %v3343, %v3451
        %s3456 = sld [smem:[#allocation8 + $0x23]]
        %v3457 = vstv %s3456
        %v3458 = vmul.f32 %v3457, %v2622
        %v3459 = vmul.f32 %v3457, %v2623
        %3462 = vrot.lane.b32.xlu0 %v3458, 126
        %v3463 = vpop.permute.xlu0 %3462
        %3464 = vrot.lane.b32.xlu0 %v3459, 126
        %v3465 = vpop.permute.xlu0 %3464
        %v3468 = vadd.f32 %v3356, %v3463
        %v3469 = vadd.f32 %v3357, %v3465
        %s3470 = sld [smem:[#allocation8 + $0x47]]
        %v3471 = vstv %s3470
        %v3472 = vmul.f32 %v3471, %v2622
        %v3473 = vmul.f32 %v3471, %v2623
        %3476 = vrot.lane.b32.xlu0 %v3472, 126
        %v3477 = vpop.permute.xlu0 %3476
        %3478 = vrot.lane.b32.xlu0 %v3473, 126
        %v3479 = vpop.permute.xlu0 %3478
        %v3482 = vadd.f32 %v3370, %v3477
        %v3483 = vadd.f32 %v3371, %v3479
        %s3484 = sld [smem:[#allocation8 + $0x6b]]
        %v3485 = vstv %s3484
        %v3486 = vmul.f32 %v3485, %v2622
        %v3487 = vmul.f32 %v3485, %v2623
        %3490 = vrot.lane.b32.xlu0 %v3486, 126
        %v3491 = vpop.permute.xlu0 %3490
        %3492 = vrot.lane.b32.xlu0 %v3487, 126
        %v3493 = vpop.permute.xlu0 %3492
        %v3496 = vadd.f32 %v3384, %v3491
        %v3497 = vadd.f32 %v3385, %v3493
        %s3498 = sld [smem:[#allocation8 + $0x8f]]
        %v3499 = vstv %s3498
        %v3500 = vmul.f32 %v3499, %v2622
        %v3501 = vmul.f32 %v3499, %v2623
        %3504 = vrot.lane.b32.xlu0 %v3500, 126
        %v3505 = vpop.permute.xlu0 %3504
        %3506 = vrot.lane.b32.xlu0 %v3501, 126
        %v3507 = vpop.permute.xlu0 %3506
        %v3510 = vadd.f32 %v3398, %v3505
        %v3511 = vadd.f32 %v3399, %v3507
        %s3512 = sld [smem:[#allocation8 + $0xb3]]
        %v3513 = vstv %s3512
        %v3514 = vmul.f32 %v3513, %v2622
        %v3515 = vmul.f32 %v3513, %v2623
        %3518 = vrot.lane.b32.xlu0 %v3514, 126
        %v3519 = vpop.permute.xlu0 %3518
        %3520 = vrot.lane.b32.xlu0 %v3515, 126
        %v3521 = vpop.permute.xlu0 %3520
        %v3524 = vadd.f32 %v3412, %v3519
        %v3525 = vadd.f32 %v3413, %v3521
        %s3526 = sld [smem:[#allocation8 + $0xd7]]
        %v3527 = vstv %s3526
        %v3528 = vmul.f32 %v3527, %v2622
        %v3529 = vmul.f32 %v3527, %v2623
        %3532 = vrot.lane.b32.xlu0 %v3528, 126
        %v3533 = vpop.permute.xlu0 %3532
        %3534 = vrot.lane.b32.xlu0 %v3529, 126
        %v3535 = vpop.permute.xlu0 %3534
        %v3538 = vadd.f32 %v3426, %v3533
        %v3539 = vadd.f32 %v3427, %v3535
        %s3540 = sld [smem:[#allocation8 + $0xfb]]
        %v3541 = vstv %s3540
        %v3542 = vmul.f32 %v3541, %v2622
        %v3543 = vmul.f32 %v3541, %v2623
        %3546 = vrot.lane.b32.xlu0 %v3542, 126
        %v3547 = vpop.permute.xlu0 %3546
        %3548 = vrot.lane.b32.xlu0 %v3543, 126
        %v3549 = vpop.permute.xlu0 %3548
        %v3552 = vadd.f32 %v3440, %v3547
        %v3553 = vadd.f32 %v3441, %v3549
        %s3554 = sld [smem:[#allocation8 + $0x11f]]
        %v3555 = vstv %s3554
        %v3556 = vmul.f32 %v3555, %v2622
        %v3557 = vmul.f32 %v3555, %v2623
        %3560 = vrot.lane.b32.xlu0 %v3556, 126
        %v3561 = vpop.permute.xlu0 %3560
        %3562 = vrot.lane.b32.xlu0 %v3557, 126
        %v3563 = vpop.permute.xlu0 %3562
        %v3566 = vadd.f32 %v3454, %v3561
        %v3567 = vadd.f32 %v3455, %v3563
        %s3568 = sld [smem:[#allocation9]]
        %v3569 = vstv %s3568
        %v3570 = vadd.f32 %v3468, %v3569
        %v3571 = vadd.f32 %v3469, %v3569
        %v3572 = vmax.f32 %v3570, 0.0
        %v3573 = vmax.f32 %v3571, 0.0
        %vm3574 = vcmask 130048
        %3575 = vst.msk [vmem:[%s213] sm:$0xff] %vm3574, %v3572
        %3576 = vst.msk [vmem:[%s213 + $0x8] sm:$0xff] %vm3574, %v3573
        %s3577 = sld [smem:[#allocation9 + $0x1]]
        %v3578 = vstv %s3577
        %v3579 = vadd.f32 %v3482, %v3578
        %v3580 = vadd.f32 %v3483, %v3578
        %v3581 = vmax.f32 %v3579, 0.0
        %v3582 = vmax.f32 %v3580, 0.0
        %s3583 = scalar_lea.vmem %s213, 16 [#allocation10]
        %3584 = vst.msk [vmem:[%s3583] sm:$0xff] %vm3574, %v3581
        %3585 = vst.msk [vmem:[%s3583 + $0x8] sm:$0xff] %vm3574, %v3582
        %s3586 = sld [smem:[#allocation9 + $0x2]]
        %v3587 = vstv %s3586
        %v3588 = vadd.f32 %v3496, %v3587
        %v3589 = vadd.f32 %v3497, %v3587
        %v3590 = vmax.f32 %v3588, 0.0
        %v3591 = vmax.f32 %v3589, 0.0
        %s3592 = scalar_lea.vmem %s213, 32 [#allocation10]
        %3593 = vst.msk [vmem:[%s3592] sm:$0xff] %vm3574, %v3590
        %3594 = vst.msk [vmem:[%s3592 + $0x8] sm:$0xff] %vm3574, %v3591
        %s3595 = sld [smem:[#allocation9 + $0x3]]
        %v3596 = vstv %s3595
        %v3597 = vadd.f32 %v3510, %v3596
        %v3598 = vadd.f32 %v3511, %v3596
        %v3599 = vmax.f32 %v3597, 0.0
        %v3600 = vmax.f32 %v3598, 0.0
        %s3601 = scalar_lea.vmem %s213, 48 [#allocation10]
        %3602 = vst.msk [vmem:[%s3601] sm:$0xff] %vm3574, %v3599
        %3603 = vst.msk [vmem:[%s3601 + $0x8] sm:$0xff] %vm3574, %v3600
        %s3604 = sld [smem:[#allocation9 + $0x4]]
        %v3605 = vstv %s3604
        %v3606 = vadd.f32 %v3524, %v3605
        %v3607 = vadd.f32 %v3525, %v3605
        %v3608 = vmax.f32 %v3606, 0.0
        %v3609 = vmax.f32 %v3607, 0.0
        %s3610 = scalar_lea.vmem %s213, 64 [#allocation10]
        %3611 = vst.msk [vmem:[%s3610] sm:$0xff] %vm3574, %v3608
        %3612 = vst.msk [vmem:[%s3610 + $0x8] sm:$0xff] %vm3574, %v3609
        %s3613 = sld [smem:[#allocation9 + $0x5]]
        %v3614 = vstv %s3613
        %v3615 = vadd.f32 %v3538, %v3614
        %v3616 = vadd.f32 %v3539, %v3614
        %v3617 = vmax.f32 %v3615, 0.0
        %v3618 = vmax.f32 %v3616, 0.0
        %s3619 = scalar_lea.vmem %s213, 80 [#allocation10]
        %3620 = vst.msk [vmem:[%s3619] sm:$0xff] %vm3574, %v3617
        %3621 = vst.msk [vmem:[%s3619 + $0x8] sm:$0xff] %vm3574, %v3618
        %s3622 = sld [smem:[#allocation9 + $0x6]]
        %v3623 = vstv %s3622
        %v3624 = vadd.f32 %v3552, %v3623
        %v3625 = vadd.f32 %v3553, %v3623
        %v3626 = vmax.f32 %v3624, 0.0
        %v3627 = vmax.f32 %v3625, 0.0
        %s3628 = scalar_lea.vmem %s213, 96 [#allocation10]
        %3629 = vst.msk [vmem:[%s3628] sm:$0xff] %vm3574, %v3626
        %3630 = vst.msk [vmem:[%s3628 + $0x8] sm:$0xff] %vm3574, %v3627
        %s3631 = sld [smem:[#allocation9 + $0x7]]
        %v3632 = vstv %s3631
        %v3633 = vadd.f32 %v3566, %v3632
        %v3634 = vadd.f32 %v3567, %v3632
        %v3635 = vmax.f32 %v3633, 0.0
        %v3636 = vmax.f32 %v3634, 0.0
        %s3637 = scalar_lea.vmem %s213, 112 [#allocation10]
        %3638 = vst.msk [vmem:[%s3637] sm:$0xff] %vm3574, %v3635
        %3639 = vst.msk [vmem:[%s3637 + $0x8] sm:$0xff] %vm3574, %v3636
        %s3640 = sand.u32 %s98, 1
        %s3641 = scalar_lea.sflag [#allocation5], %s3640
        %s3642 = sand.u32 %s98, 1
        %s3643 = smul.addr %s3642, 128
        %s3644 = scalar_lea.vmem [#allocation10], %s3643
        // Predicated region
        $region45: #{tpu_custom_call.1} parent=31 // pred_check
          %p3645 = pneg %p108
        $region46: #{tpu_custom_call.1} parent=31 // pred_check_branch
          %3647 = sbr.rel (%p3645) target = $region48
        $region47: #{tpu_custom_call.1} parent=31 // pred_region
          %s3649 = ssub.s32 2048, 2048
          %3650 = vsyncadd %s3641, %s3649
          %s3651 = smul.addr %s22, 16
          %s3652 = smul.addr %s3651, 128
          %s3653 = scalar_lea.hbm %s3, %s3652
          %s3654 = sshll.u32 %s3644, 4
          %s3655 = int_to_ptr.vmem [resolvable:$true] %s3654
          %3660 = dma.vmem_to_hbm [thread:$0]  %s3655, 2048, %s3653, %s3641, 128, 128, 8
        $region48: #{tpu_custom_call.1} parent=31 // pred_fallthru
          _
      $region32: #{tpu_custom_call.1} parent=5 // pred_fallthru
        _
      %p3661 = scmp.le.s32.totalorder 2, %s17
      // Predicated region
      $region49: #{tpu_custom_call.1} parent=5 // pred_check
        %p3662 = pneg %p3661
      $region50: #{tpu_custom_call.1} parent=5 // pred_check_branch
        %3664 = sbr.rel (%p3662) target = $region52
      $region51: #{tpu_custom_call.1} parent=5 // pred_region
        %s3665 = ssub.s32 %s17, 2
        // Predicated region
        $region53: #{tpu_custom_call.1} parent=51 // pred_check
          %p3666 = pneg %p114
        $region54: #{tpu_custom_call.1} parent=51 // pred_check_branch
          %3668 = sbr.rel (%p3666) target = $region56
        $region55: #{tpu_custom_call.1} parent=51 // pred_region
          %s3669 = sand.u32 %s99, 1
          %s3670 = scalar_lea.sflag [#allocation5], %s3669
          %s3671 = sand.u32 %s99, 1
          %s3672 = smul.addr %s3671, 128
          %s3673 = scalar_lea.vmem [#allocation10], %s3672
          %3674 = dma.done %s3670, 2048
        $region56: #{tpu_custom_call.1} parent=51 // pred_fallthru
          _
      $region52: #{tpu_custom_call.1} parent=5 // pred_fallthru
        _
    $region6: #{tpu_custom_call.1} parent=1 // loop_footer
      %s21 = sadd.s32 1, %s17
    $region7: #{tpu_custom_call.1} parent=1 // loop_footer_branch
      %16 = sbr.rel target = $region3
    $region8: #{tpu_custom_call.1} parent=1 // loop_exit
      _
    %3675 = vsyncpa [#allocation4], 1
    %s3676 = scalar_lea.sflag [#allocation4], 1
    %3677 = vsyncpa %s3676, 1
    %3678 = vsyncpa [#allocation5], 1
    %s3679 = scalar_lea.sflag [#allocation5], 1
    %3680 = vsyncpa %s3679, 1
    %3681 = vsyncpa [#allocation6], 1
    %s3682 = scalar_lea.sflag [#allocation6], 1
    %3683 = vsyncpa %s3682, 1
    %3684 = vsyncpa [#allocation7], 1
    %s3685 = scalar_lea.sflag [#allocation7], 1
    %3686 = vsyncpa %s3685, 1

</llo_original>
